<compile_context>
chip_gen: v6e
topology: v6e:2x2x1
jax: 0.10.0
libtpu: 0.0.40
codegen_flags: <defaults>
</compile_context>

<pallas_src>
import functools

import jax
import jax.numpy as jnp
from jax import lax
from jax.experimental import pallas as pl
from jax.experimental.pallas import tpu as pltpu

_EPS = 1e-5
# Small demo needs < 2 MiB; keep the scoped limit conservative (fits every chip,
# <= v7x's 64 MiB per-TC VMEM).  Raise toward ~48 MiB (v7x) / ~96 MiB (v5e/v6e)
# only if dim grows and the resident weights need it.
_VMEM_LIMIT = 32 * 1024 * 1024


def _pick_tile(n, candidates=(512, 256, 128)):
    """Largest tile from `candidates` that evenly divides n, else full n."""
    for t in candidates:
        if n >= t and n % t == 0:
            return t
    return n


def _row_tile(n, batch):
    """Row tile; ensure >= 2 'parallel' grid steps so v7x's 2 TCs are both used."""
    tm = _pick_tile(n)
    if batch * (n // tm) < 2:
        half = tm // 2
        if half >= 8 and half % 8 == 0 and n % half == 0:
            tm = half
    return tm


def _layernorm_f32(x, gamma, beta, eps):
    """LayerNorm over last axis, single sum / sum-of-squares pass, f32 math."""
    inv_d = 1.0 / x.shape[-1]
    s = jnp.sum(x, axis=-1, keepdims=True)
    ss = jnp.sum(x * x, axis=-1, keepdims=True)
    mean = s * inv_d
    var = jnp.maximum(ss * inv_d - mean * mean, 0.0)
    y = (x - mean) * lax.rsqrt(var + eps)
    return y * gamma + beta


# ------------------- fused per-layer kernel: LN1->conv->G@..+x -> FF -> +x ---
def _hgcb_layer_kernel(xk_ref, g_ref, xres_ref,
                       ln1g_ref, ln1b_ref, wc_ref, bc_ref,
                       ln2g_ref, ln2b_ref, w1_ref, b1_ref, w2_ref, b2_ref,
                       o_ref, acc_ref, *, eps, compute_dtype):
    k = pl.program_id(2)

    @pl.when(k == 0)
    def _():
        acc_ref[...] = jnp.zeros_like(acc_ref)

    # h_k = LN1(x[k-tile]) @ Wc + bc   (never materialized in HBM)
    xk = xk_ref[...].astype(jnp.float32)
    y = _layernorm_f32(xk, ln1g_ref[...].astype(jnp.float32),
                       ln1b_ref[...].astype(jnp.float32), eps)
    h = jnp.dot(y.astype(compute_dtype), wc_ref[...].astype(compute_dtype),
                preferred_element_type=jnp.float32)
    h = h + bc_ref[...].astype(jnp.float32)

    # acc += G[i-tile, k-tile] @ h_k
    acc_ref[...] += jnp.dot(g_ref[...].astype(compute_dtype),
                            h.astype(compute_dtype),
                            preferred_element_type=jnp.float32)

    @pl.when(k == pl.num_programs(2) - 1)
    def _():
        # residual 1
        x1 = acc_ref[...] + xres_ref[...].astype(jnp.float32)       # (tm, D)
        # FF branch on the resident tile (residual 2 fused, no HBM round trip)
        y2 = _layernorm_f32(x1, ln2g_ref[...].astype(jnp.float32),
                            ln2b_ref[...].astype(jnp.float32), eps)
        t = jnp.dot(y2.astype(compute_dtype), w1_ref[...].astype(compute_dtype),
                    preferred_element_type=jnp.float32)
        t = jnp.maximum(t + b1_ref[...].astype(jnp.float32), 0.0)
        ff = jnp.dot(t.astype(compute_dtype), w2_ref[...].astype(compute_dtype),
                     preferred_element_type=jnp.float32)
        ff = ff + b2_ref[...].astype(jnp.float32)
        o_ref[...] = (ff + x1).astype(o_ref.dtype)


def hgcb_layer(x, G_cd, p, *, eps=_EPS, compute_dtype=jnp.bfloat16):
    """One full HGCB layer:  x -> G@(LN1(x)Wc+bc)+x -> FF(LN2(.))+. ."""
    B, N, D = x.shape
    H = p["ff_w1"].shape[1]
    assert G_cd.shape == (B, N, N)
    assert N % 8 == 0 and D % 128 == 0 and H % 128 == 0, "demo assumes TPU-tileable dims"

    tm = _row_tile(N, B)
    tk = _pick_tile(N)
    f32 = jnp.float32

    # Weights streamed/resident in the MXU compute dtype (halves VMEM + HBM).
    wc = p["conv_w"].astype(compute_dtype)
    w1 = p["ff_w1"].astype(compute_dtype)
    w2 = p["ff_w2"].astype(compute_dtype)

    const2d = lambda b, i, k: (0, 0)   # weights / LN params: resident, fetched once

    return pl.pallas_call(
        functools.partial(_hgcb_layer_kernel, eps=eps,
                          compute_dtype=compute_dtype),
        out_shape=jax.ShapeDtypeStruct((B, N, D), x.dtype),
        grid_spec=pltpu.PrefetchScalarGridSpec(
            num_scalar_prefetch=0,
            grid=(B, N // tm, N // tk),
            in_specs=[
                # x, k-stream (input to LN1 -> Wc)
                pl.BlockSpec((pl.Squeezed(), tk, D), lambda b, i, k: (b, k, 0)),
                # G tile
                pl.BlockSpec((pl.Squeezed(), tm, tk), lambda b, i, k: (b, i, k)),
                # x, i-stream (residual); index independent of k -> fetched once per (b,i)
                pl.BlockSpec((pl.Squeezed(), tm, D), lambda b, i, k: (b, i, 0)),
                pl.BlockSpec((1, D), const2d),     # ln1 gamma
                pl.BlockSpec((1, D), const2d),     # ln1 beta
                pl.BlockSpec((D, D), const2d),     # W_conv
                pl.BlockSpec((1, D), const2d),     # b_conv
                pl.BlockSpec((1, D), const2d),     # ln2 gamma
                pl.BlockSpec((1, D), const2d),     # ln2 beta
                pl.BlockSpec((D, H), const2d),     # W1
                pl.BlockSpec((1, H), const2d),     # b1
                pl.BlockSpec((H, D), const2d),     # W2
                pl.BlockSpec((1, D), const2d),     # b2
            ],
            out_specs=pl.BlockSpec((pl.Squeezed(), tm, D),
                                   lambda b, i, k: (b, i, 0)),
            scratch_shapes=[pltpu.VMEM((tm, D), jnp.float32)],
        ),
        compiler_params=pltpu.CompilerParams(
            dimension_semantics=("parallel", "parallel", "arbitrary"),
            vmem_limit_bytes=_VMEM_LIMIT),
    )(x, G_cd, x,
      p["ln1_g"].reshape(1, D).astype(f32), p["ln1_b"].reshape(1, D).astype(f32),
      wc, p["conv_b"].reshape(1, D).astype(f32),
      p["ln2_g"].reshape(1, D).astype(f32), p["ln2_b"].reshape(1, D).astype(f32),
      w1, p["ff_b1"].reshape(1, H).astype(f32),
      w2, p["ff_b2"].reshape(1, D).astype(f32))


def hgcb_forward(x, G, layers, *, compute_dtype=jnp.bfloat16, eps=_EPS):
    """Full HGCB forward: one fused pallas_call per layer."""
    G_cd = G.astype(compute_dtype)   # dominant B*N*N stream: cast once, reuse per layer
    for p in layers:
        x = hgcb_layer(x, G_cd, p, eps=eps, compute_dtype=compute_dtype)
    return x


# ------------------------------- HGCB parameters -----------------------------
class HGCBPallas:
    """Mirror of the PyTorch HGCB module (eval-mode forward)."""

    def __init__(self, dim, depth, key, dtype=jnp.float32,
                 compute_dtype=jnp.bfloat16):
        self.dim = dim
        self.depth = depth
        self.compute_dtype = compute_dtype
        stdv = 1.0 / (dim ** 0.5)
        self.layers = []
        for _ in range(depth):
            keys = jax.random.split(key, 11)
            key = keys[0]
            p = {
                # PreNorm(LayerNorm) #1 -- perturbed to exercise the affine path
                "ln1_g": (1.0 + 0.1 * jax.random.uniform(keys[1], (dim,), dtype=dtype)),
                "ln1_b": 0.1 * jax.random.normal(keys[2], (dim,), dtype=dtype),
                # HGNN_conv
                "conv_w": jax.random.uniform(keys[3], (dim, dim), dtype=dtype,
                                             minval=-stdv, maxval=stdv),
                "conv_b": jax.random.uniform(keys[4], (dim,), dtype=dtype,
                                             minval=-stdv, maxval=stdv),
                # PreNorm(LayerNorm) #2
                "ln2_g": (1.0 + 0.1 * jax.random.uniform(keys[5], (dim,), dtype=dtype)),
                "ln2_b": 0.1 * jax.random.normal(keys[6], (dim,), dtype=dtype),
                # FeedForward(dim, dim)
                "ff_w1": jax.random.uniform(keys[7], (dim, dim), dtype=dtype,
                                            minval=-stdv, maxval=stdv),
                "ff_b1": jax.random.uniform(keys[8], (dim,), dtype=dtype,
                                            minval=-stdv, maxval=stdv),
                "ff_w2": jax.random.uniform(keys[9], (dim, dim), dtype=dtype,
                                            minval=-stdv, maxval=stdv),
                "ff_b2": jax.random.uniform(keys[10], (dim,), dtype=dtype,
                                            minval=-stdv, maxval=stdv),
            }
            self.layers.append(p)

    def __call__(self, x, G):
        return hgcb_forward(x, G, self.layers, compute_dtype=self.compute_dtype)


# ----------------------------- pure-JAX reference ----------------------------
def hgcb_reference(x, G, layers, eps=_EPS):
    hp = lax.Precision.HIGHEST

    def ln(v, g, b):
        m = jnp.mean(v, axis=-1, keepdims=True)
        var = jnp.mean((v - m) ** 2, axis=-1, keepdims=True)
        return (v - m) / jnp.sqrt(var + eps) * g + b

    for p in layers:
        h = ln(x, p["ln1_g"], p["ln1_b"])
        h = jnp.einsum("bnd,de->bne", h, p["conv_w"], precision=hp) + p["conv_b"]
        h = jnp.einsum("bnm,bmd->bnd", G, h, precision=hp)
        x = h + x
        h = ln(x, p["ln2_g"], p["ln2_b"])
        h = jnp.maximum(
            jnp.einsum("bnd,dh->bnh", h, p["ff_w1"], precision=hp) + p["ff_b1"], 0.0)
        h = jnp.einsum("bnh,hd->bnd", h, p["ff_w2"], precision=hp) + p["ff_b2"]
        x = h + x
    return x


if __name__ == "__main__":
    B, N, DIM, DEPTH = 2, 128, 128, 2   # lane-dense: N and DIM multiples of 128

    key = jax.random.PRNGKey(0)
    kx, kg, kp = jax.random.split(key, 3)
    x = jax.random.normal(kx, (B, N, DIM), dtype=jnp.float32)
    G = jax.random.normal(kg, (B, N, N), dtype=jnp.float32)

    model = HGCBPallas(DIM, DEPTH, kp)

    # Production config: bf16 MXU operands, f32 accumulation / elementwise.
    fwd_bf16 = jax.jit(functools.partial(hgcb_forward, compute_dtype=jnp.bfloat16))
    out = jax.block_until_ready(fwd_bf16(x, G, model.layers))

    # Structural sanity check: f32 MXU operands must match the reference tightly.
    fwd_f32 = jax.jit(functools.partial(hgcb_forward, compute_dtype=jnp.float32))
    out_f32 = jax.block_until_ready(fwd_f32(x, G, model.layers))

    ref = hgcb_reference(x, G, model.layers)
    assert out.shape == ref.shape and out_f32.shape == ref.shape

    assert jnp.allclose(out_f32, ref, atol=2e-2, rtol=2e-2), (
        "f32-compute mismatch vs reference, max abs err = "
        f"{float(jnp.max(jnp.abs(out_f32 - ref)))}")

    scale = float(jnp.max(jnp.abs(ref)))
    err = float(jnp.max(jnp.abs(out.astype(jnp.float32) - ref)))
    assert err <= 2e-2 * scale, (
        f"bf16-compute mismatch vs reference: max abs err {err} "
        f"exceeds 2e-2 * max|ref| ({2e-2 * scale})")

    print("KERNEL_OK")
</pallas_src>

<mosaic_0001>
module attributes {stable_mosaic.version = 11 : i64} {
  func.func @_hgcb_layer_kernel(%arg0: i32, %arg1: i32, %arg2: i32, %arg3: memref<1x128x128xf32, #tpu.memory_space<vmem>>, %arg4: memref<1x128x128xbf16, #tpu.memory_space<vmem>>, %arg5: memref<1x128x128xf32, #tpu.memory_space<vmem>>, %arg6: memref<1x128xf32, #tpu.memory_space<vmem>>, %arg7: memref<1x128xf32, #tpu.memory_space<vmem>>, %arg8: memref<128x128xbf16, #tpu.memory_space<vmem>>, %arg9: memref<1x128xf32, #tpu.memory_space<vmem>>, %arg10: memref<1x128xf32, #tpu.memory_space<vmem>>, %arg11: memref<1x128xf32, #tpu.memory_space<vmem>>, %arg12: memref<128x128xbf16, #tpu.memory_space<vmem>>, %arg13: memref<1x128xf32, #tpu.memory_space<vmem>>, %arg14: memref<128x128xbf16, #tpu.memory_space<vmem>>, %arg15: memref<1x128xf32, #tpu.memory_space<vmem>>, %arg16: memref<1x128x128xf32, #tpu.memory_space<vmem>>, %arg17: memref<128x128xf32, #tpu.memory_space<vmem>>) attributes {dimension_semantics = [#tpu.dimension_semantics<parallel>, #tpu.dimension_semantics<parallel>, #tpu.dimension_semantics<arbitrary>], iteration_bounds = array<i64: 2, 1, 1>, scalar_prefetch = 0 : i64, scratch_operands = 1 : i64, tpu.core_type = #tpu.core_type<tc>, window_params = [{transform_indices = @transform_0, window_bounds = array<i64: 1, 128, 128>}, {transform_indices = @transform_1, window_bounds = array<i64: 1, 128, 128>}, {transform_indices = @transform_2, window_bounds = array<i64: 1, 128, 128>}, {pipeline_mode = #tpu.pipeline_mode<synchronous>, transform_indices = @transform_3, window_bounds = array<i64: 1, 128>}, {pipeline_mode = #tpu.pipeline_mode<synchronous>, transform_indices = @transform_4, window_bounds = array<i64: 1, 128>}, {pipeline_mode = #tpu.pipeline_mode<synchronous>, transform_indices = @transform_5, window_bounds = array<i64: 128, 128>}, {pipeline_mode = #tpu.pipeline_mode<synchronous>, transform_indices = @transform_6, window_bounds = array<i64: 1, 128>}, {pipeline_mode = #tpu.pipeline_mode<synchronous>, transform_indices = @transform_7, window_bounds = array<i64: 1, 128>}, {pipeline_mode = #tpu.pipeline_mode<synchronous>, transform_indices = @transform_8, window_bounds = array<i64: 1, 128>}, {pipeline_mode = #tpu.pipeline_mode<synchronous>, transform_indices = @transform_9, window_bounds = array<i64: 128, 128>}, {pipeline_mode = #tpu.pipeline_mode<synchronous>, transform_indices = @transform_10, window_bounds = array<i64: 1, 128>}, {pipeline_mode = #tpu.pipeline_mode<synchronous>, transform_indices = @transform_11, window_bounds = array<i64: 128, 128>}, {pipeline_mode = #tpu.pipeline_mode<synchronous>, transform_indices = @transform_12, window_bounds = array<i64: 1, 128>}, {transform_indices = @transform_13, window_bounds = array<i64: 1, 128, 128>}]} {
    %c0_i32 = arith.constant 0 : i32
    %0 = arith.cmpi eq, %arg2, %c0_i32 : i32
    %1 = arith.extui %0 : i1 to i32
    %c0_i32_0 = arith.constant 0 : i32
    %2 = arith.cmpi ne, %1, %c0_i32_0 : i32
    scf.if %2 {
      %cst_27 = arith.constant 0.000000e+00 : f32
      %47 = vector.broadcast %cst_27 : f32 to vector<128x128xf32>
      %c0_28 = arith.constant 0 : index
      %c0_29 = arith.constant 0 : index
      %48 = vector.load %arg17[%c0_28, %c0_29] : memref<128x128xf32, #tpu.memory_space<vmem>>, vector<128x128xf32>
      tpu.vector_store %arg17[%c0_28, %c0_29], %47 {strides = array<i32>} : memref<128x128xf32, #tpu.memory_space<vmem>>, vector<128x128xf32>,
    } else {
    }
    %c0 = arith.constant 0 : index
    %c0_1 = arith.constant 0 : index
    %c0_2 = arith.constant 0 : index
    %3 = vector.load %arg3[%c0, %c0_1, %c0_2] : memref<1x128x128xf32, #tpu.memory_space<vmem>>, vector<1x128x128xf32>
    %4 = vector.shape_cast %3 : vector<1x128x128xf32> to vector<128x128xf32>
    %c0_3 = arith.constant 0 : index
    %c0_4 = arith.constant 0 : index
    %5 = vector.load %arg6[%c0_3, %c0_4] : memref<1x128xf32, #tpu.memory_space<vmem>>, vector<1x128xf32>
    %c0_5 = arith.constant 0 : index
    %c0_6 = arith.constant 0 : index
    %6 = vector.load %arg7[%c0_5, %c0_6] : memref<1x128xf32, #tpu.memory_space<vmem>>, vector<1x128xf32>
    %cst = arith.constant dense<0.000000e+00> : vector<128xf32>
    %7 = vector.multi_reduction <add>, %4, %cst [1] : vector<128x128xf32> to vector<128xf32>
    %8 = vector.shape_cast %7 : vector<128xf32> to vector<128x1xf32>
    %9 = arith.mulf %4, %4 : vector<128x128xf32>
    %cst_7 = arith.constant dense<0.000000e+00> : vector<128xf32>
    %10 = vector.multi_reduction <add>, %9, %cst_7 [1] : vector<128x128xf32> to vector<128xf32>
    %11 = vector.shape_cast %10 : vector<128xf32> to vector<128x1xf32>
    %cst_8 = arith.constant 7.812500e-03 : f32
    %12 = vector.broadcast %cst_8 : f32 to vector<128x1xf32>
    %13 = arith.mulf %8, %12 : vector<128x1xf32>
    %cst_9 = arith.constant 7.812500e-03 : f32
    %14 = vector.broadcast %cst_9 : f32 to vector<128x1xf32>
    %15 = arith.mulf %11, %14 : vector<128x1xf32>
    %16 = arith.mulf %13, %13 : vector<128x1xf32>
    %17 = arith.subf %15, %16 : vector<128x1xf32>
    %cst_10 = arith.constant 0.000000e+00 : f32
    %18 = vector.broadcast %cst_10 : f32 to vector<128x1xf32>
    %19 = arith.maximumf %17, %18 : vector<128x1xf32>
    %20 = vector.broadcast %13 : vector<128x1xf32> to vector<128x128xf32>
    %21 = arith.subf %4, %20 : vector<128x128xf32>
    %cst_11 = arith.constant 9.99999974E-6 : f32
    %22 = vector.broadcast %cst_11 : f32 to vector<128x1xf32>
    %23 = arith.addf %19, %22 : vector<128x1xf32>
    %24 = math.rsqrt %23 : vector<128x1xf32>
    %25 = vector.broadcast %24 : vector<128x1xf32> to vector<128x128xf32>
    %26 = arith.mulf %21, %25 : vector<128x128xf32>
    %27 = vector.broadcast %5 : vector<1x128xf32> to vector<128x128xf32>
    %28 = arith.mulf %26, %27 : vector<128x128xf32>
    %29 = vector.broadcast %6 : vector<1x128xf32> to vector<128x128xf32>
    %30 = arith.addf %28, %29 : vector<128x128xf32>
    %31 = arith.truncf %30 : vector<128x128xf32> to vector<128x128xbf16>
    %c0_12 = arith.constant 0 : index
    %c0_13 = arith.constant 0 : index
    %32 = vector.load %arg8[%c0_12, %c0_13] : memref<128x128xbf16, #tpu.memory_space<vmem>>, vector<128x128xbf16>
    %cst_14 = arith.constant dense<0.000000e+00> : vector<128x128xf32>
    %33 = tpu.matmul %31, %32, %cst_14 {dimension_numbers = #tpu.dot_dimension_numbers<[1], [0], [0], [1], [0, 0, 1, 1], [], []>} : vector<128x128xbf16>, vector<128x128xbf16>, vector<128x128xf32> -> vector<128x128xf32>
    %c0_15 = arith.constant 0 : index
    %c0_16 = arith.constant 0 : index
    %34 = vector.load %arg9[%c0_15, %c0_16] : memref<1x128xf32, #tpu.memory_space<vmem>>, vector<1x128xf32>
    %35 = vector.broadcast %34 : vector<1x128xf32> to vector<128x128xf32>
    %36 = arith.addf %33, %35 : vector<128x128xf32>
    %c0_17 = arith.constant 0 : index
    %c0_18 = arith.constant 0 : index
    %37 = vector.load %arg17[%c0_17, %c0_18] : memref<128x128xf32, #tpu.memory_space<vmem>>, vector<128x128xf32>
    %c0_19 = arith.constant 0 : index
    %c0_20 = arith.constant 0 : index
    %c0_21 = arith.constant 0 : index
    %38 = vector.load %arg4[%c0_19, %c0_20, %c0_21] : memref<1x128x128xbf16, #tpu.memory_space<vmem>>, vector<1x128x128xbf16>
    %39 = vector.shape_cast %38 : vector<1x128x128xbf16> to vector<128x128xbf16>
    %40 = arith.truncf %36 : vector<128x128xf32> to vector<128x128xbf16>
    %cst_22 = arith.constant dense<0.000000e+00> : vector<128x128xf32>
    %41 = tpu.matmul %39, %40, %cst_22 {dimension_numbers = #tpu.dot_dimension_numbers<[1], [0], [0], [1], [0, 0, 1, 1], [], []>} : vector<128x128xbf16>, vector<128x128xbf16>, vector<128x128xf32> -> vector<128x128xf32>
    %42 = arith.addf %37, %41 : vector<128x128xf32>
    %c0_23 = arith.constant 0 : index
    %c0_24 = arith.constant 0 : index
    %43 = vector.load %arg17[%c0_23, %c0_24] : memref<128x128xf32, #tpu.memory_space<vmem>>, vector<128x128xf32>
    tpu.vector_store %arg17[%c0_23, %c0_24], %42 {strides = array<i32>} : memref<128x128xf32, #tpu.memory_space<vmem>>, vector<128x128xf32>,
    %c0_i32_25 = arith.constant 0 : i32
    %44 = arith.cmpi eq, %arg2, %c0_i32_25 : i32
    %45 = arith.extui %44 : i1 to i32
    %c0_i32_26 = arith.constant 0 : i32
    %46 = arith.cmpi ne, %45, %c0_i32_26 : i32
    scf.if %46 {
      %c0_27 = arith.constant 0 : index
      %c0_28 = arith.constant 0 : index
      %47 = vector.load %arg17[%c0_27, %c0_28] : memref<128x128xf32, #tpu.memory_space<vmem>>, vector<128x128xf32>
      %c0_29 = arith.constant 0 : index
      %c0_30 = arith.constant 0 : index
      %c0_31 = arith.constant 0 : index
      %48 = vector.load %arg5[%c0_29, %c0_30, %c0_31] : memref<1x128x128xf32, #tpu.memory_space<vmem>>, vector<1x128x128xf32>
      %49 = vector.shape_cast %48 : vector<1x128x128xf32> to vector<128x128xf32>
      %50 = arith.addf %47, %49 : vector<128x128xf32>
      %c0_32 = arith.constant 0 : index
      %c0_33 = arith.constant 0 : index
      %51 = vector.load %arg10[%c0_32, %c0_33] : memref<1x128xf32, #tpu.memory_space<vmem>>, vector<1x128xf32>
      %c0_34 = arith.constant 0 : index
      %c0_35 = arith.constant 0 : index
      %52 = vector.load %arg11[%c0_34, %c0_35] : memref<1x128xf32, #tpu.memory_space<vmem>>, vector<1x128xf32>
      %cst_36 = arith.constant dense<0.000000e+00> : vector<128xf32>
      %53 = vector.multi_reduction <add>, %50, %cst_36 [1] : vector<128x128xf32> to vector<128xf32>
      %54 = vector.shape_cast %53 : vector<128xf32> to vector<128x1xf32>
      %55 = arith.mulf %50, %50 : vector<128x128xf32>
      %cst_37 = arith.constant dense<0.000000e+00> : vector<128xf32>
      %56 = vector.multi_reduction <add>, %55, %cst_37 [1] : vector<128x128xf32> to vector<128xf32>
      %57 = vector.shape_cast %56 : vector<128xf32> to vector<128x1xf32>
      %cst_38 = arith.constant 7.812500e-03 : f32
      %58 = vector.broadcast %cst_38 : f32 to vector<128x1xf32>
      %59 = arith.mulf %54, %58 : vector<128x1xf32>
      %cst_39 = arith.constant 7.812500e-03 : f32
      %60 = vector.broadcast %cst_39 : f32 to vector<128x1xf32>
      %61 = arith.mulf %57, %60 : vector<128x1xf32>
      %62 = arith.mulf %59, %59 : vector<128x1xf32>
      %63 = arith.subf %61, %62 : vector<128x1xf32>
      %cst_40 = arith.constant 0.000000e+00 : f32
      %64 = vector.broadcast %cst_40 : f32 to vector<128x1xf32>
      %65 = arith.maximumf %63, %64 : vector<128x1xf32>
      %66 = vector.broadcast %59 : vector<128x1xf32> to vector<128x128xf32>
      %67 = arith.subf %50, %66 : vector<128x128xf32>
      %cst_41 = arith.constant 9.99999974E-6 : f32
      %68 = vector.broadcast %cst_41 : f32 to vector<128x1xf32>
      %69 = arith.addf %65, %68 : vector<128x1xf32>
      %70 = math.rsqrt %69 : vector<128x1xf32>
      %71 = vector.broadcast %70 : vector<128x1xf32> to vector<128x128xf32>
      %72 = arith.mulf %67, %71 : vector<128x128xf32>
      %73 = vector.broadcast %51 : vector<1x128xf32> to vector<128x128xf32>
      %74 = arith.mulf %72, %73 : vector<128x128xf32>
      %75 = vector.broadcast %52 : vector<1x128xf32> to vector<128x128xf32>
      %76 = arith.addf %74, %75 : vector<128x128xf32>
      %77 = arith.truncf %76 : vector<128x128xf32> to vector<128x128xbf16>
      %c0_42 = arith.constant 0 : index
      %c0_43 = arith.constant 0 : index
      %78 = vector.load %arg12[%c0_42, %c0_43] : memref<128x128xbf16, #tpu.memory_space<vmem>>, vector<128x128xbf16>
      %cst_44 = arith.constant dense<0.000000e+00> : vector<128x128xf32>
      %79 = tpu.matmul %77, %78, %cst_44 {dimension_numbers = #tpu.dot_dimension_numbers<[1], [0], [0], [1], [0, 0, 1, 1], [], []>} : vector<128x128xbf16>, vector<128x128xbf16>, vector<128x128xf32> -> vector<128x128xf32>
      %c0_45 = arith.constant 0 : index
      %c0_46 = arith.constant 0 : index
      %80 = vector.load %arg13[%c0_45, %c0_46] : memref<1x128xf32, #tpu.memory_space<vmem>>, vector<1x128xf32>
      %81 = vector.broadcast %80 : vector<1x128xf32> to vector<128x128xf32>
      %82 = arith.addf %79, %81 : vector<128x128xf32>
      %cst_47 = arith.constant 0.000000e+00 : f32
      %83 = vector.broadcast %cst_47 : f32 to vector<128x128xf32>
      %84 = arith.maximumf %82, %83 : vector<128x128xf32>
      %85 = arith.truncf %84 : vector<128x128xf32> to vector<128x128xbf16>
      %c0_48 = arith.constant 0 : index
      %c0_49 = arith.constant 0 : index
      %86 = vector.load %arg14[%c0_48, %c0_49] : memref<128x128xbf16, #tpu.memory_space<vmem>>, vector<128x128xbf16>
      %cst_50 = arith.constant dense<0.000000e+00> : vector<128x128xf32>
      %87 = tpu.matmul %85, %86, %cst_50 {dimension_numbers = #tpu.dot_dimension_numbers<[1], [0], [0], [1], [0, 0, 1, 1], [], []>} : vector<128x128xbf16>, vector<128x128xbf16>, vector<128x128xf32> -> vector<128x128xf32>
      %c0_51 = arith.constant 0 : index
      %c0_52 = arith.constant 0 : index
      %88 = vector.load %arg15[%c0_51, %c0_52] : memref<1x128xf32, #tpu.memory_space<vmem>>, vector<1x128xf32>
      %89 = vector.broadcast %88 : vector<1x128xf32> to vector<128x128xf32>
      %90 = arith.addf %87, %89 : vector<128x128xf32>
      %91 = arith.addf %90, %50 : vector<128x128xf32>
      %c0_53 = arith.constant 0 : index
      %c0_54 = arith.constant 0 : index
      %c0_55 = arith.constant 0 : index
      %92 = vector.load %arg16[%c0_53, %c0_54, %c0_55] : memref<1x128x128xf32, #tpu.memory_space<vmem>>, vector<1x128x128xf32>
      %93 = vector.shape_cast %92 : vector<1x128x128xf32> to vector<128x128xf32>
      %94 = vector.shape_cast %91 : vector<128x128xf32> to vector<1x128x128xf32>
      tpu.vector_store %arg16[%c0_53, %c0_54, %c0_55], %94 {strides = array<i32>} : memref<1x128x128xf32, #tpu.memory_space<vmem>>, vector<1x128x128xf32>,
    } else {
    }
    return
  }
  func.func @transform_0(%arg0: i32, %arg1: i32, %arg2: i32) -> (i32, i32, i32) {
    %c0_i32 = arith.constant 0 : i32
    %c0_i32_0 = arith.constant 0 : i32
    return %arg0, %arg2, %c0_i32 : i32, i32, i32
  }
  func.func @transform_1(%arg0: i32, %arg1: i32, %arg2: i32) -> (i32, i32, i32) {
    %c0_i32 = arith.constant 0 : i32
    return %arg0, %arg1, %arg2 : i32, i32, i32
  }
  func.func @transform_2(%arg0: i32, %arg1: i32, %arg2: i32) -> (i32, i32, i32) {
    %c0_i32 = arith.constant 0 : i32
    %c0_i32_0 = arith.constant 0 : i32
    return %arg0, %arg1, %c0_i32 : i32, i32, i32
  }
  func.func @transform_3(%arg0: i32, %arg1: i32, %arg2: i32) -> (i32, i32) {
    %c0_i32 = arith.constant 0 : i32
    %c0_i32_0 = arith.constant 0 : i32
    %c0_i32_1 = arith.constant 0 : i32
    return %c0_i32, %c0_i32_0 : i32, i32
  }
  func.func @transform_4(%arg0: i32, %arg1: i32, %arg2: i32) -> (i32, i32) {
    %c0_i32 = arith.constant 0 : i32
    %c0_i32_0 = arith.constant 0 : i32
    %c0_i32_1 = arith.constant 0 : i32
    return %c0_i32, %c0_i32_0 : i32, i32
  }
  func.func @transform_5(%arg0: i32, %arg1: i32, %arg2: i32) -> (i32, i32) {
    %c0_i32 = arith.constant 0 : i32
    %c0_i32_0 = arith.constant 0 : i32
    %c0_i32_1 = arith.constant 0 : i32
    return %c0_i32, %c0_i32_0 : i32, i32
  }
  func.func @transform_6(%arg0: i32, %arg1: i32, %arg2: i32) -> (i32, i32) {
    %c0_i32 = arith.constant 0 : i32
    %c0_i32_0 = arith.constant 0 : i32
    %c0_i32_1 = arith.constant 0 : i32
    return %c0_i32, %c0_i32_0 : i32, i32
  }
  func.func @transform_7(%arg0: i32, %arg1: i32, %arg2: i32) -> (i32, i32) {
    %c0_i32 = arith.constant 0 : i32
    %c0_i32_0 = arith.constant 0 : i32
    %c0_i32_1 = arith.constant 0 : i32
    return %c0_i32, %c0_i32_0 : i32, i32
  }
  func.func @transform_8(%arg0: i32, %arg1: i32, %arg2: i32) -> (i32, i32) {
    %c0_i32 = arith.constant 0 : i32
    %c0_i32_0 = arith.constant 0 : i32
    %c0_i32_1 = arith.constant 0 : i32
    return %c0_i32, %c0_i32_0 : i32, i32
  }
  func.func @transform_9(%arg0: i32, %arg1: i32, %arg2: i32) -> (i32, i32) {
    %c0_i32 = arith.constant 0 : i32
    %c0_i32_0 = arith.constant 0 : i32
    %c0_i32_1 = arith.constant 0 : i32
    return %c0_i32, %c0_i32_0 : i32, i32
  }
  func.func @transform_10(%arg0: i32, %arg1: i32, %arg2: i32) -> (i32, i32) {
    %c0_i32 = arith.constant 0 : i32
    %c0_i32_0 = arith.constant 0 : i32
    %c0_i32_1 = arith.constant 0 : i32
    return %c0_i32, %c0_i32_0 : i32, i32
  }
  func.func @transform_11(%arg0: i32, %arg1: i32, %arg2: i32) -> (i32, i32) {
    %c0_i32 = arith.constant 0 : i32
    %c0_i32_0 = arith.constant 0 : i32
    %c0_i32_1 = arith.constant 0 : i32
    return %c0_i32, %c0_i32_0 : i32, i32
  }
  func.func @transform_12(%arg0: i32, %arg1: i32, %arg2: i32) -> (i32, i32) {
    %c0_i32 = arith.constant 0 : i32
    %c0_i32_0 = arith.constant 0 : i32
    %c0_i32_1 = arith.constant 0 : i32
    return %c0_i32, %c0_i32_0 : i32, i32
  }
  func.func @transform_13(%arg0: i32, %arg1: i32, %arg2: i32) -> (i32, i32, i32) {
    %c0_i32 = arith.constant 0 : i32
    %c0_i32_0 = arith.constant 0 : i32
    return %arg0, %arg1, %c0_i32 : i32, i32, i32
  }
}

module attributes {stable_mosaic.version = 11 : i64} {
  func.func @_hgcb_layer_kernel(%arg0: i32, %arg1: i32, %arg2: i32, %arg3: memref<1x128x128xf32, #tpu.memory_space<vmem>>, %arg4: memref<1x128x128xbf16, #tpu.memory_space<vmem>>, %arg5: memref<1x128x128xf32, #tpu.memory_space<vmem>>, %arg6: memref<1x128xf32, #tpu.memory_space<vmem>>, %arg7: memref<1x128xf32, #tpu.memory_space<vmem>>, %arg8: memref<128x128xbf16, #tpu.memory_space<vmem>>, %arg9: memref<1x128xf32, #tpu.memory_space<vmem>>, %arg10: memref<1x128xf32, #tpu.memory_space<vmem>>, %arg11: memref<1x128xf32, #tpu.memory_space<vmem>>, %arg12: memref<128x128xbf16, #tpu.memory_space<vmem>>, %arg13: memref<1x128xf32, #tpu.memory_space<vmem>>, %arg14: memref<128x128xbf16, #tpu.memory_space<vmem>>, %arg15: memref<1x128xf32, #tpu.memory_space<vmem>>, %arg16: memref<1x128x128xf32, #tpu.memory_space<vmem>>, %arg17: memref<128x128xf32, #tpu.memory_space<vmem>>) attributes {dimension_semantics = [#tpu.dimension_semantics<parallel>, #tpu.dimension_semantics<parallel>, #tpu.dimension_semantics<arbitrary>], iteration_bounds = array<i64: 2, 1, 1>, scalar_prefetch = 0 : i64, scratch_operands = 1 : i64, tpu.core_type = #tpu.core_type<tc>, window_params = [{transform_indices = @transform_0, window_bounds = array<i64: 1, 128, 128>}, {transform_indices = @transform_1, window_bounds = array<i64: 1, 128, 128>}, {transform_indices = @transform_2, window_bounds = array<i64: 1, 128, 128>}, {pipeline_mode = #tpu.pipeline_mode<synchronous>, transform_indices = @transform_3, window_bounds = array<i64: 1, 128>}, {pipeline_mode = #tpu.pipeline_mode<synchronous>, transform_indices = @transform_4, window_bounds = array<i64: 1, 128>}, {pipeline_mode = #tpu.pipeline_mode<synchronous>, transform_indices = @transform_5, window_bounds = array<i64: 128, 128>}, {pipeline_mode = #tpu.pipeline_mode<synchronous>, transform_indices = @transform_6, window_bounds = array<i64: 1, 128>}, {pipeline_mode = #tpu.pipeline_mode<synchronous>, transform_indices = @transform_7, window_bounds = array<i64: 1, 128>}, {pipeline_mode = #tpu.pipeline_mode<synchronous>, transform_indices = @transform_8, window_bounds = array<i64: 1, 128>}, {pipeline_mode = #tpu.pipeline_mode<synchronous>, transform_indices = @transform_9, window_bounds = array<i64: 128, 128>}, {pipeline_mode = #tpu.pipeline_mode<synchronous>, transform_indices = @transform_10, window_bounds = array<i64: 1, 128>}, {pipeline_mode = #tpu.pipeline_mode<synchronous>, transform_indices = @transform_11, window_bounds = array<i64: 128, 128>}, {pipeline_mode = #tpu.pipeline_mode<synchronous>, transform_indices = @transform_12, window_bounds = array<i64: 1, 128>}, {transform_indices = @transform_13, window_bounds = array<i64: 1, 128, 128>}]} {
    %c0_i32 = arith.constant 0 : i32
    %0 = arith.cmpi eq, %arg2, %c0_i32 : i32
    %1 = arith.extui %0 : i1 to i32
    %c0_i32_0 = arith.constant 0 : i32
    %2 = arith.cmpi ne, %1, %c0_i32_0 : i32
    scf.if %2 {
      %cst_27 = arith.constant 0.000000e+00 : f32
      %47 = vector.broadcast %cst_27 : f32 to vector<128x128xf32>
      %c0_28 = arith.constant 0 : index
      %c0_29 = arith.constant 0 : index
      %48 = vector.load %arg17[%c0_28, %c0_29] : memref<128x128xf32, #tpu.memory_space<vmem>>, vector<128x128xf32>
      tpu.vector_store %arg17[%c0_28, %c0_29], %47 {strides = array<i32>} : memref<128x128xf32, #tpu.memory_space<vmem>>, vector<128x128xf32>,
    } else {
    }
    %c0 = arith.constant 0 : index
    %c0_1 = arith.constant 0 : index
    %c0_2 = arith.constant 0 : index
    %3 = vector.load %arg3[%c0, %c0_1, %c0_2] : memref<1x128x128xf32, #tpu.memory_space<vmem>>, vector<1x128x128xf32>
    %4 = vector.shape_cast %3 : vector<1x128x128xf32> to vector<128x128xf32>
    %c0_3 = arith.constant 0 : index
    %c0_4 = arith.constant 0 : index
    %5 = vector.load %arg6[%c0_3, %c0_4] : memref<1x128xf32, #tpu.memory_space<vmem>>, vector<1x128xf32>
    %c0_5 = arith.constant 0 : index
    %c0_6 = arith.constant 0 : index
    %6 = vector.load %arg7[%c0_5, %c0_6] : memref<1x128xf32, #tpu.memory_space<vmem>>, vector<1x128xf32>
    %cst = arith.constant dense<0.000000e+00> : vector<128xf32>
    %7 = vector.multi_reduction <add>, %4, %cst [1] : vector<128x128xf32> to vector<128xf32>
    %8 = vector.shape_cast %7 : vector<128xf32> to vector<128x1xf32>
    %9 = arith.mulf %4, %4 : vector<128x128xf32>
    %cst_7 = arith.constant dense<0.000000e+00> : vector<128xf32>
    %10 = vector.multi_reduction <add>, %9, %cst_7 [1] : vector<128x128xf32> to vector<128xf32>
    %11 = vector.shape_cast %10 : vector<128xf32> to vector<128x1xf32>
    %cst_8 = arith.constant 7.812500e-03 : f32
    %12 = vector.broadcast %cst_8 : f32 to vector<128x1xf32>
    %13 = arith.mulf %8, %12 : vector<128x1xf32>
    %cst_9 = arith.constant 7.812500e-03 : f32
    %14 = vector.broadcast %cst_9 : f32 to vector<128x1xf32>
    %15 = arith.mulf %11, %14 : vector<128x1xf32>
    %16 = arith.mulf %13, %13 : vector<128x1xf32>
    %17 = arith.subf %15, %16 : vector<128x1xf32>
    %cst_10 = arith.constant 0.000000e+00 : f32
    %18 = vector.broadcast %cst_10 : f32 to vector<128x1xf32>
    %19 = arith.maximumf %17, %18 : vector<128x1xf32>
    %20 = vector.broadcast %13 : vector<128x1xf32> to vector<128x128xf32>
    %21 = arith.subf %4, %20 : vector<128x128xf32>
    %cst_11 = arith.constant 9.99999974E-6 : f32
    %22 = vector.broadcast %cst_11 : f32 to vector<128x1xf32>
    %23 = arith.addf %19, %22 : vector<128x1xf32>
    %24 = math.rsqrt %23 : vector<128x1xf32>
    %25 = vector.broadcast %24 : vector<128x1xf32> to vector<128x128xf32>
    %26 = arith.mulf %21, %25 : vector<128x128xf32>
    %27 = vector.broadcast %5 : vector<1x128xf32> to vector<128x128xf32>
    %28 = arith.mulf %26, %27 : vector<128x128xf32>
    %29 = vector.broadcast %6 : vector<1x128xf32> to vector<128x128xf32>
    %30 = arith.addf %28, %29 : vector<128x128xf32>
    %31 = arith.truncf %30 : vector<128x128xf32> to vector<128x128xbf16>
    %c0_12 = arith.constant 0 : index
    %c0_13 = arith.constant 0 : index
    %32 = vector.load %arg8[%c0_12, %c0_13] : memref<128x128xbf16, #tpu.memory_space<vmem>>, vector<128x128xbf16>
    %cst_14 = arith.constant dense<0.000000e+00> : vector<128x128xf32>
    %33 = tpu.matmul %31, %32, %cst_14 {dimension_numbers = #tpu.dot_dimension_numbers<[1], [0], [0], [1], [0, 0, 1, 1], [], []>} : vector<128x128xbf16>, vector<128x128xbf16>, vector<128x128xf32> -> vector<128x128xf32>
    %c0_15 = arith.constant 0 : index
    %c0_16 = arith.constant 0 : index
    %34 = vector.load %arg9[%c0_15, %c0_16] : memref<1x128xf32, #tpu.memory_space<vmem>>, vector<1x128xf32>
    %35 = vector.broadcast %34 : vector<1x128xf32> to vector<128x128xf32>
    %36 = arith.addf %33, %35 : vector<128x128xf32>
    %c0_17 = arith.constant 0 : index
    %c0_18 = arith.constant 0 : index
    %37 = vector.load %arg17[%c0_17, %c0_18] : memref<128x128xf32, #tpu.memory_space<vmem>>, vector<128x128xf32>
    %c0_19 = arith.constant 0 : index
    %c0_20 = arith.constant 0 : index
    %c0_21 = arith.constant 0 : index
    %38 = vector.load %arg4[%c0_19, %c0_20, %c0_21] : memref<1x128x128xbf16, #tpu.memory_space<vmem>>, vector<1x128x128xbf16>
    %39 = vector.shape_cast %38 : vector<1x128x128xbf16> to vector<128x128xbf16>
    %40 = arith.truncf %36 : vector<128x128xf32> to vector<128x128xbf16>
    %cst_22 = arith.constant dense<0.000000e+00> : vector<128x128xf32>
    %41 = tpu.matmul %39, %40, %cst_22 {dimension_numbers = #tpu.dot_dimension_numbers<[1], [0], [0], [1], [0, 0, 1, 1], [], []>} : vector<128x128xbf16>, vector<128x128xbf16>, vector<128x128xf32> -> vector<128x128xf32>
    %42 = arith.addf %37, %41 : vector<128x128xf32>
    %c0_23 = arith.constant 0 : index
    %c0_24 = arith.constant 0 : index
    %43 = vector.load %arg17[%c0_23, %c0_24] : memref<128x128xf32, #tpu.memory_space<vmem>>, vector<128x128xf32>
    tpu.vector_store %arg17[%c0_23, %c0_24], %42 {strides = array<i32>} : memref<128x128xf32, #tpu.memory_space<vmem>>, vector<128x128xf32>,
    %c0_i32_25 = arith.constant 0 : i32
    %44 = arith.cmpi eq, %arg2, %c0_i32_25 : i32
    %45 = arith.extui %44 : i1 to i32
    %c0_i32_26 = arith.constant 0 : i32
    %46 = arith.cmpi ne, %45, %c0_i32_26 : i32
    scf.if %46 {
      %c0_27 = arith.constant 0 : index
      %c0_28 = arith.constant 0 : index
      %47 = vector.load %arg17[%c0_27, %c0_28] : memref<128x128xf32, #tpu.memory_space<vmem>>, vector<128x128xf32>
      %c0_29 = arith.constant 0 : index
      %c0_30 = arith.constant 0 : index
      %c0_31 = arith.constant 0 : index
      %48 = vector.load %arg5[%c0_29, %c0_30, %c0_31] : memref<1x128x128xf32, #tpu.memory_space<vmem>>, vector<1x128x128xf32>
      %49 = vector.shape_cast %48 : vector<1x128x128xf32> to vector<128x128xf32>
      %50 = arith.addf %47, %49 : vector<128x128xf32>
      %c0_32 = arith.constant 0 : index
      %c0_33 = arith.constant 0 : index
      %51 = vector.load %arg10[%c0_32, %c0_33] : memref<1x128xf32, #tpu.memory_space<vmem>>, vector<1x128xf32>
      %c0_34 = arith.constant 0 : index
      %c0_35 = arith.constant 0 : index
      %52 = vector.load %arg11[%c0_34, %c0_35] : memref<1x128xf32, #tpu.memory_space<vmem>>, vector<1x128xf32>
      %cst_36 = arith.constant dense<0.000000e+00> : vector<128xf32>
      %53 = vector.multi_reduction <add>, %50, %cst_36 [1] : vector<128x128xf32> to vector<128xf32>
      %54 = vector.shape_cast %53 : vector<128xf32> to vector<128x1xf32>
      %55 = arith.mulf %50, %50 : vector<128x128xf32>
      %cst_37 = arith.constant dense<0.000000e+00> : vector<128xf32>
      %56 = vector.multi_reduction <add>, %55, %cst_37 [1] : vector<128x128xf32> to vector<128xf32>
      %57 = vector.shape_cast %56 : vector<128xf32> to vector<128x1xf32>
      %cst_38 = arith.constant 7.812500e-03 : f32
      %58 = vector.broadcast %cst_38 : f32 to vector<128x1xf32>
      %59 = arith.mulf %54, %58 : vector<128x1xf32>
      %cst_39 = arith.constant 7.812500e-03 : f32
      %60 = vector.broadcast %cst_39 : f32 to vector<128x1xf32>
      %61 = arith.mulf %57, %60 : vector<128x1xf32>
      %62 = arith.mulf %59, %59 : vector<128x1xf32>
      %63 = arith.subf %61, %62 : vector<128x1xf32>
      %cst_40 = arith.constant 0.000000e+00 : f32
      %64 = vector.broadcast %cst_40 : f32 to vector<128x1xf32>
      %65 = arith.maximumf %63, %64 : vector<128x1xf32>
      %66 = vector.broadcast %59 : vector<128x1xf32> to vector<128x128xf32>
      %67 = arith.subf %50, %66 : vector<128x128xf32>
      %cst_41 = arith.constant 9.99999974E-6 : f32
      %68 = vector.broadcast %cst_41 : f32 to vector<128x1xf32>
      %69 = arith.addf %65, %68 : vector<128x1xf32>
      %70 = math.rsqrt %69 : vector<128x1xf32>
      %71 = vector.broadcast %70 : vector<128x1xf32> to vector<128x128xf32>
      %72 = arith.mulf %67, %71 : vector<128x128xf32>
      %73 = vector.broadcast %51 : vector<1x128xf32> to vector<128x128xf32>
      %74 = arith.mulf %72, %73 : vector<128x128xf32>
      %75 = vector.broadcast %52 : vector<1x128xf32> to vector<128x128xf32>
      %76 = arith.addf %74, %75 : vector<128x128xf32>
      %77 = arith.truncf %76 : vector<128x128xf32> to vector<128x128xbf16>
      %c0_42 = arith.constant 0 : index
      %c0_43 = arith.constant 0 : index
      %78 = vector.load %arg12[%c0_42, %c0_43] : memref<128x128xbf16, #tpu.memory_space<vmem>>, vector<128x128xbf16>
      %cst_44 = arith.constant dense<0.000000e+00> : vector<128x128xf32>
      %79 = tpu.matmul %77, %78, %cst_44 {dimension_numbers = #tpu.dot_dimension_numbers<[1], [0], [0], [1], [0, 0, 1, 1], [], []>} : vector<128x128xbf16>, vector<128x128xbf16>, vector<128x128xf32> -> vector<128x128xf32>
      %c0_45 = arith.constant 0 : index
      %c0_46 = arith.constant 0 : index
      %80 = vector.load %arg13[%c0_45, %c0_46] : memref<1x128xf32, #tpu.memory_space<vmem>>, vector<1x128xf32>
      %81 = vector.broadcast %80 : vector<1x128xf32> to vector<128x128xf32>
      %82 = arith.addf %79, %81 : vector<128x128xf32>
      %cst_47 = arith.constant 0.000000e+00 : f32
      %83 = vector.broadcast %cst_47 : f32 to vector<128x128xf32>
      %84 = arith.maximumf %82, %83 : vector<128x128xf32>
      %85 = arith.truncf %84 : vector<128x128xf32> to vector<128x128xbf16>
      %c0_48 = arith.constant 0 : index
      %c0_49 = arith.constant 0 : index
      %86 = vector.load %arg14[%c0_48, %c0_49] : memref<128x128xbf16, #tpu.memory_space<vmem>>, vector<128x128xbf16>
      %cst_50 = arith.constant dense<0.000000e+00> : vector<128x128xf32>
      %87 = tpu.matmul %85, %86, %cst_50 {dimension_numbers = #tpu.dot_dimension_numbers<[1], [0], [0], [1], [0, 0, 1, 1], [], []>} : vector<128x128xbf16>, vector<128x128xbf16>, vector<128x128xf32> -> vector<128x128xf32>
      %c0_51 = arith.constant 0 : index
      %c0_52 = arith.constant 0 : index
      %88 = vector.load %arg15[%c0_51, %c0_52] : memref<1x128xf32, #tpu.memory_space<vmem>>, vector<1x128xf32>
      %89 = vector.broadcast %88 : vector<1x128xf32> to vector<128x128xf32>
      %90 = arith.addf %87, %89 : vector<128x128xf32>
      %91 = arith.addf %90, %50 : vector<128x128xf32>
      %c0_53 = arith.constant 0 : index
      %c0_54 = arith.constant 0 : index
      %c0_55 = arith.constant 0 : index
      %92 = vector.load %arg16[%c0_53, %c0_54, %c0_55] : memref<1x128x128xf32, #tpu.memory_space<vmem>>, vector<1x128x128xf32>
      %93 = vector.shape_cast %92 : vector<1x128x128xf32> to vector<128x128xf32>
      %94 = vector.shape_cast %91 : vector<128x128xf32> to vector<1x128x128xf32>
      tpu.vector_store %arg16[%c0_53, %c0_54, %c0_55], %94 {strides = array<i32>} : memref<1x128x128xf32, #tpu.memory_space<vmem>>, vector<1x128x128xf32>,
    } else {
    }
    return
  }
  func.func @transform_0(%arg0: i32, %arg1: i32, %arg2: i32) -> (i32, i32, i32) {
    %c0_i32 = arith.constant 0 : i32
    %c0_i32_0 = arith.constant 0 : i32
    return %arg0, %arg2, %c0_i32 : i32, i32, i32
  }
  func.func @transform_1(%arg0: i32, %arg1: i32, %arg2: i32) -> (i32, i32, i32) {
    %c0_i32 = arith.constant 0 : i32
    return %arg0, %arg1, %arg2 : i32, i32, i32
  }
  func.func @transform_2(%arg0: i32, %arg1: i32, %arg2: i32) -> (i32, i32, i32) {
    %c0_i32 = arith.constant 0 : i32
    %c0_i32_0 = arith.constant 0 : i32
    return %arg0, %arg1, %c0_i32 : i32, i32, i32
  }
  func.func @transform_3(%arg0: i32, %arg1: i32, %arg2: i32) -> (i32, i32) {
    %c0_i32 = arith.constant 0 : i32
    %c0_i32_0 = arith.constant 0 : i32
    %c0_i32_1 = arith.constant 0 : i32
    return %c0_i32, %c0_i32_0 : i32, i32
  }
  func.func @transform_4(%arg0: i32, %arg1: i32, %arg2: i32) -> (i32, i32) {
    %c0_i32 = arith.constant 0 : i32
    %c0_i32_0 = arith.constant 0 : i32
    %c0_i32_1 = arith.constant 0 : i32
    return %c0_i32, %c0_i32_0 : i32, i32
  }
  func.func @transform_5(%arg0: i32, %arg1: i32, %arg2: i32) -> (i32, i32) {
    %c0_i32 = arith.constant 0 : i32
    %c0_i32_0 = arith.constant 0 : i32
    %c0_i32_1 = arith.constant 0 : i32
    return %c0_i32, %c0_i32_0 : i32, i32
  }
  func.func @transform_6(%arg0: i32, %arg1: i32, %arg2: i32) -> (i32, i32) {
    %c0_i32 = arith.constant 0 : i32
    %c0_i32_0 = arith.constant 0 : i32
    %c0_i32_1 = arith.constant 0 : i32
    return %c0_i32, %c0_i32_0 : i32, i32
  }
  func.func @transform_7(%arg0: i32, %arg1: i32, %arg2: i32) -> (i32, i32) {
    %c0_i32 = arith.constant 0 : i32
    %c0_i32_0 = arith.constant 0 : i32
    %c0_i32_1 = arith.constant 0 : i32
    return %c0_i32, %c0_i32_0 : i32, i32
  }
  func.func @transform_8(%arg0: i32, %arg1: i32, %arg2: i32) -> (i32, i32) {
    %c0_i32 = arith.constant 0 : i32
    %c0_i32_0 = arith.constant 0 : i32
    %c0_i32_1 = arith.constant 0 : i32
    return %c0_i32, %c0_i32_0 : i32, i32
  }
  func.func @transform_9(%arg0: i32, %arg1: i32, %arg2: i32) -> (i32, i32) {
    %c0_i32 = arith.constant 0 : i32
    %c0_i32_0 = arith.constant 0 : i32
    %c0_i32_1 = arith.constant 0 : i32
    return %c0_i32, %c0_i32_0 : i32, i32
  }
  func.func @transform_10(%arg0: i32, %arg1: i32, %arg2: i32) -> (i32, i32) {
    %c0_i32 = arith.constant 0 : i32
    %c0_i32_0 = arith.constant 0 : i32
    %c0_i32_1 = arith.constant 0 : i32
    return %c0_i32, %c0_i32_0 : i32, i32
  }
  func.func @transform_11(%arg0: i32, %arg1: i32, %arg2: i32) -> (i32, i32) {
    %c0_i32 = arith.constant 0 : i32
    %c0_i32_0 = arith.constant 0 : i32
    %c0_i32_1 = arith.constant 0 : i32
    return %c0_i32, %c0_i32_0 : i32, i32
  }
  func.func @transform_12(%arg0: i32, %arg1: i32, %arg2: i32) -> (i32, i32) {
    %c0_i32 = arith.constant 0 : i32
    %c0_i32_0 = arith.constant 0 : i32
    %c0_i32_1 = arith.constant 0 : i32
    return %c0_i32, %c0_i32_0 : i32, i32
  }
  func.func @transform_13(%arg0: i32, %arg1: i32, %arg2: i32) -> (i32, i32, i32) {
    %c0_i32 = arith.constant 0 : i32
    %c0_i32_0 = arith.constant 0 : i32
    return %arg0, %arg1, %c0_i32 : i32, i32, i32
  }
}

</mosaic_0001>

<llo_original>
// kernel: hgcb_forward.2
$region0: #{hgcb_forward.2}
  #allocation0 [shape = 'u32[]', space=smem, size = 0x4, offset = 0x4, fixed_abs, tag = 'smem constant byte address 0x4 - core index']
  #allocation1 [shape = 'u32[144,128]{1,0:T(1,128)}', space=vmem, size = 0x12000, scoped, tag = 'internal scratch']
  #allocation2 [shape = 'f32[128,128]{1,0:T(8,128)}', space=vmem, size = 0x10000, scoped, tag = 'scratch operand']
  %s0 = inlined_call_operand.vmem [shape: f32[2,128,128], index: 0, kind: input, shape index: {}, may-alias: {0,2}]
  %s1 = inlined_call_operand.vmem [shape: bf16[2,128,128], index: 1, kind: input, shape index: {}]
  %s2 = inlined_call_operand.vmem [shape: f32[2,128,128], index: 2, kind: input, shape index: {}, may-alias: {0,2}]
  %s3 = inlined_call_operand.vmem [shape: f32[1,128], index: 3, kind: input, shape index: {}]
  %s4 = inlined_call_operand.vmem [shape: f32[1,128], index: 4, kind: input, shape index: {}]
  %s5 = inlined_call_operand.vmem [shape: bf16[128,128], index: 5, kind: input, shape index: {}]
  %s6 = inlined_call_operand.vmem [shape: f32[1,128], index: 6, kind: input, shape index: {}]
  %s7 = inlined_call_operand.vmem [shape: f32[1,128], index: 7, kind: input, shape index: {}]
  %s8 = inlined_call_operand.vmem [shape: f32[1,128], index: 8, kind: input, shape index: {}]
  %s9 = inlined_call_operand.vmem [shape: bf16[128,128], index: 9, kind: input, shape index: {}]
  %s10 = inlined_call_operand.vmem [shape: f32[1,128], index: 10, kind: input, shape index: {}]
  %s11 = inlined_call_operand.vmem [shape: bf16[128,128], index: 11, kind: input, shape index: {}]
  %s12 = inlined_call_operand.vmem [shape: f32[1,128], index: 12, kind: input, shape index: {}]
  %s13 = inlined_call_operand.vmem [shape: f32[2,128,128], index: 13, kind: output, shape index: {}]
  %s14 = sld [smem:[#allocation0]]
  $region93: #{hgcb_forward.2} parent=0
    _
  %s16 = ssub.s32 1, %s14
  %s17 = scalar_select 0, %s16, %s14
  loop: start=0, step=1, limit=4
  $region2: #{hgcb_forward.2} parent=0 // loop_pre_header
    _
  $region3: #{hgcb_forward.2} parent=0 // loop_header
    %s19 = sphi 0, %s23
    %p20 = scmp.ge.s32.totalorder %s19, 4
    %s26 = sphi 0, %s45
    %s27 = sphi 0, %s41
    %s28 = sphi 0, %s37
    %s29 = sphi 0, %s26
    %s30 = sphi 0, %s27
    %s31 = sphi 0, %s28
    %s32 = sphi 0, %s29
    %s33 = sphi 0, %s30
    %s34 = sphi 0, %s31
    %s50 = sphi 0, %s52
    %s53 = sphi 0, %s50
    %s54 = sphi 0, %s53
    %s70 = sphi 0, %s54
    %s80 = sphi 0, %s82
    %s83 = sphi 0, %s80
    %s84 = sphi 0, %s83
    %s100 = sphi 0, %s84
    %s108 = sphi 0, %s110
    %s111 = sphi 0, %s108
    %s112 = sphi 0, %s111
    %s128 = sphi 0, %s112
    %s132 = sphi 0, %s132
    %s134 = sphi 0, %s132
    %s135 = sphi 0, %s134
    %s149 = sphi 0, %s135
    %s153 = sphi 0, %s153
    %s155 = sphi 0, %s153
    %s156 = sphi 0, %s155
    %s170 = sphi 0, %s156
    %s174 = sphi 0, %s174
    %s176 = sphi 0, %s174
    %s177 = sphi 0, %s176
    %s191 = sphi 0, %s177
    %s195 = sphi 0, %s195
    %s197 = sphi 0, %s195
    %s198 = sphi 0, %s197
    %s212 = sphi 0, %s198
    %s216 = sphi 0, %s216
    %s218 = sphi 0, %s216
    %s219 = sphi 0, %s218
    %s233 = sphi 0, %s219
    %s237 = sphi 0, %s237
    %s239 = sphi 0, %s237
    %s240 = sphi 0, %s239
    %s254 = sphi 0, %s240
    %s258 = sphi 0, %s258
    %s260 = sphi 0, %s258
    %s261 = sphi 0, %s260
    %s275 = sphi 0, %s261
    %s279 = sphi 0, %s279
    %s281 = sphi 0, %s279
    %s282 = sphi 0, %s281
    %s296 = sphi 0, %s282
    %s300 = sphi 0, %s300
    %s302 = sphi 0, %s300
    %s303 = sphi 0, %s302
    %s317 = sphi 0, %s303
    %s321 = sphi 0, %s321
    %s323 = sphi 0, %s321
    %s324 = sphi 0, %s323
    %s338 = sphi 0, %s324
    %s346 = sphi 0, %s348
    %s349 = sphi 0, %s346
    %s350 = sphi 0, %s349
    %s366 = sphi 0, %s350
  $region4: #{hgcb_forward.2} parent=0 // loop_header_branch
    %22 = sbr.rel (%p20) target = $region8
  $region5: #{hgcb_forward.2} parent=0 // loop_body
    %s24 = ssub.s32 %s19, 1
    %s25 = ssub.s32 %s19, 2
    %s35 = sadd.s32 1, %s28
    %p36 = scmp.ge.s32.totalorder %s35, 1
    %s37 = scalar_select %p36, 0, %s35
    %s38 = sadd.s32 1, %s27
    %s39 = scalar_select %p36, %s38, %s27
    %p40 = scmp.ge.s32.totalorder %s39, 1
    %s41 = scalar_select %p40, 0, %s39
    %s42 = sadd.s32 1, %s26
    %s43 = scalar_select %p40, %s42, %s26
    %p44 = scmp.ge.s32.totalorder %s43, 2
    %s45 = scalar_select %p44, 0, %s43
    %s46 = ssub.s32 %s26, %s45
    %s47 = ssub.s32 %s28, %s37
    %s48 = sor.u32 %s46, %s47
    %p49 = scmp.eq.s32.totalorder %s48, 0
    %s51 = sadd.s32 %s50, 1
    %s52 = scalar_select %p49, %s50, %s51
    %p55 = pneg %p49
    %p56 = scmp.eq.s32.totalorder %s19, 1
    %p57 = por %p55, %p56
    %p58 = scmp.ne.s32.totalorder %s50, %s53
    %p59 = scmp.eq.s32.totalorder %s19, 0
    %p60 = por %p58, %p59
    %p61 = scmp.ne.s32.totalorder %s50, %s53
    %p62 = scmp.eq.s32.totalorder %s24, 1
    %p63 = por %p61, %p62
    %p64 = scmp.ne.s32.totalorder %s53, %s54
    %p65 = scmp.eq.s32.totalorder %s24, 0
    %p66 = por %p64, %p65
    %p67 = scmp.ne.s32.totalorder %s53, %s54
    %p68 = scmp.eq.s32.totalorder %s25, 1
    %p69 = por %p67, %p68
    %p71 = scmp.ne.s32.totalorder %s54, %s70
    %p72 = scmp.eq.s32.totalorder %s25, 0
    %p73 = por %p71, %p72
    %s74 = ssub.s32 %s26, %s45
    %s75 = ssub.s32 %s27, %s41
    %s76 = sor.u32 %s74, %s75
    %s77 = ssub.s32 %s28, %s37
    %s78 = sor.u32 %s76, %s77
    %p79 = scmp.eq.s32.totalorder %s78, 0
    %s81 = sadd.s32 %s80, 1
    %s82 = scalar_select %p79, %s80, %s81
    %p85 = pneg %p79
    %p86 = scmp.eq.s32.totalorder %s19, 1
    %p87 = por %p85, %p86
    %p88 = scmp.ne.s32.totalorder %s80, %s83
    %p89 = scmp.eq.s32.totalorder %s19, 0
    %p90 = por %p88, %p89
    %p91 = scmp.ne.s32.totalorder %s80, %s83
    %p92 = scmp.eq.s32.totalorder %s24, 1
    %p93 = por %p91, %p92
    %p94 = scmp.ne.s32.totalorder %s83, %s84
    %p95 = scmp.eq.s32.totalorder %s24, 0
    %p96 = por %p94, %p95
    %p97 = scmp.ne.s32.totalorder %s83, %s84
    %p98 = scmp.eq.s32.totalorder %s25, 1
    %p99 = por %p97, %p98
    %p101 = scmp.ne.s32.totalorder %s84, %s100
    %p102 = scmp.eq.s32.totalorder %s25, 0
    %p103 = por %p101, %p102
    %s104 = ssub.s32 %s26, %s45
    %s105 = ssub.s32 %s27, %s41
    %s106 = sor.u32 %s104, %s105
    %p107 = scmp.eq.s32.totalorder %s106, 0
    %s109 = sadd.s32 %s108, 1
    %s110 = scalar_select %p107, %s108, %s109
    %p113 = pneg %p107
    %p114 = scmp.eq.s32.totalorder %s19, 1
    %p115 = por %p113, %p114
    %p116 = scmp.ne.s32.totalorder %s108, %s111
    %p117 = scmp.eq.s32.totalorder %s19, 0
    %p118 = por %p116, %p117
    %p119 = scmp.ne.s32.totalorder %s108, %s111
    %p120 = scmp.eq.s32.totalorder %s24, 1
    %p121 = por %p119, %p120
    %p122 = scmp.ne.s32.totalorder %s111, %s112
    %p123 = scmp.eq.s32.totalorder %s24, 0
    %p124 = por %p122, %p123
    %p125 = scmp.ne.s32.totalorder %s111, %s112
    %p126 = scmp.eq.s32.totalorder %s25, 1
    %p127 = por %p125, %p126
    %p129 = scmp.ne.s32.totalorder %s112, %s128
    %p130 = scmp.eq.s32.totalorder %s25, 0
    %p131 = por %p129, %p130
    %s133 = sadd.s32 %s132, 1
    %p136 = scmp.eq.s32.totalorder %s19, 1
    %p137 = scmp.ne.s32.totalorder %s132, %s134
    %p138 = scmp.eq.s32.totalorder %s19, 0
    %p139 = por %p137, %p138
    %p140 = scmp.ne.s32.totalorder %s132, %s134
    %p141 = scmp.eq.s32.totalorder %s24, 1
    %p142 = por %p140, %p141
    %p143 = scmp.ne.s32.totalorder %s134, %s135
    %p144 = scmp.eq.s32.totalorder %s24, 0
    %p145 = por %p143, %p144
    %p146 = scmp.ne.s32.totalorder %s134, %s135
    %p147 = scmp.eq.s32.totalorder %s25, 1
    %p148 = por %p146, %p147
    %p150 = scmp.ne.s32.totalorder %s135, %s149
    %p151 = scmp.eq.s32.totalorder %s25, 0
    %p152 = por %p150, %p151
    %s154 = sadd.s32 %s153, 1
    %p157 = scmp.eq.s32.totalorder %s19, 1
    %p158 = scmp.ne.s32.totalorder %s153, %s155
    %p159 = scmp.eq.s32.totalorder %s19, 0
    %p160 = por %p158, %p159
    %p161 = scmp.ne.s32.totalorder %s153, %s155
    %p162 = scmp.eq.s32.totalorder %s24, 1
    %p163 = por %p161, %p162
    %p164 = scmp.ne.s32.totalorder %s155, %s156
    %p165 = scmp.eq.s32.totalorder %s24, 0
    %p166 = por %p164, %p165
    %p167 = scmp.ne.s32.totalorder %s155, %s156
    %p168 = scmp.eq.s32.totalorder %s25, 1
    %p169 = por %p167, %p168
    %p171 = scmp.ne.s32.totalorder %s156, %s170
    %p172 = scmp.eq.s32.totalorder %s25, 0
    %p173 = por %p171, %p172
    %s175 = sadd.s32 %s174, 1
    %p178 = scmp.eq.s32.totalorder %s19, 1
    %p179 = scmp.ne.s32.totalorder %s174, %s176
    %p180 = scmp.eq.s32.totalorder %s19, 0
    %p181 = por %p179, %p180
    %p182 = scmp.ne.s32.totalorder %s174, %s176
    %p183 = scmp.eq.s32.totalorder %s24, 1
    %p184 = por %p182, %p183
    %p185 = scmp.ne.s32.totalorder %s176, %s177
    %p186 = scmp.eq.s32.totalorder %s24, 0
    %p187 = por %p185, %p186
    %p188 = scmp.ne.s32.totalorder %s176, %s177
    %p189 = scmp.eq.s32.totalorder %s25, 1
    %p190 = por %p188, %p189
    %p192 = scmp.ne.s32.totalorder %s177, %s191
    %p193 = scmp.eq.s32.totalorder %s25, 0
    %p194 = por %p192, %p193
    %s196 = sadd.s32 %s195, 1
    %p199 = scmp.eq.s32.totalorder %s19, 1
    %p200 = scmp.ne.s32.totalorder %s195, %s197
    %p201 = scmp.eq.s32.totalorder %s19, 0
    %p202 = por %p200, %p201
    %p203 = scmp.ne.s32.totalorder %s195, %s197
    %p204 = scmp.eq.s32.totalorder %s24, 1
    %p205 = por %p203, %p204
    %p206 = scmp.ne.s32.totalorder %s197, %s198
    %p207 = scmp.eq.s32.totalorder %s24, 0
    %p208 = por %p206, %p207
    %p209 = scmp.ne.s32.totalorder %s197, %s198
    %p210 = scmp.eq.s32.totalorder %s25, 1
    %p211 = por %p209, %p210
    %p213 = scmp.ne.s32.totalorder %s198, %s212
    %p214 = scmp.eq.s32.totalorder %s25, 0
    %p215 = por %p213, %p214
    %s217 = sadd.s32 %s216, 1
    %p220 = scmp.eq.s32.totalorder %s19, 1
    %p221 = scmp.ne.s32.totalorder %s216, %s218
    %p222 = scmp.eq.s32.totalorder %s19, 0
    %p223 = por %p221, %p222
    %p224 = scmp.ne.s32.totalorder %s216, %s218
    %p225 = scmp.eq.s32.totalorder %s24, 1
    %p226 = por %p224, %p225
    %p227 = scmp.ne.s32.totalorder %s218, %s219
    %p228 = scmp.eq.s32.totalorder %s24, 0
    %p229 = por %p227, %p228
    %p230 = scmp.ne.s32.totalorder %s218, %s219
    %p231 = scmp.eq.s32.totalorder %s25, 1
    %p232 = por %p230, %p231
    %p234 = scmp.ne.s32.totalorder %s219, %s233
    %p235 = scmp.eq.s32.totalorder %s25, 0
    %p236 = por %p234, %p235
    %s238 = sadd.s32 %s237, 1
    %p241 = scmp.eq.s32.totalorder %s19, 1
    %p242 = scmp.ne.s32.totalorder %s237, %s239
    %p243 = scmp.eq.s32.totalorder %s19, 0
    %p244 = por %p242, %p243
    %p245 = scmp.ne.s32.totalorder %s237, %s239
    %p246 = scmp.eq.s32.totalorder %s24, 1
    %p247 = por %p245, %p246
    %p248 = scmp.ne.s32.totalorder %s239, %s240
    %p249 = scmp.eq.s32.totalorder %s24, 0
    %p250 = por %p248, %p249
    %p251 = scmp.ne.s32.totalorder %s239, %s240
    %p252 = scmp.eq.s32.totalorder %s25, 1
    %p253 = por %p251, %p252
    %p255 = scmp.ne.s32.totalorder %s240, %s254
    %p256 = scmp.eq.s32.totalorder %s25, 0
    %p257 = por %p255, %p256
    %s259 = sadd.s32 %s258, 1
    %p262 = scmp.eq.s32.totalorder %s19, 1
    %p263 = scmp.ne.s32.totalorder %s258, %s260
    %p264 = scmp.eq.s32.totalorder %s19, 0
    %p265 = por %p263, %p264
    %p266 = scmp.ne.s32.totalorder %s258, %s260
    %p267 = scmp.eq.s32.totalorder %s24, 1
    %p268 = por %p266, %p267
    %p269 = scmp.ne.s32.totalorder %s260, %s261
    %p270 = scmp.eq.s32.totalorder %s24, 0
    %p271 = por %p269, %p270
    %p272 = scmp.ne.s32.totalorder %s260, %s261
    %p273 = scmp.eq.s32.totalorder %s25, 1
    %p274 = por %p272, %p273
    %p276 = scmp.ne.s32.totalorder %s261, %s275
    %p277 = scmp.eq.s32.totalorder %s25, 0
    %p278 = por %p276, %p277
    %s280 = sadd.s32 %s279, 1
    %p283 = scmp.eq.s32.totalorder %s19, 1
    %p284 = scmp.ne.s32.totalorder %s279, %s281
    %p285 = scmp.eq.s32.totalorder %s19, 0
    %p286 = por %p284, %p285
    %p287 = scmp.ne.s32.totalorder %s279, %s281
    %p288 = scmp.eq.s32.totalorder %s24, 1
    %p289 = por %p287, %p288
    %p290 = scmp.ne.s32.totalorder %s281, %s282
    %p291 = scmp.eq.s32.totalorder %s24, 0
    %p292 = por %p290, %p291
    %p293 = scmp.ne.s32.totalorder %s281, %s282
    %p294 = scmp.eq.s32.totalorder %s25, 1
    %p295 = por %p293, %p294
    %p297 = scmp.ne.s32.totalorder %s282, %s296
    %p298 = scmp.eq.s32.totalorder %s25, 0
    %p299 = por %p297, %p298
    %s301 = sadd.s32 %s300, 1
    %p304 = scmp.eq.s32.totalorder %s19, 1
    %p305 = scmp.ne.s32.totalorder %s300, %s302
    %p306 = scmp.eq.s32.totalorder %s19, 0
    %p307 = por %p305, %p306
    %p308 = scmp.ne.s32.totalorder %s300, %s302
    %p309 = scmp.eq.s32.totalorder %s24, 1
    %p310 = por %p308, %p309
    %p311 = scmp.ne.s32.totalorder %s302, %s303
    %p312 = scmp.eq.s32.totalorder %s24, 0
    %p313 = por %p311, %p312
    %p314 = scmp.ne.s32.totalorder %s302, %s303
    %p315 = scmp.eq.s32.totalorder %s25, 1
    %p316 = por %p314, %p315
    %p318 = scmp.ne.s32.totalorder %s303, %s317
    %p319 = scmp.eq.s32.totalorder %s25, 0
    %p320 = por %p318, %p319
    %s322 = sadd.s32 %s321, 1
    %p325 = scmp.eq.s32.totalorder %s19, 1
    %p326 = scmp.ne.s32.totalorder %s321, %s323
    %p327 = scmp.eq.s32.totalorder %s19, 0
    %p328 = por %p326, %p327
    %p329 = scmp.ne.s32.totalorder %s321, %s323
    %p330 = scmp.eq.s32.totalorder %s24, 1
    %p331 = por %p329, %p330
    %p332 = scmp.ne.s32.totalorder %s323, %s324
    %p333 = scmp.eq.s32.totalorder %s24, 0
    %p334 = por %p332, %p333
    %p335 = scmp.ne.s32.totalorder %s323, %s324
    %p336 = scmp.eq.s32.totalorder %s25, 1
    %p337 = por %p335, %p336
    %p339 = scmp.ne.s32.totalorder %s324, %s338
    %p340 = scmp.eq.s32.totalorder %s25, 0
    %p341 = por %p339, %p340
    %s342 = ssub.s32 %s26, %s45
    %s343 = ssub.s32 %s27, %s41
    %s344 = sor.u32 %s342, %s343
    %p345 = scmp.eq.s32.totalorder %s344, 0
    %s347 = sadd.s32 %s346, 1
    %s348 = scalar_select %p345, %s346, %s347
    %p351 = pneg %p345
    %p352 = scmp.eq.s32.totalorder %s19, 1
    %p353 = por %p351, %p352
    %p354 = scmp.ne.s32.totalorder %s346, %s349
    %p355 = scmp.eq.s32.totalorder %s19, 0
    %p356 = por %p354, %p355
    %p357 = scmp.ne.s32.totalorder %s346, %s349
    %p358 = scmp.eq.s32.totalorder %s24, 1
    %p359 = por %p357, %p358
    %p360 = scmp.ne.s32.totalorder %s349, %s350
    %p361 = scmp.eq.s32.totalorder %s24, 0
    %p362 = por %p360, %p361
    %p363 = scmp.ne.s32.totalorder %s349, %s350
    %p364 = scmp.eq.s32.totalorder %s25, 1
    %p365 = por %p363, %p364
    %p367 = scmp.ne.s32.totalorder %s350, %s366
    %p368 = scmp.eq.s32.totalorder %s25, 0
    %p369 = por %p367, %p368
    %p370 = scmp.le.s32.totalorder 1, %s19
    %p371 = scmp.lt.s32.totalorder %s19, 3
    %p372 = pnand %p370, %p371
    %p373 = pneg %p372
    // Predicated region
    $region9: #{hgcb_forward.2} parent=5 // pred_check
      _
    $region10: #{hgcb_forward.2} parent=5 // pred_check_branch
      %375 = sbr.rel (%p372) target = $region12
    $region11: #{hgcb_forward.2} parent=5 // pred_region
      %s376 = ssub.s32 %s19, 1
      // Predicated region
      $region13: #{hgcb_forward.2} parent=11 // pred_check
        %p377 = pneg %p145
      $region14: #{hgcb_forward.2} parent=11 // pred_check_branch
        %379 = sbr.rel (%p377) target = $region16
      $region15: #{hgcb_forward.2} parent=11 // pred_region
        _
      $region16: #{hgcb_forward.2} parent=11 // pred_fallthru
        _
      // Predicated region
      $region17: #{hgcb_forward.2} parent=11 // pred_check
        %p380 = pneg %p166
      $region18: #{hgcb_forward.2} parent=11 // pred_check_branch
        %382 = sbr.rel (%p380) target = $region20
      $region19: #{hgcb_forward.2} parent=11 // pred_region
        _
      $region20: #{hgcb_forward.2} parent=11 // pred_fallthru
        _
      // Predicated region
      $region21: #{hgcb_forward.2} parent=11 // pred_check
        %p383 = pneg %p187
      $region22: #{hgcb_forward.2} parent=11 // pred_check_branch
        %385 = sbr.rel (%p383) target = $region24
      $region23: #{hgcb_forward.2} parent=11 // pred_region
        _
      $region24: #{hgcb_forward.2} parent=11 // pred_fallthru
        _
      // Predicated region
      $region25: #{hgcb_forward.2} parent=11 // pred_check
        %p386 = pneg %p208
      $region26: #{hgcb_forward.2} parent=11 // pred_check_branch
        %388 = sbr.rel (%p386) target = $region28
      $region27: #{hgcb_forward.2} parent=11 // pred_region
        _
      $region28: #{hgcb_forward.2} parent=11 // pred_fallthru
        _
      // Predicated region
      $region29: #{hgcb_forward.2} parent=11 // pred_check
        %p389 = pneg %p229
      $region30: #{hgcb_forward.2} parent=11 // pred_check_branch
        %391 = sbr.rel (%p389) target = $region32
      $region31: #{hgcb_forward.2} parent=11 // pred_region
        _
      $region32: #{hgcb_forward.2} parent=11 // pred_fallthru
        _
      // Predicated region
      $region33: #{hgcb_forward.2} parent=11 // pred_check
        %p392 = pneg %p250
      $region34: #{hgcb_forward.2} parent=11 // pred_check_branch
        %394 = sbr.rel (%p392) target = $region36
      $region35: #{hgcb_forward.2} parent=11 // pred_region
        _
      $region36: #{hgcb_forward.2} parent=11 // pred_fallthru
        _
      // Predicated region
      $region37: #{hgcb_forward.2} parent=11 // pred_check
        %p395 = pneg %p271
      $region38: #{hgcb_forward.2} parent=11 // pred_check_branch
        %397 = sbr.rel (%p395) target = $region40
      $region39: #{hgcb_forward.2} parent=11 // pred_region
        _
      $region40: #{hgcb_forward.2} parent=11 // pred_fallthru
        _
      // Predicated region
      $region41: #{hgcb_forward.2} parent=11 // pred_check
        %p398 = pneg %p292
      $region42: #{hgcb_forward.2} parent=11 // pred_check_branch
        %400 = sbr.rel (%p398) target = $region44
      $region43: #{hgcb_forward.2} parent=11 // pred_region
        _
      $region44: #{hgcb_forward.2} parent=11 // pred_fallthru
        _
      // Predicated region
      $region45: #{hgcb_forward.2} parent=11 // pred_check
        %p401 = pneg %p313
      $region46: #{hgcb_forward.2} parent=11 // pred_check_branch
        %403 = sbr.rel (%p401) target = $region48
      $region47: #{hgcb_forward.2} parent=11 // pred_region
        _
      $region48: #{hgcb_forward.2} parent=11 // pred_fallthru
        _
      // Predicated region
      $region49: #{hgcb_forward.2} parent=11 // pred_check
        %p404 = pneg %p334
      $region50: #{hgcb_forward.2} parent=11 // pred_check_branch
        %406 = sbr.rel (%p404) target = $region52
      $region51: #{hgcb_forward.2} parent=11 // pred_region
        _
      $region52: #{hgcb_forward.2} parent=11 // pred_fallthru
        _
    $region12: #{hgcb_forward.2} parent=5 // pred_fallthru
      _
    %p407 = scmp.lt.s32.totalorder %s19, 2
    // Predicated region
    $region53: #{hgcb_forward.2} parent=5 // pred_check
      %p408 = pneg %p407
    $region54: #{hgcb_forward.2} parent=5 // pred_check_branch
      %410 = sbr.rel (%p408) target = $region56
    $region55: #{hgcb_forward.2} parent=5 // pred_region
      // Predicated region
      $region57: #{hgcb_forward.2} parent=55 // pred_check
        %p411 = pneg %p60
      $region58: #{hgcb_forward.2} parent=55 // pred_check_branch
        %413 = sbr.rel (%p411) target = $region60
      $region59: #{hgcb_forward.2} parent=55 // pred_region
        %s414 = smul.u32 16, %s28
        %p415 = scmp.lt.s32.totalorder %s26, 1
        %s416 = scalar_select %p415, %s26, 1
        %p417 = scmp.lt.s32.totalorder %s414, 15
        %s418 = scalar_select %p417, %s414, 15
        %s419 = smul.addr %s416, 16
        %s420 = sadd.s32 %s418, %s419
        %s421 = smul.addr %s420, 8
        %s422 = scalar_lea.vmem %s0, %s421
        %s423 = smul.u32 16, %s28
      $region60: #{hgcb_forward.2} parent=55 // pred_fallthru
        _
      // Predicated region
      $region61: #{hgcb_forward.2} parent=55 // pred_check
        %p424 = pneg %p90
      $region62: #{hgcb_forward.2} parent=55 // pred_check_branch
        %426 = sbr.rel (%p424) target = $region64
      $region63: #{hgcb_forward.2} parent=55 // pred_region
        %s427 = smul.u32 16, %s27
        %p428 = scmp.lt.s32.totalorder %s26, 1
        %s429 = scalar_select %p428, %s26, 1
        %p430 = scmp.lt.s32.totalorder %s427, 15
        %s431 = scalar_select %p430, %s427, 15
        %p432 = scmp.lt.s32.totalorder %s28, 0
        %s433 = scalar_select %p432, %s28, 0
        %s434 = sadd.s32 %s433, %s431
        %s435 = smul.addr %s429, 16
        %s436 = sadd.s32 %s434, %s435
        %s437 = smul.addr %s436, 4
        %s438 = scalar_lea.vmem %s1, %s437
        %s439 = smul.u32 16, %s27
      $region64: #{hgcb_forward.2} parent=55 // pred_fallthru
        _
      // Predicated region
      $region65: #{hgcb_forward.2} parent=55 // pred_check
        %p440 = pneg %p118
      $region66: #{hgcb_forward.2} parent=55 // pred_check_branch
        %442 = sbr.rel (%p440) target = $region68
      $region67: #{hgcb_forward.2} parent=55 // pred_region
        %s443 = smul.u32 16, %s27
        %p444 = scmp.lt.s32.totalorder %s26, 1
        %s445 = scalar_select %p444, %s26, 1
        %p446 = scmp.lt.s32.totalorder %s443, 15
        %s447 = scalar_select %p446, %s443, 15
        %s448 = smul.addr %s445, 16
        %s449 = sadd.s32 %s447, %s448
        %s450 = smul.addr %s449, 8
        %s451 = scalar_lea.vmem %s2, %s450
        %s452 = smul.u32 16, %s27
      $region68: #{hgcb_forward.2} parent=55 // pred_fallthru
        _
    $region56: #{hgcb_forward.2} parent=5 // pred_fallthru
      _
    %p453 = scmp.le.s32.totalorder 1, %s19
    %p454 = scmp.lt.s32.totalorder %s19, 3
    %p455 = pnand %p453, %p454
    %p456 = pneg %p455
    // Predicated region
    $region69: #{hgcb_forward.2} parent=5 // pred_check
      _
    $region70: #{hgcb_forward.2} parent=5 // pred_check_branch
      %458 = sbr.rel (%p455) target = $region72
    $region71: #{hgcb_forward.2} parent=5 // pred_region
      %s459 = ssub.s32 %s19, 1
      %s460 = smul.u32 16, %s31
      %p461 = scmp.lt.s32.totalorder %s29, 1
      %s462 = scalar_select %p461, %s29, 1
      %p463 = scmp.lt.s32.totalorder %s460, 15
      %s464 = scalar_select %p463, %s460, 15
      %s465 = smul.addr %s462, 16
      %s466 = sadd.s32 %s464, %s465
      %s467 = smul.addr %s466, 8
      %s468 = scalar_lea.vmem %s0, %s467
      %p469 = pneg %p66
      %p470 = pneg %p63
      %s471 = smul.u32 16, %s30
      %p472 = scmp.lt.s32.totalorder %s29, 1
      %s473 = scalar_select %p472, %s29, 1
      %p474 = scmp.lt.s32.totalorder %s471, 15
      %s475 = scalar_select %p474, %s471, 15
      %p476 = scmp.lt.s32.totalorder %s31, 0
      %s477 = scalar_select %p476, %s31, 0
      %s478 = sadd.s32 %s477, %s475
      %s479 = smul.addr %s473, 16
      %s480 = sadd.s32 %s478, %s479
      %s481 = smul.addr %s480, 4
      %s482 = scalar_lea.vmem %s1, %s481
      %p483 = pneg %p96
      %p484 = pneg %p93
      %s485 = smul.u32 16, %s30
      %p486 = scmp.lt.s32.totalorder %s29, 1
      %s487 = scalar_select %p486, %s29, 1
      %p488 = scmp.lt.s32.totalorder %s485, 15
      %s489 = scalar_select %p488, %s485, 15
      %s490 = smul.addr %s487, 16
      %s491 = sadd.s32 %s489, %s490
      %s492 = smul.addr %s491, 8
      %s493 = scalar_lea.vmem %s2, %s492
      %p494 = pneg %p124
      %p495 = pneg %p121
      %p496 = pneg %p145
      %p497 = pneg %p142
      %p498 = pneg %p166
      %p499 = pneg %p163
      %p500 = pneg %p187
      %p501 = pneg %p184
      %p502 = pneg %p208
      %p503 = pneg %p205
      %p504 = pneg %p229
      %p505 = pneg %p226
      %p506 = pneg %p250
      %p507 = pneg %p247
      %p508 = pneg %p271
      %p509 = pneg %p268
      %p510 = pneg %p292
      %p511 = pneg %p289
      %p512 = pneg %p313
      %p513 = pneg %p310
      %p514 = pneg %p334
      %p515 = pneg %p331
      %p516 = pneg %p362
      %p517 = pneg %p359
      %s518 = smul.u32 16, %s30
      %p519 = scmp.lt.s32.totalorder %s29, 1
      %s520 = scalar_select %p519, %s29, 1
      %p521 = scmp.lt.s32.totalorder %s518, 15
      %s522 = scalar_select %p521, %s518, 15
      %s523 = smul.addr %s520, 16
      %s524 = sadd.s32 %s522, %s523
      %s525 = smul.addr %s524, 8
      %s526 = scalar_lea.vmem %s13, %s525
      %s527 = smul.u32 16, %s31
      %p528 = scmp.lt.s32.totalorder %s29, 1
      %s529 = scalar_select %p528, %s29, 1
      %p530 = scmp.lt.s32.totalorder %s527, 15
      %s531 = scalar_select %p530, %s527, 15
      %s532 = smul.addr %s529, 16
      %s533 = sadd.s32 %s531, %s532
      %s534 = smul.addr %s533, 8
      %s535 = scalar_lea.vmem %s0, %s534
      %s536 = smul.u32 16, %s31
      %s537 = smul.u32 16, %s30
      %p538 = scmp.lt.s32.totalorder %s29, 1
      %s539 = scalar_select %p538, %s29, 1
      %p540 = scmp.lt.s32.totalorder %s537, 15
      %s541 = scalar_select %p540, %s537, 15
      %p542 = scmp.lt.s32.totalorder %s31, 0
      %s543 = scalar_select %p542, %s31, 0
      %s544 = sadd.s32 %s543, %s541
      %s545 = smul.addr %s539, 16
      %s546 = sadd.s32 %s544, %s545
      %s547 = smul.addr %s546, 4
      %s548 = scalar_lea.vmem %s1, %s547
      %s549 = smul.u32 16, %s30
      %s550 = smul.u32 16, %s30
      %p551 = scmp.lt.s32.totalorder %s29, 1
      %s552 = scalar_select %p551, %s29, 1
      %p553 = scmp.lt.s32.totalorder %s550, 15
      %s554 = scalar_select %p553, %s550, 15
      %s555 = smul.addr %s552, 16
      %s556 = sadd.s32 %s554, %s555
      %s557 = smul.addr %s556, 8
      %s558 = scalar_lea.vmem %s2, %s557
      %s559 = smul.u32 16, %s30
      %s560 = smul.u32 16, %s30
      %p561 = scmp.lt.s32.totalorder %s29, 1
      %s562 = scalar_select %p561, %s29, 1
      %p563 = scmp.lt.s32.totalorder %s560, 15
      %s564 = scalar_select %p563, %s560, 15
      %s565 = smul.addr %s562, 16
      %s566 = sadd.s32 %s564, %s565
      %s567 = smul.addr %s566, 8
      %s568 = scalar_lea.vmem %s13, %s567
      %s569 = smul.u32 16, %s30
      %p571 = scmp.eq.s32.totalorder %s31, 0
      // Predicated region
      $region73: #{hgcb_forward.2} parent=71 // pred_check
        %p572 = pneg %p571
      $region74: #{hgcb_forward.2} parent=71 // pred_check_branch
        %574 = sbr.rel (%p572) target = $region76
      $region75: #{hgcb_forward.2} parent=71 // pred_region
        %575 = vst [vmem:[#allocation2] sm:$0xff] 0.0
        %576 = vst [vmem:[#allocation2 + $0x8] sm:$0xff] 0.0
        %577 = vst [vmem:[#allocation2 + $0x10] sm:$0xff] 0.0
        %578 = vst [vmem:[#allocation2 + $0x18] sm:$0xff] 0.0
        %579 = vst [vmem:[#allocation2 + $0x20] sm:$0xff] 0.0
        %580 = vst [vmem:[#allocation2 + $0x28] sm:$0xff] 0.0
        %581 = vst [vmem:[#allocation2 + $0x30] sm:$0xff] 0.0
        %582 = vst [vmem:[#allocation2 + $0x38] sm:$0xff] 0.0
        %583 = vst [vmem:[#allocation2 + $0x40] sm:$0xff] 0.0
        %584 = vst [vmem:[#allocation2 + $0x48] sm:$0xff] 0.0
        %585 = vst [vmem:[#allocation2 + $0x50] sm:$0xff] 0.0
        %586 = vst [vmem:[#allocation2 + $0x58] sm:$0xff] 0.0
        %587 = vst [vmem:[#allocation2 + $0x60] sm:$0xff] 0.0
        %588 = vst [vmem:[#allocation2 + $0x68] sm:$0xff] 0.0
        %589 = vst [vmem:[#allocation2 + $0x70] sm:$0xff] 0.0
        %590 = vst [vmem:[#allocation2 + $0x78] sm:$0xff] 0.0
      $region76: #{hgcb_forward.2} parent=71 // pred_fallthru
        _
      %v591 = vld [vmem:[%s535] sm:$0xff]
      %v592 = vld [vmem:[%s535 + $0x8] sm:$0xff]
      %v593 = vld [vmem:[%s535 + $0x10] sm:$0xff]
      %v594 = vld [vmem:[%s535 + $0x18] sm:$0xff]
      %v595 = vld [vmem:[%s535 + $0x20] sm:$0xff]
      %v596 = vld [vmem:[%s535 + $0x28] sm:$0xff]
      %v597 = vld [vmem:[%s535 + $0x30] sm:$0xff]
      %v598 = vld [vmem:[%s535 + $0x38] sm:$0xff]
      %v599 = vld [vmem:[%s535 + $0x40] sm:$0xff]
      %v600 = vld [vmem:[%s535 + $0x48] sm:$0xff]
      %v601 = vld [vmem:[%s535 + $0x50] sm:$0xff]
      %v602 = vld [vmem:[%s535 + $0x58] sm:$0xff]
      %v603 = vld [vmem:[%s535 + $0x60] sm:$0xff]
      %v604 = vld [vmem:[%s535 + $0x68] sm:$0xff]
      %v605 = vld [vmem:[%s535 + $0x70] sm:$0xff]
      %v606 = vld [vmem:[%s535 + $0x78] sm:$0xff]
      %v607 = vld [vmem:[%s3] sm:$0x1]
      %v608 = vld [vmem:[%s4] sm:$0x1]
      %609 = vadd.xlane.f32.xlu0 %v591
      %v610 = vpop.xlane.xlu0 %609
      %611 = vadd.xlane.f32.xlu0 %v592
      %v612 = vpop.xlane.xlu0 %611
      %613 = vadd.xlane.f32.xlu0 %v593
      %v614 = vpop.xlane.xlu0 %613
      %615 = vadd.xlane.f32.xlu0 %v594
      %v616 = vpop.xlane.xlu0 %615
      %617 = vadd.xlane.f32.xlu0 %v595
      %v618 = vpop.xlane.xlu0 %617
      %619 = vadd.xlane.f32.xlu0 %v596
      %v620 = vpop.xlane.xlu0 %619
      %621 = vadd.xlane.f32.xlu0 %v597
      %v622 = vpop.xlane.xlu0 %621
      %623 = vadd.xlane.f32.xlu0 %v598
      %v624 = vpop.xlane.xlu0 %623
      %625 = vadd.xlane.f32.xlu0 %v599
      %v626 = vpop.xlane.xlu0 %625
      %627 = vadd.xlane.f32.xlu0 %v600
      %v628 = vpop.xlane.xlu0 %627
      %629 = vadd.xlane.f32.xlu0 %v601
      %v630 = vpop.xlane.xlu0 %629
      %631 = vadd.xlane.f32.xlu0 %v602
      %v632 = vpop.xlane.xlu0 %631
      %633 = vadd.xlane.f32.xlu0 %v603
      %v634 = vpop.xlane.xlu0 %633
      %635 = vadd.xlane.f32.xlu0 %v604
      %v636 = vpop.xlane.xlu0 %635
      %637 = vadd.xlane.f32.xlu0 %v605
      %v638 = vpop.xlane.xlu0 %637
      %639 = vadd.xlane.f32.xlu0 %v606
      %v640 = vpop.xlane.xlu0 %639
      %v641 = vmul.f32 %v591, %v591
      %v642 = vmul.f32 %v592, %v592
      %v643 = vmul.f32 %v593, %v593
      %v644 = vmul.f32 %v594, %v594
      %v645 = vmul.f32 %v595, %v595
      %v646 = vmul.f32 %v596, %v596
      %v647 = vmul.f32 %v597, %v597
      %v648 = vmul.f32 %v598, %v598
      %v649 = vmul.f32 %v599, %v599
      %v650 = vmul.f32 %v600, %v600
      %v651 = vmul.f32 %v601, %v601
      %v652 = vmul.f32 %v602, %v602
      %v653 = vmul.f32 %v603, %v603
      %v654 = vmul.f32 %v604, %v604
      %v655 = vmul.f32 %v605, %v605
      %v656 = vmul.f32 %v606, %v606
      %657 = vadd.xlane.f32.xlu0 %v641
      %v658 = vpop.xlane.xlu0 %657
      %659 = vadd.xlane.f32.xlu0 %v642
      %v660 = vpop.xlane.xlu0 %659
      %661 = vadd.xlane.f32.xlu0 %v643
      %v662 = vpop.xlane.xlu0 %661
      %663 = vadd.xlane.f32.xlu0 %v644
      %v664 = vpop.xlane.xlu0 %663
      %665 = vadd.xlane.f32.xlu0 %v645
      %v666 = vpop.xlane.xlu0 %665
      %667 = vadd.xlane.f32.xlu0 %v646
      %v668 = vpop.xlane.xlu0 %667
      %669 = vadd.xlane.f32.xlu0 %v647
      %v670 = vpop.xlane.xlu0 %669
      %671 = vadd.xlane.f32.xlu0 %v648
      %v672 = vpop.xlane.xlu0 %671
      %673 = vadd.xlane.f32.xlu0 %v649
      %v674 = vpop.xlane.xlu0 %673
      %675 = vadd.xlane.f32.xlu0 %v650
      %v676 = vpop.xlane.xlu0 %675
      %677 = vadd.xlane.f32.xlu0 %v651
      %v678 = vpop.xlane.xlu0 %677
      %679 = vadd.xlane.f32.xlu0 %v652
      %v680 = vpop.xlane.xlu0 %679
      %681 = vadd.xlane.f32.xlu0 %v653
      %v682 = vpop.xlane.xlu0 %681
      %683 = vadd.xlane.f32.xlu0 %v654
      %v684 = vpop.xlane.xlu0 %683
      %685 = vadd.xlane.f32.xlu0 %v655
      %v686 = vpop.xlane.xlu0 %685
      %687 = vadd.xlane.f32.xlu0 %v656
      %v688 = vpop.xlane.xlu0 %687
      %v689 = vmul.f32 %v610, 0.0078125
      %v690 = vmul.f32 %v612, 0.0078125
      %v691 = vmul.f32 %v614, 0.0078125
      %v692 = vmul.f32 %v616, 0.0078125
      %v693 = vmul.f32 %v618, 0.0078125
      %v694 = vmul.f32 %v620, 0.0078125
      %v695 = vmul.f32 %v622, 0.0078125
      %v696 = vmul.f32 %v624, 0.0078125
      %v697 = vmul.f32 %v626, 0.0078125
      %v698 = vmul.f32 %v628, 0.0078125
      %v699 = vmul.f32 %v630, 0.0078125
      %v700 = vmul.f32 %v632, 0.0078125
      %v701 = vmul.f32 %v634, 0.0078125
      %v702 = vmul.f32 %v636, 0.0078125
      %v703 = vmul.f32 %v638, 0.0078125
      %v704 = vmul.f32 %v640, 0.0078125
      %v705 = vmul.f32 %v658, 0.0078125
      %v706 = vmul.f32 %v660, 0.0078125
      %v707 = vmul.f32 %v662, 0.0078125
      %v708 = vmul.f32 %v664, 0.0078125
      %v709 = vmul.f32 %v666, 0.0078125
      %v710 = vmul.f32 %v668, 0.0078125
      %v711 = vmul.f32 %v670, 0.0078125
      %v712 = vmul.f32 %v672, 0.0078125
      %v713 = vmul.f32 %v674, 0.0078125
      %v714 = vmul.f32 %v676, 0.0078125
      %v715 = vmul.f32 %v678, 0.0078125
      %v716 = vmul.f32 %v680, 0.0078125
      %v717 = vmul.f32 %v682, 0.0078125
      %v718 = vmul.f32 %v684, 0.0078125
      %v719 = vmul.f32 %v686, 0.0078125
      %v720 = vmul.f32 %v688, 0.0078125
      %v721 = vmul.f32 %v689, %v689
      %v722 = vmul.f32 %v690, %v690
      %v723 = vmul.f32 %v691, %v691
      %v724 = vmul.f32 %v692, %v692
      %v725 = vmul.f32 %v693, %v693
      %v726 = vmul.f32 %v694, %v694
      %v727 = vmul.f32 %v695, %v695
      %v728 = vmul.f32 %v696, %v696
      %v729 = vmul.f32 %v697, %v697
      %v730 = vmul.f32 %v698, %v698
      %v731 = vmul.f32 %v699, %v699
      %v732 = vmul.f32 %v700, %v700
      %v733 = vmul.f32 %v701, %v701
      %v734 = vmul.f32 %v702, %v702
      %v735 = vmul.f32 %v703, %v703
      %v736 = vmul.f32 %v704, %v704
      %v737 = vsub.f32 %v705, %v721
      %v738 = vsub.f32 %v706, %v722
      %v739 = vsub.f32 %v707, %v723
      %v740 = vsub.f32 %v708, %v724
      %v741 = vsub.f32 %v709, %v725
      %v742 = vsub.f32 %v710, %v726
      %v743 = vsub.f32 %v711, %v727
      %v744 = vsub.f32 %v712, %v728
      %v745 = vsub.f32 %v713, %v729
      %v746 = vsub.f32 %v714, %v730
      %v747 = vsub.f32 %v715, %v731
      %v748 = vsub.f32 %v716, %v732
      %v749 = vsub.f32 %v717, %v733
      %v750 = vsub.f32 %v718, %v734
      %v751 = vsub.f32 %v719, %v735
      %v752 = vsub.f32 %v720, %v736
      %v753 = vmax.f32 %v737, 0.0
      %v754 = vmax.f32 %v738, 0.0
      %v755 = vmax.f32 %v739, 0.0
      %v756 = vmax.f32 %v740, 0.0
      %v757 = vmax.f32 %v741, 0.0
      %v758 = vmax.f32 %v742, 0.0
      %v759 = vmax.f32 %v743, 0.0
      %v760 = vmax.f32 %v744, 0.0
      %v761 = vmax.f32 %v745, 0.0
      %v762 = vmax.f32 %v746, 0.0
      %v763 = vmax.f32 %v747, 0.0
      %v764 = vmax.f32 %v748, 0.0
      %v765 = vmax.f32 %v749, 0.0
      %v766 = vmax.f32 %v750, 0.0
      %v767 = vmax.f32 %v751, 0.0
      %v768 = vmax.f32 %v752, 0.0
      %v769 = vsub.f32 %v591, %v689
      %v770 = vsub.f32 %v592, %v690
      %v771 = vsub.f32 %v593, %v691
      %v772 = vsub.f32 %v594, %v692
      %v773 = vsub.f32 %v595, %v693
      %v774 = vsub.f32 %v596, %v694
      %v775 = vsub.f32 %v597, %v695
      %v776 = vsub.f32 %v598, %v696
      %v777 = vsub.f32 %v599, %v697
      %v778 = vsub.f32 %v600, %v698
      %v779 = vsub.f32 %v601, %v699
      %v780 = vsub.f32 %v602, %v700
      %v781 = vsub.f32 %v603, %v701
      %v782 = vsub.f32 %v604, %v702
      %v783 = vsub.f32 %v605, %v703
      %v784 = vsub.f32 %v606, %v704
      %v785 = vadd.f32 %v753, 1e-05
      %v786 = vadd.f32 %v754, 1e-05
      %v787 = vadd.f32 %v755, 1e-05
      %v788 = vadd.f32 %v756, 1e-05
      %v789 = vadd.f32 %v757, 1e-05
      %v790 = vadd.f32 %v758, 1e-05
      %v791 = vadd.f32 %v759, 1e-05
      %v792 = vadd.f32 %v760, 1e-05
      %v793 = vadd.f32 %v761, 1e-05
      %v794 = vadd.f32 %v762, 1e-05
      %v795 = vadd.f32 %v763, 1e-05
      %v796 = vadd.f32 %v764, 1e-05
      %v797 = vadd.f32 %v765, 1e-05
      %v798 = vadd.f32 %v766, 1e-05
      %v799 = vadd.f32 %v767, 1e-05
      %v800 = vadd.f32 %v768, 1e-05
      %v801 = vrsqrt.pop %v785
      %v802 = vrsqrt.pop %v786
      %v803 = vrsqrt.pop %v787
      %v804 = vrsqrt.pop %v788
      %v805 = vrsqrt.pop %v789
      %v806 = vrsqrt.pop %v790
      %v807 = vrsqrt.pop %v791
      %v808 = vrsqrt.pop %v792
      %v809 = vrsqrt.pop %v793
      %v810 = vrsqrt.pop %v794
      %v811 = vrsqrt.pop %v795
      %v812 = vrsqrt.pop %v796
      %v813 = vrsqrt.pop %v797
      %v814 = vrsqrt.pop %v798
      %v815 = vrsqrt.pop %v799
      %v816 = vrsqrt.pop %v800
      %v817 = vmul.f32 %v769, %v801
      %v818 = vmul.f32 %v770, %v802
      %v819 = vmul.f32 %v771, %v803
      %v820 = vmul.f32 %v772, %v804
      %v821 = vmul.f32 %v773, %v805
      %v822 = vmul.f32 %v774, %v806
      %v823 = vmul.f32 %v775, %v807
      %v824 = vmul.f32 %v776, %v808
      %v825 = vmul.f32 %v777, %v809
      %v826 = vmul.f32 %v778, %v810
      %v827 = vmul.f32 %v779, %v811
      %v828 = vmul.f32 %v780, %v812
      %v829 = vmul.f32 %v781, %v813
      %v830 = vmul.f32 %v782, %v814
      %v831 = vmul.f32 %v783, %v815
      %v832 = vmul.f32 %v784, %v816
      %v834 = vlaneseq
      %v835 = vshrl.u32 %v834, 7
      %v836 = vsub.s32 0, %v835
      %v837 = vrot.slane %v607, %v836
      %v839 = vmul.f32 %v817, %v837
      %v840 = vmul.f32 %v818, %v837
      %v841 = vmul.f32 %v819, %v837
      %v842 = vmul.f32 %v820, %v837
      %v843 = vmul.f32 %v821, %v837
      %v844 = vmul.f32 %v822, %v837
      %v845 = vmul.f32 %v823, %v837
      %v846 = vmul.f32 %v824, %v837
      %v847 = vmul.f32 %v825, %v837
      %v848 = vmul.f32 %v826, %v837
      %v849 = vmul.f32 %v827, %v837
      %v850 = vmul.f32 %v828, %v837
      %v851 = vmul.f32 %v829, %v837
      %v852 = vmul.f32 %v830, %v837
      %v853 = vmul.f32 %v831, %v837
      %v854 = vmul.f32 %v832, %v837
      %v856 = vlaneseq
      %v857 = vshrl.u32 %v856, 7
      %v858 = vsub.s32 0, %v857
      %v859 = vrot.slane %v608, %v858
      %v861 = vadd.f32 %v839, %v859
      %v862 = vadd.f32 %v840, %v859
      %v863 = vadd.f32 %v841, %v859
      %v864 = vadd.f32 %v842, %v859
      %v865 = vadd.f32 %v843, %v859
      %v866 = vadd.f32 %v844, %v859
      %v867 = vadd.f32 %v845, %v859
      %v868 = vadd.f32 %v846, %v859
      %v869 = vadd.f32 %v847, %v859
      %v870 = vadd.f32 %v848, %v859
      %v871 = vadd.f32 %v849, %v859
      %v872 = vadd.f32 %v850, %v859
      %v873 = vadd.f32 %v851, %v859
      %v874 = vadd.f32 %v852, %v859
      %v875 = vadd.f32 %v853, %v859
      %v876 = vadd.f32 %v854, %v859
      %v877 = vpack.c.bf16 %v862, %v861
      %v878 = vpack.c.bf16 %v864, %v863
      %v879 = vpack.c.bf16 %v866, %v865
      %v880 = vpack.c.bf16 %v868, %v867
      %v881 = vpack.c.bf16 %v870, %v869
      %v882 = vpack.c.bf16 %v872, %v871
      %v883 = vpack.c.bf16 %v874, %v873
      %v884 = vpack.c.bf16 %v876, %v875
      %v885 = vld [vmem:[%s5] sm:$0xf]
      %v886 = vld [vmem:[%s5 + $0x4] sm:$0xf]
      %v887 = vld [vmem:[%s5 + $0x8] sm:$0xf]
      %v888 = vld [vmem:[%s5 + $0xc] sm:$0xf]
      %v889 = vld [vmem:[%s5 + $0x10] sm:$0xf]
      %v890 = vld [vmem:[%s5 + $0x14] sm:$0xf]
      %v891 = vld [vmem:[%s5 + $0x18] sm:$0xf]
      %v892 = vld [vmem:[%s5 + $0x1c] sm:$0xf]
      %v893 = vld [vmem:[%s5 + $0x20] sm:$0xf]
      %v894 = vld [vmem:[%s5 + $0x24] sm:$0xf]
      %v895 = vld [vmem:[%s5 + $0x28] sm:$0xf]
      %v896 = vld [vmem:[%s5 + $0x2c] sm:$0xf]
      %v897 = vld [vmem:[%s5 + $0x30] sm:$0xf]
      %v898 = vld [vmem:[%s5 + $0x34] sm:$0xf]
      %v899 = vld [vmem:[%s5 + $0x38] sm:$0xf]
      %v900 = vld [vmem:[%s5 + $0x3c] sm:$0xf]
      %v901 = vld [vmem:[%s6] sm:$0x1]
      %v903 = vlaneseq
      %v904 = vshrl.u32 %v903, 7
      %v905 = vsub.s32 0, %v904
      %v906 = vrot.slane %v901, %v905
      %v924 = vunpack.c.l.b16 %v885
      %v925 = vunpack.c.l.b16 %v886
      %v926 = vunpack.c.l.b16 %v887
      %v927 = vunpack.c.l.b16 %v888
      %v928 = vunpack.c.l.b16 %v889
      %v929 = vunpack.c.l.b16 %v890
      %v930 = vunpack.c.l.b16 %v891
      %v931 = vunpack.c.l.b16 %v892
      %v932 = vunpack.c.l.b16 %v893
      %v933 = vunpack.c.l.b16 %v894
      %v934 = vunpack.c.l.b16 %v895
      %v935 = vunpack.c.l.b16 %v896
      %v936 = vunpack.c.l.b16 %v897
      %v937 = vunpack.c.l.b16 %v898
      %v938 = vunpack.c.l.b16 %v899
      %v939 = vunpack.c.l.b16 %v900
      %v940 = vpack.c.b16 %v925, %v924
      %v941 = vpack.c.b16 %v927, %v926
      %v942 = vpack.c.b16 %v929, %v928
      %v943 = vpack.c.b16 %v931, %v930
      %v944 = vpack.c.b16 %v933, %v932
      %v945 = vpack.c.b16 %v935, %v934
      %v946 = vpack.c.b16 %v937, %v936
      %v947 = vpack.c.b16 %v939, %v938
      %956 = vmatprep.subr.bf16.mxu0 0
      %957 = vmatpush1.bf16.msra.mxu0 %v947
      %958 = vmatprep.subr.bf16.mxu0 0
      %959 = vmatpush1.bf16.msra.mxu0 %v946
      %960 = vmatprep.subr.bf16.mxu0 0
      %961 = vmatpush1.bf16.msra.mxu0 %v945
      %962 = vmatprep.subr.bf16.mxu0 0
      %963 = vmatpush1.bf16.msra.mxu0 %v944
      %964 = vmatprep.subr.bf16.mxu0 0
      %965 = vmatpush1.bf16.msra.mxu0 %v943
      %966 = vmatprep.subr.bf16.mxu0 0
      %967 = vmatpush1.bf16.msra.mxu0 %v942
      %968 = vmatprep.subr.bf16.mxu0 0
      %969 = vmatpush1.bf16.msra.mxu0 %v941
      %970 = vmatprep.subr.bf16.mxu0 0
      %971 = vmatpush1.bf16.msra.mxu0 %v940
      %972 = vmatprep.subr.bf16.mxu0 0
      %973 = vmatpush2.bf16.msra.mxu0 0
      %974 = vmatprep.subr.bf16.mxu0 0
      %975 = vmatpush2.bf16.msra.mxu0 0
      %976 = vmatprep.subr.bf16.mxu0 0
      %977 = vmatpush2.bf16.msra.mxu0 0
      %978 = vmatprep.subr.bf16.mxu0 0
      %979 = vmatpush2.bf16.msra.mxu0 0
      %980 = vmatprep.subr.bf16.mxu0 0
      %981 = vmatpush2.bf16.msra.mxu0 0
      %982 = vmatprep.subr.bf16.mxu0 0
      %983 = vmatpush2.bf16.msra.mxu0 0
      %984 = vmatprep.subr.bf16.mxu0 0
      %985 = vmatpush2.bf16.msra.mxu0 0
      %986 = vmatprep.subr.bf16.mxu0 0
      %987 = vmatpush2.bf16.msra.mxu0 0
      %988 = vmatprep.mubr.bf16.mxu0 0
      %989 = vmatmul.mubr.bf16.gmra.mxu0 %v877
      %v990 = vpop.f32.mrf.mxu0
      %v991 = vadd.f32 %v906, %v990
      %v992 = vpop.f32.mrf.mxu0
      %v993 = vpop.f32.mrf.mxu0
      %v994 = vadd.f32 %v906, %v993
      %v995 = vpop.f32.mrf.mxu0
      %996 = vmatprep.mubr.bf16.mxu0 0
      %997 = vmatmul.mubr.bf16.gmra.mxu0 %v878
      %v998 = vpop.f32.mrf.mxu0
      %v999 = vadd.f32 %v906, %v998
      %v1000 = vpop.f32.mrf.mxu0
      %v1001 = vpop.f32.mrf.mxu0
      %v1002 = vadd.f32 %v906, %v1001
      %v1003 = vpop.f32.mrf.mxu0
      %1004 = vmatprep.mubr.bf16.mxu0 0
      %1005 = vmatmul.mubr.bf16.gmra.mxu0 %v879
      %v1006 = vpop.f32.mrf.mxu0
      %v1007 = vadd.f32 %v906, %v1006
      %v1008 = vpop.f32.mrf.mxu0
      %v1009 = vpop.f32.mrf.mxu0
      %v1010 = vadd.f32 %v906, %v1009
      %v1011 = vpop.f32.mrf.mxu0
      %1012 = vmatprep.mubr.bf16.mxu0 0
      %1013 = vmatmul.mubr.bf16.gmra.mxu0 %v880
      %v1014 = vpop.f32.mrf.mxu0
      %v1015 = vadd.f32 %v906, %v1014
      %v1016 = vpop.f32.mrf.mxu0
      %v1017 = vpop.f32.mrf.mxu0
      %v1018 = vadd.f32 %v906, %v1017
      %v1019 = vpop.f32.mrf.mxu0
      %1020 = vmatprep.mubr.bf16.mxu0 0
      %1021 = vmatmul.mubr.bf16.gmra.mxu0 %v881
      %v1022 = vpop.f32.mrf.mxu0
      %v1023 = vadd.f32 %v906, %v1022
      %v1024 = vpop.f32.mrf.mxu0
      %v1025 = vpop.f32.mrf.mxu0
      %v1026 = vadd.f32 %v906, %v1025
      %v1027 = vpop.f32.mrf.mxu0
      %1028 = vmatprep.mubr.bf16.mxu0 0
      %1029 = vmatmul.mubr.bf16.gmra.mxu0 %v882
      %v1030 = vpop.f32.mrf.mxu0
      %v1031 = vadd.f32 %v906, %v1030
      %v1032 = vpop.f32.mrf.mxu0
      %v1033 = vpop.f32.mrf.mxu0
      %v1034 = vadd.f32 %v906, %v1033
      %v1035 = vpop.f32.mrf.mxu0
      %1036 = vmatprep.mubr.bf16.mxu0 0
      %1037 = vmatmul.mubr.bf16.gmra.mxu0 %v883
      %v1038 = vpop.f32.mrf.mxu0
      %v1039 = vadd.f32 %v906, %v1038
      %v1040 = vpop.f32.mrf.mxu0
      %v1041 = vpop.f32.mrf.mxu0
      %v1042 = vadd.f32 %v906, %v1041
      %v1043 = vpop.f32.mrf.mxu0
      %1044 = vmatprep.mubr.bf16.mxu0 0
      %1045 = vmatmul.mubr.bf16.gmra.mxu0 %v884
      %v1046 = vpop.f32.mrf.mxu0
      %v1047 = vadd.f32 %v906, %v1046
      %v1048 = vpop.f32.mrf.mxu0
      %v1049 = vpop.f32.mrf.mxu0
      %v1050 = vadd.f32 %v906, %v1049
      %v1051 = vpop.f32.mrf.mxu0
      %1052 = vdwg.mxu0
      %v1053 = vld [vmem:[#allocation2] sm:$0xff]
      %v1054 = vld [vmem:[#allocation2 + $0x8] sm:$0xff]
      %v1055 = vld [vmem:[#allocation2 + $0x10] sm:$0xff]
      %v1056 = vld [vmem:[#allocation2 + $0x18] sm:$0xff]
      %v1057 = vld [vmem:[#allocation2 + $0x20] sm:$0xff]
      %v1058 = vld [vmem:[#allocation2 + $0x28] sm:$0xff]
      %v1059 = vld [vmem:[#allocation2 + $0x30] sm:$0xff]
      %v1060 = vld [vmem:[#allocation2 + $0x38] sm:$0xff]
      %v1061 = vld [vmem:[#allocation2 + $0x40] sm:$0xff]
      %v1062 = vld [vmem:[#allocation2 + $0x48] sm:$0xff]
      %v1063 = vld [vmem:[#allocation2 + $0x50] sm:$0xff]
      %v1064 = vld [vmem:[#allocation2 + $0x58] sm:$0xff]
      %v1065 = vld [vmem:[#allocation2 + $0x60] sm:$0xff]
      %v1066 = vld [vmem:[#allocation2 + $0x68] sm:$0xff]
      %v1067 = vld [vmem:[#allocation2 + $0x70] sm:$0xff]
      %v1068 = vld [vmem:[#allocation2 + $0x78] sm:$0xff]
      %v1069 = vld [vmem:[%s548] sm:$0xf]
      %v1070 = vld [vmem:[%s548 + $0x4] sm:$0xf]
      %v1071 = vld [vmem:[%s548 + $0x8] sm:$0xf]
      %v1072 = vld [vmem:[%s548 + $0xc] sm:$0xf]
      %v1073 = vld [vmem:[%s548 + $0x10] sm:$0xf]
      %v1074 = vld [vmem:[%s548 + $0x14] sm:$0xf]
      %v1075 = vld [vmem:[%s548 + $0x18] sm:$0xf]
      %v1076 = vld [vmem:[%s548 + $0x1c] sm:$0xf]
      %v1077 = vld [vmem:[%s548 + $0x20] sm:$0xf]
      %v1078 = vld [vmem:[%s548 + $0x24] sm:$0xf]
      %v1079 = vld [vmem:[%s548 + $0x28] sm:$0xf]
      %v1080 = vld [vmem:[%s548 + $0x2c] sm:$0xf]
      %v1081 = vld [vmem:[%s548 + $0x30] sm:$0xf]
      %v1082 = vld [vmem:[%s548 + $0x34] sm:$0xf]
      %v1083 = vld [vmem:[%s548 + $0x38] sm:$0xf]
      %v1084 = vld [vmem:[%s548 + $0x3c] sm:$0xf]
      %v1085 = vpack.c.bf16 %v994, %v991
      %v1086 = vpack.c.bf16 %v1002, %v999
      %v1087 = vpack.c.bf16 %v1010, %v1007
      %v1088 = vpack.c.bf16 %v1018, %v1015
      %v1089 = vpack.c.bf16 %v1026, %v1023
      %v1090 = vpack.c.bf16 %v1034, %v1031
      %v1091 = vpack.c.bf16 %v1042, %v1039
      %v1092 = vpack.c.bf16 %v1050, %v1047
      %v1109 = vunpack.c.l.b16 %v1069
      %v1110 = vunpack.c.l.b16 %v1070
      %v1111 = vunpack.c.l.b16 %v1071
      %v1112 = vunpack.c.l.b16 %v1072
      %v1113 = vunpack.c.l.b16 %v1073
      %v1114 = vunpack.c.l.b16 %v1074
      %v1115 = vunpack.c.l.b16 %v1075
      %v1116 = vunpack.c.l.b16 %v1076
      %v1117 = vunpack.c.l.b16 %v1077
      %v1118 = vunpack.c.l.b16 %v1078
      %v1119 = vunpack.c.l.b16 %v1079
      %v1120 = vunpack.c.l.b16 %v1080
      %v1121 = vunpack.c.l.b16 %v1081
      %v1122 = vunpack.c.l.b16 %v1082
      %v1123 = vunpack.c.l.b16 %v1083
      %v1124 = vunpack.c.l.b16 %v1084
      %v1125 = vpack.c.b16 %v1110, %v1109
      %v1126 = vpack.c.b16 %v1112, %v1111
      %v1127 = vpack.c.b16 %v1114, %v1113
      %v1128 = vpack.c.b16 %v1116, %v1115
      %v1129 = vpack.c.b16 %v1118, %v1117
      %v1130 = vpack.c.b16 %v1120, %v1119
      %v1131 = vpack.c.b16 %v1122, %v1121
      %v1132 = vpack.c.b16 %v1124, %v1123
      %1141 = vmatprep.subr.bf16.mxu0 0
      %1142 = vmatpush1.bf16.msra.mxu0 %v1092
      %1143 = vmatprep.subr.bf16.mxu0 0
      %1144 = vmatpush1.bf16.msra.mxu0 %v1091
      %1145 = vmatprep.subr.bf16.mxu0 0
      %1146 = vmatpush1.bf16.msra.mxu0 %v1090
      %1147 = vmatprep.subr.bf16.mxu0 0
      %1148 = vmatpush1.bf16.msra.mxu0 %v1089
      %1149 = vmatprep.subr.bf16.mxu0 0
      %1150 = vmatpush1.bf16.msra.mxu0 %v1088
      %1151 = vmatprep.subr.bf16.mxu0 0
      %1152 = vmatpush1.bf16.msra.mxu0 %v1087
      %1153 = vmatprep.subr.bf16.mxu0 0
      %1154 = vmatpush1.bf16.msra.mxu0 %v1086
      %1155 = vmatprep.subr.bf16.mxu0 0
      %1156 = vmatpush1.bf16.msra.mxu0 %v1085
      %1157 = vmatprep.subr.bf16.mxu0 0
      %1158 = vmatpush2.bf16.msra.mxu0 0
      %1159 = vmatprep.subr.bf16.mxu0 0
      %1160 = vmatpush2.bf16.msra.mxu0 0
      %1161 = vmatprep.subr.bf16.mxu0 0
      %1162 = vmatpush2.bf16.msra.mxu0 0
      %1163 = vmatprep.subr.bf16.mxu0 0
      %1164 = vmatpush2.bf16.msra.mxu0 0
      %1165 = vmatprep.subr.bf16.mxu0 0
      %1166 = vmatpush2.bf16.msra.mxu0 0
      %1167 = vmatprep.subr.bf16.mxu0 0
      %1168 = vmatpush2.bf16.msra.mxu0 0
      %1169 = vmatprep.subr.bf16.mxu0 0
      %1170 = vmatpush2.bf16.msra.mxu0 0
      %1171 = vmatprep.subr.bf16.mxu0 0
      %1172 = vmatpush2.bf16.msra.mxu0 0
      %1173 = vmatprep.mubr.bf16.mxu0 0
      %1174 = vmatmul.mubr.bf16.gmra.mxu0 %v1125
      %v1175 = vpop.f32.mrf.mxu0
      %v1176 = vadd.f32 0.0, %v1175
      %v1177 = vpop.f32.mrf.mxu0
      %v1178 = vpop.f32.mrf.mxu0
      %v1179 = vadd.f32 0.0, %v1178
      %v1180 = vpop.f32.mrf.mxu0
      %1181 = vmatprep.mubr.bf16.mxu0 0
      %1182 = vmatmul.mubr.bf16.gmra.mxu0 %v1126
      %v1183 = vpop.f32.mrf.mxu0
      %v1184 = vadd.f32 0.0, %v1183
      %v1185 = vpop.f32.mrf.mxu0
      %v1186 = vpop.f32.mrf.mxu0
      %v1187 = vadd.f32 0.0, %v1186
      %v1188 = vpop.f32.mrf.mxu0
      %1189 = vmatprep.mubr.bf16.mxu0 0
      %1190 = vmatmul.mubr.bf16.gmra.mxu0 %v1127
      %v1191 = vpop.f32.mrf.mxu0
      %v1192 = vadd.f32 0.0, %v1191
      %v1193 = vpop.f32.mrf.mxu0
      %v1194 = vpop.f32.mrf.mxu0
      %v1195 = vadd.f32 0.0, %v1194
      %v1196 = vpop.f32.mrf.mxu0
      %1197 = vmatprep.mubr.bf16.mxu0 0
      %1198 = vmatmul.mubr.bf16.gmra.mxu0 %v1128
      %v1199 = vpop.f32.mrf.mxu0
      %v1200 = vadd.f32 0.0, %v1199
      %v1201 = vpop.f32.mrf.mxu0
      %v1202 = vpop.f32.mrf.mxu0
      %v1203 = vadd.f32 0.0, %v1202
      %v1204 = vpop.f32.mrf.mxu0
      %1205 = vmatprep.mubr.bf16.mxu0 0
      %1206 = vmatmul.mubr.bf16.gmra.mxu0 %v1129
      %v1207 = vpop.f32.mrf.mxu0
      %v1208 = vadd.f32 0.0, %v1207
      %v1209 = vpop.f32.mrf.mxu0
      %v1210 = vpop.f32.mrf.mxu0
      %v1211 = vadd.f32 0.0, %v1210
      %v1212 = vpop.f32.mrf.mxu0
      %1213 = vmatprep.mubr.bf16.mxu0 0
      %1214 = vmatmul.mubr.bf16.gmra.mxu0 %v1130
      %v1215 = vpop.f32.mrf.mxu0
      %v1216 = vadd.f32 0.0, %v1215
      %v1217 = vpop.f32.mrf.mxu0
      %v1218 = vpop.f32.mrf.mxu0
      %v1219 = vadd.f32 0.0, %v1218
      %v1220 = vpop.f32.mrf.mxu0
      %1221 = vmatprep.mubr.bf16.mxu0 0
      %1222 = vmatmul.mubr.bf16.gmra.mxu0 %v1131
      %v1223 = vpop.f32.mrf.mxu0
      %v1224 = vadd.f32 0.0, %v1223
      %v1225 = vpop.f32.mrf.mxu0
      %v1226 = vpop.f32.mrf.mxu0
      %v1227 = vadd.f32 0.0, %v1226
      %v1228 = vpop.f32.mrf.mxu0
      %1229 = vmatprep.mubr.bf16.mxu0 0
      %1230 = vmatmul.mubr.bf16.gmra.mxu0 %v1132
      %v1231 = vpop.f32.mrf.mxu0
      %v1232 = vadd.f32 0.0, %v1231
      %v1233 = vpop.f32.mrf.mxu0
      %v1234 = vpop.f32.mrf.mxu0
      %v1235 = vadd.f32 0.0, %v1234
      %v1236 = vpop.f32.mrf.mxu0
      %1237 = vdwg.mxu0
      %v1238 = vadd.f32 %v1053, %v1176
      %v1239 = vadd.f32 %v1054, %v1179
      %v1240 = vadd.f32 %v1055, %v1184
      %v1241 = vadd.f32 %v1056, %v1187
      %v1242 = vadd.f32 %v1057, %v1192
      %v1243 = vadd.f32 %v1058, %v1195
      %v1244 = vadd.f32 %v1059, %v1200
      %v1245 = vadd.f32 %v1060, %v1203
      %v1246 = vadd.f32 %v1061, %v1208
      %v1247 = vadd.f32 %v1062, %v1211
      %v1248 = vadd.f32 %v1063, %v1216
      %v1249 = vadd.f32 %v1064, %v1219
      %v1250 = vadd.f32 %v1065, %v1224
      %v1251 = vadd.f32 %v1066, %v1227
      %v1252 = vadd.f32 %v1067, %v1232
      %v1253 = vadd.f32 %v1068, %v1235
      %1254 = vst [vmem:[#allocation2] sm:$0xff] %v1238
      %1255 = vst [vmem:[#allocation2 + $0x8] sm:$0xff] %v1239
      %1256 = vst [vmem:[#allocation2 + $0x10] sm:$0xff] %v1240
      %1257 = vst [vmem:[#allocation2 + $0x18] sm:$0xff] %v1241
      %1258 = vst [vmem:[#allocation2 + $0x20] sm:$0xff] %v1242
      %1259 = vst [vmem:[#allocation2 + $0x28] sm:$0xff] %v1243
      %1260 = vst [vmem:[#allocation2 + $0x30] sm:$0xff] %v1244
      %1261 = vst [vmem:[#allocation2 + $0x38] sm:$0xff] %v1245
      %1262 = vst [vmem:[#allocation2 + $0x40] sm:$0xff] %v1246
      %1263 = vst [vmem:[#allocation2 + $0x48] sm:$0xff] %v1247
      %1264 = vst [vmem:[#allocation2 + $0x50] sm:$0xff] %v1248
      %1265 = vst [vmem:[#allocation2 + $0x58] sm:$0xff] %v1249
      %1266 = vst [vmem:[#allocation2 + $0x60] sm:$0xff] %v1250
      %1267 = vst [vmem:[#allocation2 + $0x68] sm:$0xff] %v1251
      %1268 = vst [vmem:[#allocation2 + $0x70] sm:$0xff] %v1252
      %1269 = vst [vmem:[#allocation2 + $0x78] sm:$0xff] %v1253
      // Predicated region
      $region77: #{hgcb_forward.2} parent=71 // pred_check
        %p1270 = pneg %p571
      $region78: #{hgcb_forward.2} parent=71 // pred_check_branch
        %1272 = sbr.rel (%p1270) target = $region80
      $region79: #{hgcb_forward.2} parent=71 // pred_region
        %v1273 = vld [vmem:[#allocation2] sm:$0xff]
        %v1274 = vld [vmem:[#allocation2 + $0x8] sm:$0xff]
        %v1275 = vld [vmem:[#allocation2 + $0x10] sm:$0xff]
        %v1276 = vld [vmem:[#allocation2 + $0x18] sm:$0xff]
        %v1277 = vld [vmem:[#allocation2 + $0x20] sm:$0xff]
        %v1278 = vld [vmem:[#allocation2 + $0x28] sm:$0xff]
        %v1279 = vld [vmem:[#allocation2 + $0x30] sm:$0xff]
        %v1280 = vld [vmem:[#allocation2 + $0x38] sm:$0xff]
        %v1281 = vld [vmem:[#allocation2 + $0x40] sm:$0xff]
        %v1282 = vld [vmem:[#allocation2 + $0x48] sm:$0xff]
        %v1283 = vld [vmem:[#allocation2 + $0x50] sm:$0xff]
        %v1284 = vld [vmem:[#allocation2 + $0x58] sm:$0xff]
        %v1285 = vld [vmem:[#allocation2 + $0x60] sm:$0xff]
        %v1286 = vld [vmem:[#allocation2 + $0x68] sm:$0xff]
        %v1287 = vld [vmem:[#allocation2 + $0x70] sm:$0xff]
        %v1288 = vld [vmem:[#allocation2 + $0x78] sm:$0xff]
        %v1289 = vld [vmem:[%s558] sm:$0xff]
        %v1290 = vld [vmem:[%s558 + $0x8] sm:$0xff]
        %v1291 = vld [vmem:[%s558 + $0x10] sm:$0xff]
        %v1292 = vld [vmem:[%s558 + $0x18] sm:$0xff]
        %v1293 = vld [vmem:[%s558 + $0x20] sm:$0xff]
        %v1294 = vld [vmem:[%s558 + $0x28] sm:$0xff]
        %v1295 = vld [vmem:[%s558 + $0x30] sm:$0xff]
        %v1296 = vld [vmem:[%s558 + $0x38] sm:$0xff]
        %v1297 = vld [vmem:[%s558 + $0x40] sm:$0xff]
        %v1298 = vld [vmem:[%s558 + $0x48] sm:$0xff]
        %v1299 = vld [vmem:[%s558 + $0x50] sm:$0xff]
        %v1300 = vld [vmem:[%s558 + $0x58] sm:$0xff]
        %v1301 = vld [vmem:[%s558 + $0x60] sm:$0xff]
        %v1302 = vld [vmem:[%s558 + $0x68] sm:$0xff]
        %v1303 = vld [vmem:[%s558 + $0x70] sm:$0xff]
        %v1304 = vld [vmem:[%s558 + $0x78] sm:$0xff]
        %v1305 = vadd.f32 %v1273, %v1289
        %v1306 = vadd.f32 %v1274, %v1290
        %v1307 = vadd.f32 %v1275, %v1291
        %v1308 = vadd.f32 %v1276, %v1292
        %v1309 = vadd.f32 %v1277, %v1293
        %v1310 = vadd.f32 %v1278, %v1294
        %v1311 = vadd.f32 %v1279, %v1295
        %v1312 = vadd.f32 %v1280, %v1296
        %v1313 = vadd.f32 %v1281, %v1297
        %v1314 = vadd.f32 %v1282, %v1298
        %v1315 = vadd.f32 %v1283, %v1299
        %v1316 = vadd.f32 %v1284, %v1300
        %v1317 = vadd.f32 %v1285, %v1301
        %v1318 = vadd.f32 %v1286, %v1302
        %v1319 = vadd.f32 %v1287, %v1303
        %v1320 = vadd.f32 %v1288, %v1304
        %v1321 = vld [vmem:[%s7] sm:$0x1]
        %v1322 = vld [vmem:[%s8] sm:$0x1]
        %1323 = vadd.xlane.f32.xlu0 %v1305
        %v1324 = vpop.xlane.xlu0 %1323
        %1325 = vadd.xlane.f32.xlu0 %v1306
        %v1326 = vpop.xlane.xlu0 %1325
        %1327 = vadd.xlane.f32.xlu0 %v1307
        %v1328 = vpop.xlane.xlu0 %1327
        %1329 = vadd.xlane.f32.xlu0 %v1308
        %v1330 = vpop.xlane.xlu0 %1329
        %1331 = vadd.xlane.f32.xlu0 %v1309
        %v1332 = vpop.xlane.xlu0 %1331
        %1333 = vadd.xlane.f32.xlu0 %v1310
        %v1334 = vpop.xlane.xlu0 %1333
        %1335 = vadd.xlane.f32.xlu0 %v1311
        %v1336 = vpop.xlane.xlu0 %1335
        %1337 = vadd.xlane.f32.xlu0 %v1312
        %v1338 = vpop.xlane.xlu0 %1337
        %1339 = vadd.xlane.f32.xlu0 %v1313
        %v1340 = vpop.xlane.xlu0 %1339
        %1341 = vadd.xlane.f32.xlu0 %v1314
        %v1342 = vpop.xlane.xlu0 %1341
        %1343 = vadd.xlane.f32.xlu0 %v1315
        %v1344 = vpop.xlane.xlu0 %1343
        %1345 = vadd.xlane.f32.xlu0 %v1316
        %v1346 = vpop.xlane.xlu0 %1345
        %1347 = vadd.xlane.f32.xlu0 %v1317
        %v1348 = vpop.xlane.xlu0 %1347
        %1349 = vadd.xlane.f32.xlu0 %v1318
        %v1350 = vpop.xlane.xlu0 %1349
        %1351 = vadd.xlane.f32.xlu0 %v1319
        %v1352 = vpop.xlane.xlu0 %1351
        %1353 = vadd.xlane.f32.xlu0 %v1320
        %v1354 = vpop.xlane.xlu0 %1353
        %v1355 = vmul.f32 %v1305, %v1305
        %v1356 = vmul.f32 %v1306, %v1306
        %v1357 = vmul.f32 %v1307, %v1307
        %v1358 = vmul.f32 %v1308, %v1308
        %v1359 = vmul.f32 %v1309, %v1309
        %v1360 = vmul.f32 %v1310, %v1310
        %v1361 = vmul.f32 %v1311, %v1311
        %v1362 = vmul.f32 %v1312, %v1312
        %v1363 = vmul.f32 %v1313, %v1313
        %v1364 = vmul.f32 %v1314, %v1314
        %v1365 = vmul.f32 %v1315, %v1315
        %v1366 = vmul.f32 %v1316, %v1316
        %v1367 = vmul.f32 %v1317, %v1317
        %v1368 = vmul.f32 %v1318, %v1318
        %v1369 = vmul.f32 %v1319, %v1319
        %v1370 = vmul.f32 %v1320, %v1320
        %1371 = vadd.xlane.f32.xlu0 %v1355
        %v1372 = vpop.xlane.xlu0 %1371
        %1373 = vadd.xlane.f32.xlu0 %v1356
        %v1374 = vpop.xlane.xlu0 %1373
        %1375 = vadd.xlane.f32.xlu0 %v1357
        %v1376 = vpop.xlane.xlu0 %1375
        %1377 = vadd.xlane.f32.xlu0 %v1358
        %v1378 = vpop.xlane.xlu0 %1377
        %1379 = vadd.xlane.f32.xlu0 %v1359
        %v1380 = vpop.xlane.xlu0 %1379
        %1381 = vadd.xlane.f32.xlu0 %v1360
        %v1382 = vpop.xlane.xlu0 %1381
        %1383 = vadd.xlane.f32.xlu0 %v1361
        %v1384 = vpop.xlane.xlu0 %1383
        %1385 = vadd.xlane.f32.xlu0 %v1362
        %v1386 = vpop.xlane.xlu0 %1385
        %1387 = vadd.xlane.f32.xlu0 %v1363
        %v1388 = vpop.xlane.xlu0 %1387
        %1389 = vadd.xlane.f32.xlu0 %v1364
        %v1390 = vpop.xlane.xlu0 %1389
        %1391 = vadd.xlane.f32.xlu0 %v1365
        %v1392 = vpop.xlane.xlu0 %1391
        %1393 = vadd.xlane.f32.xlu0 %v1366
        %v1394 = vpop.xlane.xlu0 %1393
        %1395 = vadd.xlane.f32.xlu0 %v1367
        %v1396 = vpop.xlane.xlu0 %1395
        %1397 = vadd.xlane.f32.xlu0 %v1368
        %v1398 = vpop.xlane.xlu0 %1397
        %1399 = vadd.xlane.f32.xlu0 %v1369
        %v1400 = vpop.xlane.xlu0 %1399
        %1401 = vadd.xlane.f32.xlu0 %v1370
        %v1402 = vpop.xlane.xlu0 %1401
        %v1403 = vmul.f32 %v1324, 0.0078125
        %v1404 = vmul.f32 %v1326, 0.0078125
        %v1405 = vmul.f32 %v1328, 0.0078125
        %v1406 = vmul.f32 %v1330, 0.0078125
        %v1407 = vmul.f32 %v1332, 0.0078125
        %v1408 = vmul.f32 %v1334, 0.0078125
        %v1409 = vmul.f32 %v1336, 0.0078125
        %v1410 = vmul.f32 %v1338, 0.0078125
        %v1411 = vmul.f32 %v1340, 0.0078125
        %v1412 = vmul.f32 %v1342, 0.0078125
        %v1413 = vmul.f32 %v1344, 0.0078125
        %v1414 = vmul.f32 %v1346, 0.0078125
        %v1415 = vmul.f32 %v1348, 0.0078125
        %v1416 = vmul.f32 %v1350, 0.0078125
        %v1417 = vmul.f32 %v1352, 0.0078125
        %v1418 = vmul.f32 %v1354, 0.0078125
        %v1419 = vmul.f32 %v1372, 0.0078125
        %v1420 = vmul.f32 %v1374, 0.0078125
        %v1421 = vmul.f32 %v1376, 0.0078125
        %v1422 = vmul.f32 %v1378, 0.0078125
        %v1423 = vmul.f32 %v1380, 0.0078125
        %v1424 = vmul.f32 %v1382, 0.0078125
        %v1425 = vmul.f32 %v1384, 0.0078125
        %v1426 = vmul.f32 %v1386, 0.0078125
        %v1427 = vmul.f32 %v1388, 0.0078125
        %v1428 = vmul.f32 %v1390, 0.0078125
        %v1429 = vmul.f32 %v1392, 0.0078125
        %v1430 = vmul.f32 %v1394, 0.0078125
        %v1431 = vmul.f32 %v1396, 0.0078125
        %v1432 = vmul.f32 %v1398, 0.0078125
        %v1433 = vmul.f32 %v1400, 0.0078125
        %v1434 = vmul.f32 %v1402, 0.0078125
        %v1435 = vmul.f32 %v1403, %v1403
        %v1436 = vmul.f32 %v1404, %v1404
        %v1437 = vmul.f32 %v1405, %v1405
        %v1438 = vmul.f32 %v1406, %v1406
        %v1439 = vmul.f32 %v1407, %v1407
        %v1440 = vmul.f32 %v1408, %v1408
        %v1441 = vmul.f32 %v1409, %v1409
        %v1442 = vmul.f32 %v1410, %v1410
        %v1443 = vmul.f32 %v1411, %v1411
        %v1444 = vmul.f32 %v1412, %v1412
        %v1445 = vmul.f32 %v1413, %v1413
        %v1446 = vmul.f32 %v1414, %v1414
        %v1447 = vmul.f32 %v1415, %v1415
        %v1448 = vmul.f32 %v1416, %v1416
        %v1449 = vmul.f32 %v1417, %v1417
        %v1450 = vmul.f32 %v1418, %v1418
        %v1451 = vsub.f32 %v1419, %v1435
        %v1452 = vsub.f32 %v1420, %v1436
        %v1453 = vsub.f32 %v1421, %v1437
        %v1454 = vsub.f32 %v1422, %v1438
        %v1455 = vsub.f32 %v1423, %v1439
        %v1456 = vsub.f32 %v1424, %v1440
        %v1457 = vsub.f32 %v1425, %v1441
        %v1458 = vsub.f32 %v1426, %v1442
        %v1459 = vsub.f32 %v1427, %v1443
        %v1460 = vsub.f32 %v1428, %v1444
        %v1461 = vsub.f32 %v1429, %v1445
        %v1462 = vsub.f32 %v1430, %v1446
        %v1463 = vsub.f32 %v1431, %v1447
        %v1464 = vsub.f32 %v1432, %v1448
        %v1465 = vsub.f32 %v1433, %v1449
        %v1466 = vsub.f32 %v1434, %v1450
        %v1467 = vmax.f32 %v1451, 0.0
        %v1468 = vmax.f32 %v1452, 0.0
        %v1469 = vmax.f32 %v1453, 0.0
        %v1470 = vmax.f32 %v1454, 0.0
        %v1471 = vmax.f32 %v1455, 0.0
        %v1472 = vmax.f32 %v1456, 0.0
        %v1473 = vmax.f32 %v1457, 0.0
        %v1474 = vmax.f32 %v1458, 0.0
        %v1475 = vmax.f32 %v1459, 0.0
        %v1476 = vmax.f32 %v1460, 0.0
        %v1477 = vmax.f32 %v1461, 0.0
        %v1478 = vmax.f32 %v1462, 0.0
        %v1479 = vmax.f32 %v1463, 0.0
        %v1480 = vmax.f32 %v1464, 0.0
        %v1481 = vmax.f32 %v1465, 0.0
        %v1482 = vmax.f32 %v1466, 0.0
        %v1483 = vsub.f32 %v1305, %v1403
        %v1484 = vsub.f32 %v1306, %v1404
        %v1485 = vsub.f32 %v1307, %v1405
        %v1486 = vsub.f32 %v1308, %v1406
        %v1487 = vsub.f32 %v1309, %v1407
        %v1488 = vsub.f32 %v1310, %v1408
        %v1489 = vsub.f32 %v1311, %v1409
        %v1490 = vsub.f32 %v1312, %v1410
        %v1491 = vsub.f32 %v1313, %v1411
        %v1492 = vsub.f32 %v1314, %v1412
        %v1493 = vsub.f32 %v1315, %v1413
        %v1494 = vsub.f32 %v1316, %v1414
        %v1495 = vsub.f32 %v1317, %v1415
        %v1496 = vsub.f32 %v1318, %v1416
        %v1497 = vsub.f32 %v1319, %v1417
        %v1498 = vsub.f32 %v1320, %v1418
        %v1499 = vadd.f32 %v1467, 1e-05
        %v1500 = vadd.f32 %v1468, 1e-05
        %v1501 = vadd.f32 %v1469, 1e-05
        %v1502 = vadd.f32 %v1470, 1e-05
        %v1503 = vadd.f32 %v1471, 1e-05
        %v1504 = vadd.f32 %v1472, 1e-05
        %v1505 = vadd.f32 %v1473, 1e-05
        %v1506 = vadd.f32 %v1474, 1e-05
        %v1507 = vadd.f32 %v1475, 1e-05
        %v1508 = vadd.f32 %v1476, 1e-05
        %v1509 = vadd.f32 %v1477, 1e-05
        %v1510 = vadd.f32 %v1478, 1e-05
        %v1511 = vadd.f32 %v1479, 1e-05
        %v1512 = vadd.f32 %v1480, 1e-05
        %v1513 = vadd.f32 %v1481, 1e-05
        %v1514 = vadd.f32 %v1482, 1e-05
        %v1515 = vrsqrt.pop %v1499
        %v1516 = vrsqrt.pop %v1500
        %v1517 = vrsqrt.pop %v1501
        %v1518 = vrsqrt.pop %v1502
        %v1519 = vrsqrt.pop %v1503
        %v1520 = vrsqrt.pop %v1504
        %v1521 = vrsqrt.pop %v1505
        %v1522 = vrsqrt.pop %v1506
        %v1523 = vrsqrt.pop %v1507
        %v1524 = vrsqrt.pop %v1508
        %v1525 = vrsqrt.pop %v1509
        %v1526 = vrsqrt.pop %v1510
        %v1527 = vrsqrt.pop %v1511
        %v1528 = vrsqrt.pop %v1512
        %v1529 = vrsqrt.pop %v1513
        %v1530 = vrsqrt.pop %v1514
        %v1531 = vmul.f32 %v1483, %v1515
        %v1532 = vmul.f32 %v1484, %v1516
        %v1533 = vmul.f32 %v1485, %v1517
        %v1534 = vmul.f32 %v1486, %v1518
        %v1535 = vmul.f32 %v1487, %v1519
        %v1536 = vmul.f32 %v1488, %v1520
        %v1537 = vmul.f32 %v1489, %v1521
        %v1538 = vmul.f32 %v1490, %v1522
        %v1539 = vmul.f32 %v1491, %v1523
        %v1540 = vmul.f32 %v1492, %v1524
        %v1541 = vmul.f32 %v1493, %v1525
        %v1542 = vmul.f32 %v1494, %v1526
        %v1543 = vmul.f32 %v1495, %v1527
        %v1544 = vmul.f32 %v1496, %v1528
        %v1545 = vmul.f32 %v1497, %v1529
        %v1546 = vmul.f32 %v1498, %v1530
        %v1548 = vlaneseq
        %v1549 = vshrl.u32 %v1548, 7
        %v1550 = vsub.s32 0, %v1549
        %v1551 = vrot.slane %v1321, %v1550
        %v1553 = vmul.f32 %v1531, %v1551
        %v1554 = vmul.f32 %v1532, %v1551
        %v1555 = vmul.f32 %v1533, %v1551
        %v1556 = vmul.f32 %v1534, %v1551
        %v1557 = vmul.f32 %v1535, %v1551
        %v1558 = vmul.f32 %v1536, %v1551
        %v1559 = vmul.f32 %v1537, %v1551
        %v1560 = vmul.f32 %v1538, %v1551
        %v1561 = vmul.f32 %v1539, %v1551
        %v1562 = vmul.f32 %v1540, %v1551
        %v1563 = vmul.f32 %v1541, %v1551
        %v1564 = vmul.f32 %v1542, %v1551
        %v1565 = vmul.f32 %v1543, %v1551
        %v1566 = vmul.f32 %v1544, %v1551
        %v1567 = vmul.f32 %v1545, %v1551
        %v1568 = vmul.f32 %v1546, %v1551
        %v1570 = vlaneseq
        %v1571 = vshrl.u32 %v1570, 7
        %v1572 = vsub.s32 0, %v1571
        %v1573 = vrot.slane %v1322, %v1572
        %v1575 = vadd.f32 %v1553, %v1573
        %v1576 = vadd.f32 %v1554, %v1573
        %v1577 = vadd.f32 %v1555, %v1573
        %v1578 = vadd.f32 %v1556, %v1573
        %v1579 = vadd.f32 %v1557, %v1573
        %v1580 = vadd.f32 %v1558, %v1573
        %v1581 = vadd.f32 %v1559, %v1573
        %v1582 = vadd.f32 %v1560, %v1573
        %v1583 = vadd.f32 %v1561, %v1573
        %v1584 = vadd.f32 %v1562, %v1573
        %v1585 = vadd.f32 %v1563, %v1573
        %v1586 = vadd.f32 %v1564, %v1573
        %v1587 = vadd.f32 %v1565, %v1573
        %v1588 = vadd.f32 %v1566, %v1573
        %v1589 = vadd.f32 %v1567, %v1573
        %v1590 = vadd.f32 %v1568, %v1573
        %v1591 = vpack.c.bf16 %v1576, %v1575
        %v1592 = vpack.c.bf16 %v1578, %v1577
        %v1593 = vpack.c.bf16 %v1580, %v1579
        %v1594 = vpack.c.bf16 %v1582, %v1581
        %v1595 = vpack.c.bf16 %v1584, %v1583
        %v1596 = vpack.c.bf16 %v1586, %v1585
        %v1597 = vpack.c.bf16 %v1588, %v1587
        %v1598 = vpack.c.bf16 %v1590, %v1589
        %v1599 = vld [vmem:[%s9] sm:$0xf]
        %v1600 = vld [vmem:[%s9 + $0x4] sm:$0xf]
        %v1601 = vld [vmem:[%s9 + $0x8] sm:$0xf]
        %v1602 = vld [vmem:[%s9 + $0xc] sm:$0xf]
        %v1603 = vld [vmem:[%s9 + $0x10] sm:$0xf]
        %v1604 = vld [vmem:[%s9 + $0x14] sm:$0xf]
        %v1605 = vld [vmem:[%s9 + $0x18] sm:$0xf]
        %v1606 = vld [vmem:[%s9 + $0x1c] sm:$0xf]
        %v1607 = vld [vmem:[%s9 + $0x20] sm:$0xf]
        %v1608 = vld [vmem:[%s9 + $0x24] sm:$0xf]
        %v1609 = vld [vmem:[%s9 + $0x28] sm:$0xf]
        %v1610 = vld [vmem:[%s9 + $0x2c] sm:$0xf]
        %v1611 = vld [vmem:[%s9 + $0x30] sm:$0xf]
        %v1612 = vld [vmem:[%s9 + $0x34] sm:$0xf]
        %v1613 = vld [vmem:[%s9 + $0x38] sm:$0xf]
        %v1614 = vld [vmem:[%s9 + $0x3c] sm:$0xf]
        %v1615 = vld [vmem:[%s10] sm:$0x1]
        %v1617 = vlaneseq
        %v1618 = vshrl.u32 %v1617, 7
        %v1619 = vsub.s32 0, %v1618
        %v1620 = vrot.slane %v1615, %v1619
        %v1638 = vunpack.c.l.b16 %v1599
        %v1639 = vunpack.c.l.b16 %v1600
        %v1640 = vunpack.c.l.b16 %v1601
        %v1641 = vunpack.c.l.b16 %v1602
        %v1642 = vunpack.c.l.b16 %v1603
        %v1643 = vunpack.c.l.b16 %v1604
        %v1644 = vunpack.c.l.b16 %v1605
        %v1645 = vunpack.c.l.b16 %v1606
        %v1646 = vunpack.c.l.b16 %v1607
        %v1647 = vunpack.c.l.b16 %v1608
        %v1648 = vunpack.c.l.b16 %v1609
        %v1649 = vunpack.c.l.b16 %v1610
        %v1650 = vunpack.c.l.b16 %v1611
        %v1651 = vunpack.c.l.b16 %v1612
        %v1652 = vunpack.c.l.b16 %v1613
        %v1653 = vunpack.c.l.b16 %v1614
        %v1654 = vpack.c.b16 %v1639, %v1638
        %v1655 = vpack.c.b16 %v1641, %v1640
        %v1656 = vpack.c.b16 %v1643, %v1642
        %v1657 = vpack.c.b16 %v1645, %v1644
        %v1658 = vpack.c.b16 %v1647, %v1646
        %v1659 = vpack.c.b16 %v1649, %v1648
        %v1660 = vpack.c.b16 %v1651, %v1650
        %v1661 = vpack.c.b16 %v1653, %v1652
        %1670 = vmatprep.subr.bf16.mxu0 0
        %1671 = vmatpush1.bf16.msra.mxu0 %v1661
        %1672 = vmatprep.subr.bf16.mxu0 0
        %1673 = vmatpush1.bf16.msra.mxu0 %v1660
        %1674 = vmatprep.subr.bf16.mxu0 0
        %1675 = vmatpush1.bf16.msra.mxu0 %v1659
        %1676 = vmatprep.subr.bf16.mxu0 0
        %1677 = vmatpush1.bf16.msra.mxu0 %v1658
        %1678 = vmatprep.subr.bf16.mxu0 0
        %1679 = vmatpush1.bf16.msra.mxu0 %v1657
        %1680 = vmatprep.subr.bf16.mxu0 0
        %1681 = vmatpush1.bf16.msra.mxu0 %v1656
        %1682 = vmatprep.subr.bf16.mxu0 0
        %1683 = vmatpush1.bf16.msra.mxu0 %v1655
        %1684 = vmatprep.subr.bf16.mxu0 0
        %1685 = vmatpush1.bf16.msra.mxu0 %v1654
        %1686 = vmatprep.subr.bf16.mxu0 0
        %1687 = vmatpush2.bf16.msra.mxu0 0
        %1688 = vmatprep.subr.bf16.mxu0 0
        %1689 = vmatpush2.bf16.msra.mxu0 0
        %1690 = vmatprep.subr.bf16.mxu0 0
        %1691 = vmatpush2.bf16.msra.mxu0 0
        %1692 = vmatprep.subr.bf16.mxu0 0
        %1693 = vmatpush2.bf16.msra.mxu0 0
        %1694 = vmatprep.subr.bf16.mxu0 0
        %1695 = vmatpush2.bf16.msra.mxu0 0
        %1696 = vmatprep.subr.bf16.mxu0 0
        %1697 = vmatpush2.bf16.msra.mxu0 0
        %1698 = vmatprep.subr.bf16.mxu0 0
        %1699 = vmatpush2.bf16.msra.mxu0 0
        %1700 = vmatprep.subr.bf16.mxu0 0
        %1701 = vmatpush2.bf16.msra.mxu0 0
        %1702 = vmatprep.mubr.bf16.mxu0 0
        %1703 = vmatmul.mubr.bf16.gmra.mxu0 %v1591
        %v1704 = vpop.f32.mrf.mxu0
        %v1705 = vadd.f32 %v1620, %v1704
        %v1706 = vpop.f32.mrf.mxu0
        %v1707 = vpop.f32.mrf.mxu0
        %v1708 = vadd.f32 %v1620, %v1707
        %v1709 = vpop.f32.mrf.mxu0
        %1710 = vmatprep.mubr.bf16.mxu0 0
        %1711 = vmatmul.mubr.bf16.gmra.mxu0 %v1592
        %v1712 = vpop.f32.mrf.mxu0
        %v1713 = vadd.f32 %v1620, %v1712
        %v1714 = vpop.f32.mrf.mxu0
        %v1715 = vpop.f32.mrf.mxu0
        %v1716 = vadd.f32 %v1620, %v1715
        %v1717 = vpop.f32.mrf.mxu0
        %1718 = vmatprep.mubr.bf16.mxu0 0
        %1719 = vmatmul.mubr.bf16.gmra.mxu0 %v1593
        %v1720 = vpop.f32.mrf.mxu0
        %v1721 = vadd.f32 %v1620, %v1720
        %v1722 = vpop.f32.mrf.mxu0
        %v1723 = vpop.f32.mrf.mxu0
        %v1724 = vadd.f32 %v1620, %v1723
        %v1725 = vpop.f32.mrf.mxu0
        %1726 = vmatprep.mubr.bf16.mxu0 0
        %1727 = vmatmul.mubr.bf16.gmra.mxu0 %v1594
        %v1728 = vpop.f32.mrf.mxu0
        %v1729 = vadd.f32 %v1620, %v1728
        %v1730 = vpop.f32.mrf.mxu0
        %v1731 = vpop.f32.mrf.mxu0
        %v1732 = vadd.f32 %v1620, %v1731
        %v1733 = vpop.f32.mrf.mxu0
        %1734 = vmatprep.mubr.bf16.mxu0 0
        %1735 = vmatmul.mubr.bf16.gmra.mxu0 %v1595
        %v1736 = vpop.f32.mrf.mxu0
        %v1737 = vadd.f32 %v1620, %v1736
        %v1738 = vpop.f32.mrf.mxu0
        %v1739 = vpop.f32.mrf.mxu0
        %v1740 = vadd.f32 %v1620, %v1739
        %v1741 = vpop.f32.mrf.mxu0
        %1742 = vmatprep.mubr.bf16.mxu0 0
        %1743 = vmatmul.mubr.bf16.gmra.mxu0 %v1596
        %v1744 = vpop.f32.mrf.mxu0
        %v1745 = vadd.f32 %v1620, %v1744
        %v1746 = vpop.f32.mrf.mxu0
        %v1747 = vpop.f32.mrf.mxu0
        %v1748 = vadd.f32 %v1620, %v1747
        %v1749 = vpop.f32.mrf.mxu0
        %1750 = vmatprep.mubr.bf16.mxu0 0
        %1751 = vmatmul.mubr.bf16.gmra.mxu0 %v1597
        %v1752 = vpop.f32.mrf.mxu0
        %v1753 = vadd.f32 %v1620, %v1752
        %v1754 = vpop.f32.mrf.mxu0
        %v1755 = vpop.f32.mrf.mxu0
        %v1756 = vadd.f32 %v1620, %v1755
        %v1757 = vpop.f32.mrf.mxu0
        %1758 = vmatprep.mubr.bf16.mxu0 0
        %1759 = vmatmul.mubr.bf16.gmra.mxu0 %v1598
        %v1760 = vpop.f32.mrf.mxu0
        %v1761 = vadd.f32 %v1620, %v1760
        %v1762 = vpop.f32.mrf.mxu0
        %v1763 = vpop.f32.mrf.mxu0
        %v1764 = vadd.f32 %v1620, %v1763
        %v1765 = vpop.f32.mrf.mxu0
        %1766 = vdwg.mxu0
        %v1767 = vmax.f32 %v1705, 0.0
        %v1768 = vmax.f32 %v1708, 0.0
        %v1769 = vmax.f32 %v1713, 0.0
        %v1770 = vmax.f32 %v1716, 0.0
        %v1771 = vmax.f32 %v1721, 0.0
        %v1772 = vmax.f32 %v1724, 0.0
        %v1773 = vmax.f32 %v1729, 0.0
        %v1774 = vmax.f32 %v1732, 0.0
        %v1775 = vmax.f32 %v1737, 0.0
        %v1776 = vmax.f32 %v1740, 0.0
        %v1777 = vmax.f32 %v1745, 0.0
        %v1778 = vmax.f32 %v1748, 0.0
        %v1779 = vmax.f32 %v1753, 0.0
        %v1780 = vmax.f32 %v1756, 0.0
        %v1781 = vmax.f32 %v1761, 0.0
        %v1782 = vmax.f32 %v1764, 0.0
        %v1783 = vpack.c.bf16 %v1768, %v1767
        %v1784 = vpack.c.bf16 %v1770, %v1769
        %v1785 = vpack.c.bf16 %v1772, %v1771
        %v1786 = vpack.c.bf16 %v1774, %v1773
        %v1787 = vpack.c.bf16 %v1776, %v1775
        %v1788 = vpack.c.bf16 %v1778, %v1777
        %v1789 = vpack.c.bf16 %v1780, %v1779
        %v1790 = vpack.c.bf16 %v1782, %v1781
        %v1791 = vld [vmem:[%s11] sm:$0xf]
        %v1792 = vld [vmem:[%s11 + $0x4] sm:$0xf]
        %v1793 = vld [vmem:[%s11 + $0x8] sm:$0xf]
        %v1794 = vld [vmem:[%s11 + $0xc] sm:$0xf]
        %v1795 = vld [vmem:[%s11 + $0x10] sm:$0xf]
        %v1796 = vld [vmem:[%s11 + $0x14] sm:$0xf]
        %v1797 = vld [vmem:[%s11 + $0x18] sm:$0xf]
        %v1798 = vld [vmem:[%s11 + $0x1c] sm:$0xf]
        %v1799 = vld [vmem:[%s11 + $0x20] sm:$0xf]
        %v1800 = vld [vmem:[%s11 + $0x24] sm:$0xf]
        %v1801 = vld [vmem:[%s11 + $0x28] sm:$0xf]
        %v1802 = vld [vmem:[%s11 + $0x2c] sm:$0xf]
        %v1803 = vld [vmem:[%s11 + $0x30] sm:$0xf]
        %v1804 = vld [vmem:[%s11 + $0x34] sm:$0xf]
        %v1805 = vld [vmem:[%s11 + $0x38] sm:$0xf]
        %v1806 = vld [vmem:[%s11 + $0x3c] sm:$0xf]
        %v1807 = vld [vmem:[%s12] sm:$0x1]
        %v1809 = vlaneseq
        %v1810 = vshrl.u32 %v1809, 7
        %v1811 = vsub.s32 0, %v1810
        %v1812 = vrot.slane %v1807, %v1811
        %v1830 = vunpack.c.l.b16 %v1791
        %v1831 = vunpack.c.l.b16 %v1792
        %v1832 = vunpack.c.l.b16 %v1793
        %v1833 = vunpack.c.l.b16 %v1794
        %v1834 = vunpack.c.l.b16 %v1795
        %v1835 = vunpack.c.l.b16 %v1796
        %v1836 = vunpack.c.l.b16 %v1797
        %v1837 = vunpack.c.l.b16 %v1798
        %v1838 = vunpack.c.l.b16 %v1799
        %v1839 = vunpack.c.l.b16 %v1800
        %v1840 = vunpack.c.l.b16 %v1801
        %v1841 = vunpack.c.l.b16 %v1802
        %v1842 = vunpack.c.l.b16 %v1803
        %v1843 = vunpack.c.l.b16 %v1804
        %v1844 = vunpack.c.l.b16 %v1805
        %v1845 = vunpack.c.l.b16 %v1806
        %v1846 = vpack.c.b16 %v1831, %v1830
        %v1847 = vpack.c.b16 %v1833, %v1832
        %v1848 = vpack.c.b16 %v1835, %v1834
        %v1849 = vpack.c.b16 %v1837, %v1836
        %v1850 = vpack.c.b16 %v1839, %v1838
        %v1851 = vpack.c.b16 %v1841, %v1840
        %v1852 = vpack.c.b16 %v1843, %v1842
        %v1853 = vpack.c.b16 %v1845, %v1844
        %1862 = vmatprep.subr.bf16.mxu0 0
        %1863 = vmatpush1.bf16.msra.mxu0 %v1853
        %1864 = vmatprep.subr.bf16.mxu0 0
        %1865 = vmatpush1.bf16.msra.mxu0 %v1852
        %1866 = vmatprep.subr.bf16.mxu0 0
        %1867 = vmatpush1.bf16.msra.mxu0 %v1851
        %1868 = vmatprep.subr.bf16.mxu0 0
        %1869 = vmatpush1.bf16.msra.mxu0 %v1850
        %1870 = vmatprep.subr.bf16.mxu0 0
        %1871 = vmatpush1.bf16.msra.mxu0 %v1849
        %1872 = vmatprep.subr.bf16.mxu0 0
        %1873 = vmatpush1.bf16.msra.mxu0 %v1848
        %1874 = vmatprep.subr.bf16.mxu0 0
        %1875 = vmatpush1.bf16.msra.mxu0 %v1847
        %1876 = vmatprep.subr.bf16.mxu0 0
        %1877 = vmatpush1.bf16.msra.mxu0 %v1846
        %1878 = vmatprep.subr.bf16.mxu0 0
        %1879 = vmatpush2.bf16.msra.mxu0 0
        %1880 = vmatprep.subr.bf16.mxu0 0
        %1881 = vmatpush2.bf16.msra.mxu0 0
        %1882 = vmatprep.subr.bf16.mxu0 0
        %1883 = vmatpush2.bf16.msra.mxu0 0
        %1884 = vmatprep.subr.bf16.mxu0 0
        %1885 = vmatpush2.bf16.msra.mxu0 0
        %1886 = vmatprep.subr.bf16.mxu0 0
        %1887 = vmatpush2.bf16.msra.mxu0 0
        %1888 = vmatprep.subr.bf16.mxu0 0
        %1889 = vmatpush2.bf16.msra.mxu0 0
        %1890 = vmatprep.subr.bf16.mxu0 0
        %1891 = vmatpush2.bf16.msra.mxu0 0
        %1892 = vmatprep.subr.bf16.mxu0 0
        %1893 = vmatpush2.bf16.msra.mxu0 0
        %1894 = vmatprep.mubr.bf16.mxu0 0
        %1895 = vmatmul.mubr.bf16.gmra.mxu0 %v1783
        %v1896 = vpop.f32.mrf.mxu0
        %v1897 = vadd.f32 %v1812, %v1896
        %v1898 = vpop.f32.mrf.mxu0
        %v1899 = vpop.f32.mrf.mxu0
        %v1900 = vadd.f32 %v1812, %v1899
        %v1901 = vpop.f32.mrf.mxu0
        %1902 = vmatprep.mubr.bf16.mxu0 0
        %1903 = vmatmul.mubr.bf16.gmra.mxu0 %v1784
        %v1904 = vpop.f32.mrf.mxu0
        %v1905 = vadd.f32 %v1812, %v1904
        %v1906 = vpop.f32.mrf.mxu0
        %v1907 = vpop.f32.mrf.mxu0
        %v1908 = vadd.f32 %v1812, %v1907
        %v1909 = vpop.f32.mrf.mxu0
        %1910 = vmatprep.mubr.bf16.mxu0 0
        %1911 = vmatmul.mubr.bf16.gmra.mxu0 %v1785
        %v1912 = vpop.f32.mrf.mxu0
        %v1913 = vadd.f32 %v1812, %v1912
        %v1914 = vpop.f32.mrf.mxu0
        %v1915 = vpop.f32.mrf.mxu0
        %v1916 = vadd.f32 %v1812, %v1915
        %v1917 = vpop.f32.mrf.mxu0
        %1918 = vmatprep.mubr.bf16.mxu0 0
        %1919 = vmatmul.mubr.bf16.gmra.mxu0 %v1786
        %v1920 = vpop.f32.mrf.mxu0
        %v1921 = vadd.f32 %v1812, %v1920
        %v1922 = vpop.f32.mrf.mxu0
        %v1923 = vpop.f32.mrf.mxu0
        %v1924 = vadd.f32 %v1812, %v1923
        %v1925 = vpop.f32.mrf.mxu0
        %1926 = vmatprep.mubr.bf16.mxu0 0
        %1927 = vmatmul.mubr.bf16.gmra.mxu0 %v1787
        %v1928 = vpop.f32.mrf.mxu0
        %v1929 = vadd.f32 %v1812, %v1928
        %v1930 = vpop.f32.mrf.mxu0
        %v1931 = vpop.f32.mrf.mxu0
        %v1932 = vadd.f32 %v1812, %v1931
        %v1933 = vpop.f32.mrf.mxu0
        %1934 = vmatprep.mubr.bf16.mxu0 0
        %1935 = vmatmul.mubr.bf16.gmra.mxu0 %v1788
        %v1936 = vpop.f32.mrf.mxu0
        %v1937 = vadd.f32 %v1812, %v1936
        %v1938 = vpop.f32.mrf.mxu0
        %v1939 = vpop.f32.mrf.mxu0
        %v1940 = vadd.f32 %v1812, %v1939
        %v1941 = vpop.f32.mrf.mxu0
        %1942 = vmatprep.mubr.bf16.mxu0 0
        %1943 = vmatmul.mubr.bf16.gmra.mxu0 %v1789
        %v1944 = vpop.f32.mrf.mxu0
        %v1945 = vadd.f32 %v1812, %v1944
        %v1946 = vpop.f32.mrf.mxu0
        %v1947 = vpop.f32.mrf.mxu0
        %v1948 = vadd.f32 %v1812, %v1947
        %v1949 = vpop.f32.mrf.mxu0
        %1950 = vmatprep.mubr.bf16.mxu0 0
        %1951 = vmatmul.mubr.bf16.gmra.mxu0 %v1790
        %v1952 = vpop.f32.mrf.mxu0
        %v1953 = vadd.f32 %v1812, %v1952
        %v1954 = vpop.f32.mrf.mxu0
        %v1955 = vpop.f32.mrf.mxu0
        %v1956 = vadd.f32 %v1812, %v1955
        %v1957 = vpop.f32.mrf.mxu0
        %1958 = vdwg.mxu0
        %v1959 = vadd.f32 %v1897, %v1305
        %v1960 = vadd.f32 %v1900, %v1306
        %v1961 = vadd.f32 %v1905, %v1307
        %v1962 = vadd.f32 %v1908, %v1308
        %v1963 = vadd.f32 %v1913, %v1309
        %v1964 = vadd.f32 %v1916, %v1310
        %v1965 = vadd.f32 %v1921, %v1311
        %v1966 = vadd.f32 %v1924, %v1312
        %v1967 = vadd.f32 %v1929, %v1313
        %v1968 = vadd.f32 %v1932, %v1314
        %v1969 = vadd.f32 %v1937, %v1315
        %v1970 = vadd.f32 %v1940, %v1316
        %v1971 = vadd.f32 %v1945, %v1317
        %v1972 = vadd.f32 %v1948, %v1318
        %v1973 = vadd.f32 %v1953, %v1319
        %v1974 = vadd.f32 %v1956, %v1320
        %1975 = vst [vmem:[%s568] sm:$0xff] %v1959
        %1976 = vst [vmem:[%s568 + $0x8] sm:$0xff] %v1960
        %1977 = vst [vmem:[%s568 + $0x10] sm:$0xff] %v1961
        %1978 = vst [vmem:[%s568 + $0x18] sm:$0xff] %v1962
        %1979 = vst [vmem:[%s568 + $0x20] sm:$0xff] %v1963
        %1980 = vst [vmem:[%s568 + $0x28] sm:$0xff] %v1964
        %1981 = vst [vmem:[%s568 + $0x30] sm:$0xff] %v1965
        %1982 = vst [vmem:[%s568 + $0x38] sm:$0xff] %v1966
        %1983 = vst [vmem:[%s568 + $0x40] sm:$0xff] %v1967
        %1984 = vst [vmem:[%s568 + $0x48] sm:$0xff] %v1968
        %1985 = vst [vmem:[%s568 + $0x50] sm:$0xff] %v1969
        %1986 = vst [vmem:[%s568 + $0x58] sm:$0xff] %v1970
        %1987 = vst [vmem:[%s568 + $0x60] sm:$0xff] %v1971
        %1988 = vst [vmem:[%s568 + $0x68] sm:$0xff] %v1972
        %1989 = vst [vmem:[%s568 + $0x70] sm:$0xff] %v1973
        %1990 = vst [vmem:[%s568 + $0x78] sm:$0xff] %v1974
      $region80: #{hgcb_forward.2} parent=71 // pred_fallthru
        _
      %s1991 = smul.u32 16, %s30
      %p1992 = scmp.lt.s32.totalorder %s29, 1
      %s1993 = scalar_select %p1992, %s29, 1
      %p1994 = scmp.lt.s32.totalorder %s1991, 15
      %s1995 = scalar_select %p1994, %s1991, 15
      %s1996 = smul.addr %s1993, 16
      %s1997 = sadd.s32 %s1995, %s1996
      %s1998 = smul.addr %s1997, 8
      %s1999 = scalar_lea.vmem %s13, %s1998
      // Predicated region
      $region81: #{hgcb_forward.2} parent=71 // pred_check
        %p2000 = pneg %p359
      $region82: #{hgcb_forward.2} parent=71 // pred_check_branch
        %2002 = sbr.rel (%p2000) target = $region84
      $region83: #{hgcb_forward.2} parent=71 // pred_region
        %s2003 = smul.u32 16, %s30
      $region84: #{hgcb_forward.2} parent=71 // pred_fallthru
        _
    $region72: #{hgcb_forward.2} parent=5 // pred_fallthru
      _
    %p2004 = scmp.le.s32.totalorder 2, %s19
    // Predicated region
    $region85: #{hgcb_forward.2} parent=5 // pred_check
      %p2005 = pneg %p2004
    $region86: #{hgcb_forward.2} parent=5 // pred_check_branch
      %2007 = sbr.rel (%p2005) target = $region88
    $region87: #{hgcb_forward.2} parent=5 // pred_region
      %s2008 = ssub.s32 %s19, 2
      // Predicated region
      $region89: #{hgcb_forward.2} parent=87 // pred_check
        %p2009 = pneg %p365
      $region90: #{hgcb_forward.2} parent=87 // pred_check_branch
        %2011 = sbr.rel (%p2009) target = $region92
      $region91: #{hgcb_forward.2} parent=87 // pred_region
        %s2012 = smul.u32 16, %s33
        %p2013 = scmp.lt.s32.totalorder %s32, 1
        %s2014 = scalar_select %p2013, %s32, 1
        %p2015 = scmp.lt.s32.totalorder %s2012, 15
        %s2016 = scalar_select %p2015, %s2012, 15
        %s2017 = smul.addr %s2014, 16
        %s2018 = sadd.s32 %s2016, %s2017
        %s2019 = smul.addr %s2018, 8
        %s2020 = scalar_lea.vmem %s13, %s2019
      $region92: #{hgcb_forward.2} parent=87 // pred_fallthru
        _
    $region88: #{hgcb_forward.2} parent=5 // pred_fallthru
      _
  $region6: #{hgcb_forward.2} parent=0 // loop_footer
    %s23 = sadd.s32 1, %s19
  $region7: #{hgcb_forward.2} parent=0 // loop_footer_branch
    %18 = sbr.rel target = $region3
  $region8: #{hgcb_forward.2} parent=0 // loop_exit
    _

// kernel: hgcb_forward.3
$region0: #{hgcb_forward.3}
  #allocation0 [shape = 'u32[]', space=smem, size = 0x4, offset = 0x4, fixed_abs, tag = 'smem constant byte address 0x4 - core index']
  #allocation1 [shape = 'u32[144,128]{1,0:T(1,128)}', space=vmem, size = 0x12000, scoped, tag = 'internal scratch']
  #allocation2 [shape = 'f32[128,128]{1,0:T(8,128)}', space=vmem, size = 0x10000, scoped, tag = 'scratch operand']
  %s0 = inlined_call_operand.vmem [shape: f32[2,128,128], index: 0, kind: input, shape index: {}, may-alias: {0,2}]
  %s1 = inlined_call_operand.vmem [shape: bf16[2,128,128], index: 1, kind: input, shape index: {}]
  %s2 = inlined_call_operand.vmem [shape: f32[2,128,128], index: 2, kind: input, shape index: {}, may-alias: {0,2}]
  %s3 = inlined_call_operand.vmem [shape: f32[1,128], index: 3, kind: input, shape index: {}]
  %s4 = inlined_call_operand.vmem [shape: f32[1,128], index: 4, kind: input, shape index: {}]
  %s5 = inlined_call_operand.vmem [shape: bf16[128,128], index: 5, kind: input, shape index: {}]
  %s6 = inlined_call_operand.vmem [shape: f32[1,128], index: 6, kind: input, shape index: {}]
  %s7 = inlined_call_operand.vmem [shape: f32[1,128], index: 7, kind: input, shape index: {}]
  %s8 = inlined_call_operand.vmem [shape: f32[1,128], index: 8, kind: input, shape index: {}]
  %s9 = inlined_call_operand.vmem [shape: bf16[128,128], index: 9, kind: input, shape index: {}]
  %s10 = inlined_call_operand.vmem [shape: f32[1,128], index: 10, kind: input, shape index: {}]
  %s11 = inlined_call_operand.vmem [shape: bf16[128,128], index: 11, kind: input, shape index: {}]
  %s12 = inlined_call_operand.vmem [shape: f32[1,128], index: 12, kind: input, shape index: {}]
  %s13 = inlined_call_operand.hbm [shape: f32[2,128,128], index: 13, kind: output, shape index: {}]
  %s14 = sld [smem:[#allocation0]]
  $region93: #{hgcb_forward.3} parent=0
    _
  %s16 = ssub.s32 1, %s14
  %s17 = scalar_select 0, %s16, %s14
  $region1: #{hgcb_forward.3} parent=0
    #allocation3 [shape = 'u8[131072]{0}', space=vmem, size = 0x20000, scoped, tag = 'output window, operand 0']
    #allocation4 [shape = 's32[2]{0}', space=sflag, size = 0x8, scoped, tag = 'scoped memory for hgcb_forward.3']
    %18 = vsyncpa [#allocation4], 0
    %s19 = scalar_lea.sflag [#allocation4], 1
    %20 = vsyncpa %s19, 0
    loop: start=0, step=1, limit=4
    $region2: #{hgcb_forward.3} parent=1 // loop_pre_header
      _
    $region3: #{hgcb_forward.3} parent=1 // loop_header
      %s22 = sphi 0, %s26
      %p23 = scmp.ge.s32.totalorder %s22, 4
      %s29 = sphi 0, %s48
      %s30 = sphi 0, %s44
      %s31 = sphi 0, %s40
      %s32 = sphi 0, %s29
      %s33 = sphi 0, %s30
      %s34 = sphi 0, %s31
      %s35 = sphi 0, %s32
      %s36 = sphi 0, %s33
      %s37 = sphi 0, %s34
      %s53 = sphi 0, %s55
      %s56 = sphi 0, %s53
      %s57 = sphi 0, %s56
      %s73 = sphi 0, %s57
      %s83 = sphi 0, %s85
      %s86 = sphi 0, %s83
      %s87 = sphi 0, %s86
      %s103 = sphi 0, %s87
      %s111 = sphi 0, %s113
      %s114 = sphi 0, %s111
      %s115 = sphi 0, %s114
      %s131 = sphi 0, %s115
      %s135 = sphi 0, %s135
      %s137 = sphi 0, %s135
      %s138 = sphi 0, %s137
      %s152 = sphi 0, %s138
      %s156 = sphi 0, %s156
      %s158 = sphi 0, %s156
      %s159 = sphi 0, %s158
      %s173 = sphi 0, %s159
      %s177 = sphi 0, %s177
      %s179 = sphi 0, %s177
      %s180 = sphi 0, %s179
      %s194 = sphi 0, %s180
      %s198 = sphi 0, %s198
      %s200 = sphi 0, %s198
      %s201 = sphi 0, %s200
      %s215 = sphi 0, %s201
      %s219 = sphi 0, %s219
      %s221 = sphi 0, %s219
      %s222 = sphi 0, %s221
      %s236 = sphi 0, %s222
      %s240 = sphi 0, %s240
      %s242 = sphi 0, %s240
      %s243 = sphi 0, %s242
      %s257 = sphi 0, %s243
      %s261 = sphi 0, %s261
      %s263 = sphi 0, %s261
      %s264 = sphi 0, %s263
      %s278 = sphi 0, %s264
      %s282 = sphi 0, %s282
      %s284 = sphi 0, %s282
      %s285 = sphi 0, %s284
      %s299 = sphi 0, %s285
      %s303 = sphi 0, %s303
      %s305 = sphi 0, %s303
      %s306 = sphi 0, %s305
      %s320 = sphi 0, %s306
      %s324 = sphi 0, %s324
      %s326 = sphi 0, %s324
      %s327 = sphi 0, %s326
      %s341 = sphi 0, %s327
      %s349 = sphi 0, %s351
      %s352 = sphi 0, %s349
      %s353 = sphi 0, %s352
      %s369 = sphi 0, %s353
    $region4: #{hgcb_forward.3} parent=1 // loop_header_branch
      %25 = sbr.rel (%p23) target = $region8
    $region5: #{hgcb_forward.3} parent=1 // loop_body
      %s27 = ssub.s32 %s22, 1
      %s28 = ssub.s32 %s22, 2
      %s38 = sadd.s32 1, %s31
      %p39 = scmp.ge.s32.totalorder %s38, 1
      %s40 = scalar_select %p39, 0, %s38
      %s41 = sadd.s32 1, %s30
      %s42 = scalar_select %p39, %s41, %s30
      %p43 = scmp.ge.s32.totalorder %s42, 1
      %s44 = scalar_select %p43, 0, %s42
      %s45 = sadd.s32 1, %s29
      %s46 = scalar_select %p43, %s45, %s29
      %p47 = scmp.ge.s32.totalorder %s46, 2
      %s48 = scalar_select %p47, 0, %s46
      %s49 = ssub.s32 %s29, %s48
      %s50 = ssub.s32 %s31, %s40
      %s51 = sor.u32 %s49, %s50
      %p52 = scmp.eq.s32.totalorder %s51, 0
      %s54 = sadd.s32 %s53, 1
      %s55 = scalar_select %p52, %s53, %s54
      %p58 = pneg %p52
      %p59 = scmp.eq.s32.totalorder %s22, 1
      %p60 = por %p58, %p59
      %p61 = scmp.ne.s32.totalorder %s53, %s56
      %p62 = scmp.eq.s32.totalorder %s22, 0
      %p63 = por %p61, %p62
      %p64 = scmp.ne.s32.totalorder %s53, %s56
      %p65 = scmp.eq.s32.totalorder %s27, 1
      %p66 = por %p64, %p65
      %p67 = scmp.ne.s32.totalorder %s56, %s57
      %p68 = scmp.eq.s32.totalorder %s27, 0
      %p69 = por %p67, %p68
      %p70 = scmp.ne.s32.totalorder %s56, %s57
      %p71 = scmp.eq.s32.totalorder %s28, 1
      %p72 = por %p70, %p71
      %p74 = scmp.ne.s32.totalorder %s57, %s73
      %p75 = scmp.eq.s32.totalorder %s28, 0
      %p76 = por %p74, %p75
      %s77 = ssub.s32 %s29, %s48
      %s78 = ssub.s32 %s30, %s44
      %s79 = sor.u32 %s77, %s78
      %s80 = ssub.s32 %s31, %s40
      %s81 = sor.u32 %s79, %s80
      %p82 = scmp.eq.s32.totalorder %s81, 0
      %s84 = sadd.s32 %s83, 1
      %s85 = scalar_select %p82, %s83, %s84
      %p88 = pneg %p82
      %p89 = scmp.eq.s32.totalorder %s22, 1
      %p90 = por %p88, %p89
      %p91 = scmp.ne.s32.totalorder %s83, %s86
      %p92 = scmp.eq.s32.totalorder %s22, 0
      %p93 = por %p91, %p92
      %p94 = scmp.ne.s32.totalorder %s83, %s86
      %p95 = scmp.eq.s32.totalorder %s27, 1
      %p96 = por %p94, %p95
      %p97 = scmp.ne.s32.totalorder %s86, %s87
      %p98 = scmp.eq.s32.totalorder %s27, 0
      %p99 = por %p97, %p98
      %p100 = scmp.ne.s32.totalorder %s86, %s87
      %p101 = scmp.eq.s32.totalorder %s28, 1
      %p102 = por %p100, %p101
      %p104 = scmp.ne.s32.totalorder %s87, %s103
      %p105 = scmp.eq.s32.totalorder %s28, 0
      %p106 = por %p104, %p105
      %s107 = ssub.s32 %s29, %s48
      %s108 = ssub.s32 %s30, %s44
      %s109 = sor.u32 %s107, %s108
      %p110 = scmp.eq.s32.totalorder %s109, 0
      %s112 = sadd.s32 %s111, 1
      %s113 = scalar_select %p110, %s111, %s112
      %p116 = pneg %p110
      %p117 = scmp.eq.s32.totalorder %s22, 1
      %p118 = por %p116, %p117
      %p119 = scmp.ne.s32.totalorder %s111, %s114
      %p120 = scmp.eq.s32.totalorder %s22, 0
      %p121 = por %p119, %p120
      %p122 = scmp.ne.s32.totalorder %s111, %s114
      %p123 = scmp.eq.s32.totalorder %s27, 1
      %p124 = por %p122, %p123
      %p125 = scmp.ne.s32.totalorder %s114, %s115
      %p126 = scmp.eq.s32.totalorder %s27, 0
      %p127 = por %p125, %p126
      %p128 = scmp.ne.s32.totalorder %s114, %s115
      %p129 = scmp.eq.s32.totalorder %s28, 1
      %p130 = por %p128, %p129
      %p132 = scmp.ne.s32.totalorder %s115, %s131
      %p133 = scmp.eq.s32.totalorder %s28, 0
      %p134 = por %p132, %p133
      %s136 = sadd.s32 %s135, 1
      %p139 = scmp.eq.s32.totalorder %s22, 1
      %p140 = scmp.ne.s32.totalorder %s135, %s137
      %p141 = scmp.eq.s32.totalorder %s22, 0
      %p142 = por %p140, %p141
      %p143 = scmp.ne.s32.totalorder %s135, %s137
      %p144 = scmp.eq.s32.totalorder %s27, 1
      %p145 = por %p143, %p144
      %p146 = scmp.ne.s32.totalorder %s137, %s138
      %p147 = scmp.eq.s32.totalorder %s27, 0
      %p148 = por %p146, %p147
      %p149 = scmp.ne.s32.totalorder %s137, %s138
      %p150 = scmp.eq.s32.totalorder %s28, 1
      %p151 = por %p149, %p150
      %p153 = scmp.ne.s32.totalorder %s138, %s152
      %p154 = scmp.eq.s32.totalorder %s28, 0
      %p155 = por %p153, %p154
      %s157 = sadd.s32 %s156, 1
      %p160 = scmp.eq.s32.totalorder %s22, 1
      %p161 = scmp.ne.s32.totalorder %s156, %s158
      %p162 = scmp.eq.s32.totalorder %s22, 0
      %p163 = por %p161, %p162
      %p164 = scmp.ne.s32.totalorder %s156, %s158
      %p165 = scmp.eq.s32.totalorder %s27, 1
      %p166 = por %p164, %p165
      %p167 = scmp.ne.s32.totalorder %s158, %s159
      %p168 = scmp.eq.s32.totalorder %s27, 0
      %p169 = por %p167, %p168
      %p170 = scmp.ne.s32.totalorder %s158, %s159
      %p171 = scmp.eq.s32.totalorder %s28, 1
      %p172 = por %p170, %p171
      %p174 = scmp.ne.s32.totalorder %s159, %s173
      %p175 = scmp.eq.s32.totalorder %s28, 0
      %p176 = por %p174, %p175
      %s178 = sadd.s32 %s177, 1
      %p181 = scmp.eq.s32.totalorder %s22, 1
      %p182 = scmp.ne.s32.totalorder %s177, %s179
      %p183 = scmp.eq.s32.totalorder %s22, 0
      %p184 = por %p182, %p183
      %p185 = scmp.ne.s32.totalorder %s177, %s179
      %p186 = scmp.eq.s32.totalorder %s27, 1
      %p187 = por %p185, %p186
      %p188 = scmp.ne.s32.totalorder %s179, %s180
      %p189 = scmp.eq.s32.totalorder %s27, 0
      %p190 = por %p188, %p189
      %p191 = scmp.ne.s32.totalorder %s179, %s180
      %p192 = scmp.eq.s32.totalorder %s28, 1
      %p193 = por %p191, %p192
      %p195 = scmp.ne.s32.totalorder %s180, %s194
      %p196 = scmp.eq.s32.totalorder %s28, 0
      %p197 = por %p195, %p196
      %s199 = sadd.s32 %s198, 1
      %p202 = scmp.eq.s32.totalorder %s22, 1
      %p203 = scmp.ne.s32.totalorder %s198, %s200
      %p204 = scmp.eq.s32.totalorder %s22, 0
      %p205 = por %p203, %p204
      %p206 = scmp.ne.s32.totalorder %s198, %s200
      %p207 = scmp.eq.s32.totalorder %s27, 1
      %p208 = por %p206, %p207
      %p209 = scmp.ne.s32.totalorder %s200, %s201
      %p210 = scmp.eq.s32.totalorder %s27, 0
      %p211 = por %p209, %p210
      %p212 = scmp.ne.s32.totalorder %s200, %s201
      %p213 = scmp.eq.s32.totalorder %s28, 1
      %p214 = por %p212, %p213
      %p216 = scmp.ne.s32.totalorder %s201, %s215
      %p217 = scmp.eq.s32.totalorder %s28, 0
      %p218 = por %p216, %p217
      %s220 = sadd.s32 %s219, 1
      %p223 = scmp.eq.s32.totalorder %s22, 1
      %p224 = scmp.ne.s32.totalorder %s219, %s221
      %p225 = scmp.eq.s32.totalorder %s22, 0
      %p226 = por %p224, %p225
      %p227 = scmp.ne.s32.totalorder %s219, %s221
      %p228 = scmp.eq.s32.totalorder %s27, 1
      %p229 = por %p227, %p228
      %p230 = scmp.ne.s32.totalorder %s221, %s222
      %p231 = scmp.eq.s32.totalorder %s27, 0
      %p232 = por %p230, %p231
      %p233 = scmp.ne.s32.totalorder %s221, %s222
      %p234 = scmp.eq.s32.totalorder %s28, 1
      %p235 = por %p233, %p234
      %p237 = scmp.ne.s32.totalorder %s222, %s236
      %p238 = scmp.eq.s32.totalorder %s28, 0
      %p239 = por %p237, %p238
      %s241 = sadd.s32 %s240, 1
      %p244 = scmp.eq.s32.totalorder %s22, 1
      %p245 = scmp.ne.s32.totalorder %s240, %s242
      %p246 = scmp.eq.s32.totalorder %s22, 0
      %p247 = por %p245, %p246
      %p248 = scmp.ne.s32.totalorder %s240, %s242
      %p249 = scmp.eq.s32.totalorder %s27, 1
      %p250 = por %p248, %p249
      %p251 = scmp.ne.s32.totalorder %s242, %s243
      %p252 = scmp.eq.s32.totalorder %s27, 0
      %p253 = por %p251, %p252
      %p254 = scmp.ne.s32.totalorder %s242, %s243
      %p255 = scmp.eq.s32.totalorder %s28, 1
      %p256 = por %p254, %p255
      %p258 = scmp.ne.s32.totalorder %s243, %s257
      %p259 = scmp.eq.s32.totalorder %s28, 0
      %p260 = por %p258, %p259
      %s262 = sadd.s32 %s261, 1
      %p265 = scmp.eq.s32.totalorder %s22, 1
      %p266 = scmp.ne.s32.totalorder %s261, %s263
      %p267 = scmp.eq.s32.totalorder %s22, 0
      %p268 = por %p266, %p267
      %p269 = scmp.ne.s32.totalorder %s261, %s263
      %p270 = scmp.eq.s32.totalorder %s27, 1
      %p271 = por %p269, %p270
      %p272 = scmp.ne.s32.totalorder %s263, %s264
      %p273 = scmp.eq.s32.totalorder %s27, 0
      %p274 = por %p272, %p273
      %p275 = scmp.ne.s32.totalorder %s263, %s264
      %p276 = scmp.eq.s32.totalorder %s28, 1
      %p277 = por %p275, %p276
      %p279 = scmp.ne.s32.totalorder %s264, %s278
      %p280 = scmp.eq.s32.totalorder %s28, 0
      %p281 = por %p279, %p280
      %s283 = sadd.s32 %s282, 1
      %p286 = scmp.eq.s32.totalorder %s22, 1
      %p287 = scmp.ne.s32.totalorder %s282, %s284
      %p288 = scmp.eq.s32.totalorder %s22, 0
      %p289 = por %p287, %p288
      %p290 = scmp.ne.s32.totalorder %s282, %s284
      %p291 = scmp.eq.s32.totalorder %s27, 1
      %p292 = por %p290, %p291
      %p293 = scmp.ne.s32.totalorder %s284, %s285
      %p294 = scmp.eq.s32.totalorder %s27, 0
      %p295 = por %p293, %p294
      %p296 = scmp.ne.s32.totalorder %s284, %s285
      %p297 = scmp.eq.s32.totalorder %s28, 1
      %p298 = por %p296, %p297
      %p300 = scmp.ne.s32.totalorder %s285, %s299
      %p301 = scmp.eq.s32.totalorder %s28, 0
      %p302 = por %p300, %p301
      %s304 = sadd.s32 %s303, 1
      %p307 = scmp.eq.s32.totalorder %s22, 1
      %p308 = scmp.ne.s32.totalorder %s303, %s305
      %p309 = scmp.eq.s32.totalorder %s22, 0
      %p310 = por %p308, %p309
      %p311 = scmp.ne.s32.totalorder %s303, %s305
      %p312 = scmp.eq.s32.totalorder %s27, 1
      %p313 = por %p311, %p312
      %p314 = scmp.ne.s32.totalorder %s305, %s306
      %p315 = scmp.eq.s32.totalorder %s27, 0
      %p316 = por %p314, %p315
      %p317 = scmp.ne.s32.totalorder %s305, %s306
      %p318 = scmp.eq.s32.totalorder %s28, 1
      %p319 = por %p317, %p318
      %p321 = scmp.ne.s32.totalorder %s306, %s320
      %p322 = scmp.eq.s32.totalorder %s28, 0
      %p323 = por %p321, %p322
      %s325 = sadd.s32 %s324, 1
      %p328 = scmp.eq.s32.totalorder %s22, 1
      %p329 = scmp.ne.s32.totalorder %s324, %s326
      %p330 = scmp.eq.s32.totalorder %s22, 0
      %p331 = por %p329, %p330
      %p332 = scmp.ne.s32.totalorder %s324, %s326
      %p333 = scmp.eq.s32.totalorder %s27, 1
      %p334 = por %p332, %p333
      %p335 = scmp.ne.s32.totalorder %s326, %s327
      %p336 = scmp.eq.s32.totalorder %s27, 0
      %p337 = por %p335, %p336
      %p338 = scmp.ne.s32.totalorder %s326, %s327
      %p339 = scmp.eq.s32.totalorder %s28, 1
      %p340 = por %p338, %p339
      %p342 = scmp.ne.s32.totalorder %s327, %s341
      %p343 = scmp.eq.s32.totalorder %s28, 0
      %p344 = por %p342, %p343
      %s345 = ssub.s32 %s29, %s48
      %s346 = ssub.s32 %s30, %s44
      %s347 = sor.u32 %s345, %s346
      %p348 = scmp.eq.s32.totalorder %s347, 0
      %s350 = sadd.s32 %s349, 1
      %s351 = scalar_select %p348, %s349, %s350
      %p354 = pneg %p348
      %p355 = scmp.eq.s32.totalorder %s22, 1
      %p356 = por %p354, %p355
      %p357 = scmp.ne.s32.totalorder %s349, %s352
      %p358 = scmp.eq.s32.totalorder %s22, 0
      %p359 = por %p357, %p358
      %p360 = scmp.ne.s32.totalorder %s349, %s352
      %p361 = scmp.eq.s32.totalorder %s27, 1
      %p362 = por %p360, %p361
      %p363 = scmp.ne.s32.totalorder %s352, %s353
      %p364 = scmp.eq.s32.totalorder %s27, 0
      %p365 = por %p363, %p364
      %p366 = scmp.ne.s32.totalorder %s352, %s353
      %p367 = scmp.eq.s32.totalorder %s28, 1
      %p368 = por %p366, %p367
      %p370 = scmp.ne.s32.totalorder %s353, %s369
      %p371 = scmp.eq.s32.totalorder %s28, 0
      %p372 = por %p370, %p371
      %p373 = scmp.le.s32.totalorder 1, %s22
      %p374 = scmp.lt.s32.totalorder %s22, 3
      %p375 = pnand %p373, %p374
      %p376 = pneg %p375
      // Predicated region
      $region9: #{hgcb_forward.3} parent=5 // pred_check
        _
      $region10: #{hgcb_forward.3} parent=5 // pred_check_branch
        %378 = sbr.rel (%p375) target = $region12
      $region11: #{hgcb_forward.3} parent=5 // pred_region
        %s379 = ssub.s32 %s22, 1
        // Predicated region
        $region13: #{hgcb_forward.3} parent=11 // pred_check
          %p380 = pneg %p148
        $region14: #{hgcb_forward.3} parent=11 // pred_check_branch
          %382 = sbr.rel (%p380) target = $region16
        $region15: #{hgcb_forward.3} parent=11 // pred_region
          _
        $region16: #{hgcb_forward.3} parent=11 // pred_fallthru
          _
        // Predicated region
        $region17: #{hgcb_forward.3} parent=11 // pred_check
          %p383 = pneg %p169
        $region18: #{hgcb_forward.3} parent=11 // pred_check_branch
          %385 = sbr.rel (%p383) target = $region20
        $region19: #{hgcb_forward.3} parent=11 // pred_region
          _
        $region20: #{hgcb_forward.3} parent=11 // pred_fallthru
          _
        // Predicated region
        $region21: #{hgcb_forward.3} parent=11 // pred_check
          %p386 = pneg %p190
        $region22: #{hgcb_forward.3} parent=11 // pred_check_branch
          %388 = sbr.rel (%p386) target = $region24
        $region23: #{hgcb_forward.3} parent=11 // pred_region
          _
        $region24: #{hgcb_forward.3} parent=11 // pred_fallthru
          _
        // Predicated region
        $region25: #{hgcb_forward.3} parent=11 // pred_check
          %p389 = pneg %p211
        $region26: #{hgcb_forward.3} parent=11 // pred_check_branch
          %391 = sbr.rel (%p389) target = $region28
        $region27: #{hgcb_forward.3} parent=11 // pred_region
          _
        $region28: #{hgcb_forward.3} parent=11 // pred_fallthru
          _
        // Predicated region
        $region29: #{hgcb_forward.3} parent=11 // pred_check
          %p392 = pneg %p232
        $region30: #{hgcb_forward.3} parent=11 // pred_check_branch
          %394 = sbr.rel (%p392) target = $region32
        $region31: #{hgcb_forward.3} parent=11 // pred_region
          _
        $region32: #{hgcb_forward.3} parent=11 // pred_fallthru
          _
        // Predicated region
        $region33: #{hgcb_forward.3} parent=11 // pred_check
          %p395 = pneg %p253
        $region34: #{hgcb_forward.3} parent=11 // pred_check_branch
          %397 = sbr.rel (%p395) target = $region36
        $region35: #{hgcb_forward.3} parent=11 // pred_region
          _
        $region36: #{hgcb_forward.3} parent=11 // pred_fallthru
          _
        // Predicated region
        $region37: #{hgcb_forward.3} parent=11 // pred_check
          %p398 = pneg %p274
        $region38: #{hgcb_forward.3} parent=11 // pred_check_branch
          %400 = sbr.rel (%p398) target = $region40
        $region39: #{hgcb_forward.3} parent=11 // pred_region
          _
        $region40: #{hgcb_forward.3} parent=11 // pred_fallthru
          _
        // Predicated region
        $region41: #{hgcb_forward.3} parent=11 // pred_check
          %p401 = pneg %p295
        $region42: #{hgcb_forward.3} parent=11 // pred_check_branch
          %403 = sbr.rel (%p401) target = $region44
        $region43: #{hgcb_forward.3} parent=11 // pred_region
          _
        $region44: #{hgcb_forward.3} parent=11 // pred_fallthru
          _
        // Predicated region
        $region45: #{hgcb_forward.3} parent=11 // pred_check
          %p404 = pneg %p316
        $region46: #{hgcb_forward.3} parent=11 // pred_check_branch
          %406 = sbr.rel (%p404) target = $region48
        $region47: #{hgcb_forward.3} parent=11 // pred_region
          _
        $region48: #{hgcb_forward.3} parent=11 // pred_fallthru
          _
        // Predicated region
        $region49: #{hgcb_forward.3} parent=11 // pred_check
          %p407 = pneg %p337
        $region50: #{hgcb_forward.3} parent=11 // pred_check_branch
          %409 = sbr.rel (%p407) target = $region52
        $region51: #{hgcb_forward.3} parent=11 // pred_region
          _
        $region52: #{hgcb_forward.3} parent=11 // pred_fallthru
          _
      $region12: #{hgcb_forward.3} parent=5 // pred_fallthru
        _
      %p410 = scmp.lt.s32.totalorder %s22, 2
      // Predicated region
      $region53: #{hgcb_forward.3} parent=5 // pred_check
        %p411 = pneg %p410
      $region54: #{hgcb_forward.3} parent=5 // pred_check_branch
        %413 = sbr.rel (%p411) target = $region56
      $region55: #{hgcb_forward.3} parent=5 // pred_region
        // Predicated region
        $region57: #{hgcb_forward.3} parent=55 // pred_check
          %p414 = pneg %p63
        $region58: #{hgcb_forward.3} parent=55 // pred_check_branch
          %416 = sbr.rel (%p414) target = $region60
        $region59: #{hgcb_forward.3} parent=55 // pred_region
          %s417 = smul.u32 16, %s31
          %p418 = scmp.lt.s32.totalorder %s29, 1
          %s419 = scalar_select %p418, %s29, 1
          %p420 = scmp.lt.s32.totalorder %s417, 15
          %s421 = scalar_select %p420, %s417, 15
          %s422 = smul.addr %s419, 16
          %s423 = sadd.s32 %s421, %s422
          %s424 = smul.addr %s423, 8
          %s425 = scalar_lea.vmem %s0, %s424
          %s426 = smul.u32 16, %s31
        $region60: #{hgcb_forward.3} parent=55 // pred_fallthru
          _
        // Predicated region
        $region61: #{hgcb_forward.3} parent=55 // pred_check
          %p427 = pneg %p93
        $region62: #{hgcb_forward.3} parent=55 // pred_check_branch
          %429 = sbr.rel (%p427) target = $region64
        $region63: #{hgcb_forward.3} parent=55 // pred_region
          %s430 = smul.u32 16, %s30
          %p431 = scmp.lt.s32.totalorder %s29, 1
          %s432 = scalar_select %p431, %s29, 1
          %p433 = scmp.lt.s32.totalorder %s430, 15
          %s434 = scalar_select %p433, %s430, 15
          %p435 = scmp.lt.s32.totalorder %s31, 0
          %s436 = scalar_select %p435, %s31, 0
          %s437 = sadd.s32 %s436, %s434
          %s438 = smul.addr %s432, 16
          %s439 = sadd.s32 %s437, %s438
          %s440 = smul.addr %s439, 4
          %s441 = scalar_lea.vmem %s1, %s440
          %s442 = smul.u32 16, %s30
        $region64: #{hgcb_forward.3} parent=55 // pred_fallthru
          _
        // Predicated region
        $region65: #{hgcb_forward.3} parent=55 // pred_check
          %p443 = pneg %p121
        $region66: #{hgcb_forward.3} parent=55 // pred_check_branch
          %445 = sbr.rel (%p443) target = $region68
        $region67: #{hgcb_forward.3} parent=55 // pred_region
          %s446 = smul.u32 16, %s30
          %p447 = scmp.lt.s32.totalorder %s29, 1
          %s448 = scalar_select %p447, %s29, 1
          %p449 = scmp.lt.s32.totalorder %s446, 15
          %s450 = scalar_select %p449, %s446, 15
          %s451 = smul.addr %s448, 16
          %s452 = sadd.s32 %s450, %s451
          %s453 = smul.addr %s452, 8
          %s454 = scalar_lea.vmem %s2, %s453
          %s455 = smul.u32 16, %s30
        $region68: #{hgcb_forward.3} parent=55 // pred_fallthru
          _
      $region56: #{hgcb_forward.3} parent=5 // pred_fallthru
        _
      %p456 = scmp.le.s32.totalorder 1, %s22
      %p457 = scmp.lt.s32.totalorder %s22, 3
      %p458 = pnand %p456, %p457
      %p459 = pneg %p458
      // Predicated region
      $region69: #{hgcb_forward.3} parent=5 // pred_check
        _
      $region70: #{hgcb_forward.3} parent=5 // pred_check_branch
        %461 = sbr.rel (%p458) target = $region72
      $region71: #{hgcb_forward.3} parent=5 // pred_region
        %s462 = ssub.s32 %s22, 1
        %s463 = smul.u32 16, %s34
        %p464 = scmp.lt.s32.totalorder %s32, 1
        %s465 = scalar_select %p464, %s32, 1
        %p466 = scmp.lt.s32.totalorder %s463, 15
        %s467 = scalar_select %p466, %s463, 15
        %s468 = smul.addr %s465, 16
        %s469 = sadd.s32 %s467, %s468
        %s470 = smul.addr %s469, 8
        %s471 = scalar_lea.vmem %s0, %s470
        %p472 = pneg %p69
        %p473 = pneg %p66
        %s474 = smul.u32 16, %s33
        %p475 = scmp.lt.s32.totalorder %s32, 1
        %s476 = scalar_select %p475, %s32, 1
        %p477 = scmp.lt.s32.totalorder %s474, 15
        %s478 = scalar_select %p477, %s474, 15
        %p479 = scmp.lt.s32.totalorder %s34, 0
        %s480 = scalar_select %p479, %s34, 0
        %s481 = sadd.s32 %s480, %s478
        %s482 = smul.addr %s476, 16
        %s483 = sadd.s32 %s481, %s482
        %s484 = smul.addr %s483, 4
        %s485 = scalar_lea.vmem %s1, %s484
        %p486 = pneg %p99
        %p487 = pneg %p96
        %s488 = smul.u32 16, %s33
        %p489 = scmp.lt.s32.totalorder %s32, 1
        %s490 = scalar_select %p489, %s32, 1
        %p491 = scmp.lt.s32.totalorder %s488, 15
        %s492 = scalar_select %p491, %s488, 15
        %s493 = smul.addr %s490, 16
        %s494 = sadd.s32 %s492, %s493
        %s495 = smul.addr %s494, 8
        %s496 = scalar_lea.vmem %s2, %s495
        %p497 = pneg %p127
        %p498 = pneg %p124
        %p499 = pneg %p148
        %p500 = pneg %p145
        %p501 = pneg %p169
        %p502 = pneg %p166
        %p503 = pneg %p190
        %p504 = pneg %p187
        %p505 = pneg %p211
        %p506 = pneg %p208
        %p507 = pneg %p232
        %p508 = pneg %p229
        %p509 = pneg %p253
        %p510 = pneg %p250
        %p511 = pneg %p274
        %p512 = pneg %p271
        %p513 = pneg %p295
        %p514 = pneg %p292
        %p515 = pneg %p316
        %p516 = pneg %p313
        %p517 = pneg %p337
        %p518 = pneg %p334
        %p519 = pneg %p365
        %p520 = pneg %p362
        %s521 = sand.u32 %s352, 1
        %s522 = scalar_lea.sflag [#allocation4], %s521
        %s523 = sand.u32 %s352, 1
        %s524 = smul.addr %s523, 128
        %s525 = scalar_lea.vmem [#allocation3], %s524
        %s526 = smul.u32 16, %s34
        %p527 = scmp.lt.s32.totalorder %s32, 1
        %s528 = scalar_select %p527, %s32, 1
        %p529 = scmp.lt.s32.totalorder %s526, 15
        %s530 = scalar_select %p529, %s526, 15
        %s531 = smul.addr %s528, 16
        %s532 = sadd.s32 %s530, %s531
        %s533 = smul.addr %s532, 8
        %s534 = scalar_lea.vmem %s0, %s533
        %s535 = smul.u32 16, %s34
        %s536 = smul.u32 16, %s33
        %p537 = scmp.lt.s32.totalorder %s32, 1
        %s538 = scalar_select %p537, %s32, 1
        %p539 = scmp.lt.s32.totalorder %s536, 15
        %s540 = scalar_select %p539, %s536, 15
        %p541 = scmp.lt.s32.totalorder %s34, 0
        %s542 = scalar_select %p541, %s34, 0
        %s543 = sadd.s32 %s542, %s540
        %s544 = smul.addr %s538, 16
        %s545 = sadd.s32 %s543, %s544
        %s546 = smul.addr %s545, 4
        %s547 = scalar_lea.vmem %s1, %s546
        %s548 = smul.u32 16, %s33
        %s549 = smul.u32 16, %s33
        %p550 = scmp.lt.s32.totalorder %s32, 1
        %s551 = scalar_select %p550, %s32, 1
        %p552 = scmp.lt.s32.totalorder %s549, 15
        %s553 = scalar_select %p552, %s549, 15
        %s554 = smul.addr %s551, 16
        %s555 = sadd.s32 %s553, %s554
        %s556 = smul.addr %s555, 8
        %s557 = scalar_lea.vmem %s2, %s556
        %s558 = smul.u32 16, %s33
        %s559 = smul.u32 16, %s33
        %p561 = scmp.eq.s32.totalorder %s34, 0
        // Predicated region
        $region73: #{hgcb_forward.3} parent=71 // pred_check
          %p562 = pneg %p561
        $region74: #{hgcb_forward.3} parent=71 // pred_check_branch
          %564 = sbr.rel (%p562) target = $region76
        $region75: #{hgcb_forward.3} parent=71 // pred_region
          %565 = vst [vmem:[#allocation2] sm:$0xff] 0.0
          %566 = vst [vmem:[#allocation2 + $0x8] sm:$0xff] 0.0
          %567 = vst [vmem:[#allocation2 + $0x10] sm:$0xff] 0.0
          %568 = vst [vmem:[#allocation2 + $0x18] sm:$0xff] 0.0
          %569 = vst [vmem:[#allocation2 + $0x20] sm:$0xff] 0.0
          %570 = vst [vmem:[#allocation2 + $0x28] sm:$0xff] 0.0
          %571 = vst [vmem:[#allocation2 + $0x30] sm:$0xff] 0.0
          %572 = vst [vmem:[#allocation2 + $0x38] sm:$0xff] 0.0
          %573 = vst [vmem:[#allocation2 + $0x40] sm:$0xff] 0.0
          %574 = vst [vmem:[#allocation2 + $0x48] sm:$0xff] 0.0
          %575 = vst [vmem:[#allocation2 + $0x50] sm:$0xff] 0.0
          %576 = vst [vmem:[#allocation2 + $0x58] sm:$0xff] 0.0
          %577 = vst [vmem:[#allocation2 + $0x60] sm:$0xff] 0.0
          %578 = vst [vmem:[#allocation2 + $0x68] sm:$0xff] 0.0
          %579 = vst [vmem:[#allocation2 + $0x70] sm:$0xff] 0.0
          %580 = vst [vmem:[#allocation2 + $0x78] sm:$0xff] 0.0
        $region76: #{hgcb_forward.3} parent=71 // pred_fallthru
          _
        %v581 = vld [vmem:[%s534] sm:$0xff]
        %v582 = vld [vmem:[%s534 + $0x8] sm:$0xff]
        %v583 = vld [vmem:[%s534 + $0x10] sm:$0xff]
        %v584 = vld [vmem:[%s534 + $0x18] sm:$0xff]
        %v585 = vld [vmem:[%s534 + $0x20] sm:$0xff]
        %v586 = vld [vmem:[%s534 + $0x28] sm:$0xff]
        %v587 = vld [vmem:[%s534 + $0x30] sm:$0xff]
        %v588 = vld [vmem:[%s534 + $0x38] sm:$0xff]
        %v589 = vld [vmem:[%s534 + $0x40] sm:$0xff]
        %v590 = vld [vmem:[%s534 + $0x48] sm:$0xff]
        %v591 = vld [vmem:[%s534 + $0x50] sm:$0xff]
        %v592 = vld [vmem:[%s534 + $0x58] sm:$0xff]
        %v593 = vld [vmem:[%s534 + $0x60] sm:$0xff]
        %v594 = vld [vmem:[%s534 + $0x68] sm:$0xff]
        %v595 = vld [vmem:[%s534 + $0x70] sm:$0xff]
        %v596 = vld [vmem:[%s534 + $0x78] sm:$0xff]
        %v597 = vld [vmem:[%s3] sm:$0x1]
        %v598 = vld [vmem:[%s4] sm:$0x1]
        %599 = vadd.xlane.f32.xlu0 %v581
        %v600 = vpop.xlane.xlu0 %599
        %601 = vadd.xlane.f32.xlu0 %v582
        %v602 = vpop.xlane.xlu0 %601
        %603 = vadd.xlane.f32.xlu0 %v583
        %v604 = vpop.xlane.xlu0 %603
        %605 = vadd.xlane.f32.xlu0 %v584
        %v606 = vpop.xlane.xlu0 %605
        %607 = vadd.xlane.f32.xlu0 %v585
        %v608 = vpop.xlane.xlu0 %607
        %609 = vadd.xlane.f32.xlu0 %v586
        %v610 = vpop.xlane.xlu0 %609
        %611 = vadd.xlane.f32.xlu0 %v587
        %v612 = vpop.xlane.xlu0 %611
        %613 = vadd.xlane.f32.xlu0 %v588
        %v614 = vpop.xlane.xlu0 %613
        %615 = vadd.xlane.f32.xlu0 %v589
        %v616 = vpop.xlane.xlu0 %615
        %617 = vadd.xlane.f32.xlu0 %v590
        %v618 = vpop.xlane.xlu0 %617
        %619 = vadd.xlane.f32.xlu0 %v591
        %v620 = vpop.xlane.xlu0 %619
        %621 = vadd.xlane.f32.xlu0 %v592
        %v622 = vpop.xlane.xlu0 %621
        %623 = vadd.xlane.f32.xlu0 %v593
        %v624 = vpop.xlane.xlu0 %623
        %625 = vadd.xlane.f32.xlu0 %v594
        %v626 = vpop.xlane.xlu0 %625
        %627 = vadd.xlane.f32.xlu0 %v595
        %v628 = vpop.xlane.xlu0 %627
        %629 = vadd.xlane.f32.xlu0 %v596
        %v630 = vpop.xlane.xlu0 %629
        %v631 = vmul.f32 %v581, %v581
        %v632 = vmul.f32 %v582, %v582
        %v633 = vmul.f32 %v583, %v583
        %v634 = vmul.f32 %v584, %v584
        %v635 = vmul.f32 %v585, %v585
        %v636 = vmul.f32 %v586, %v586
        %v637 = vmul.f32 %v587, %v587
        %v638 = vmul.f32 %v588, %v588
        %v639 = vmul.f32 %v589, %v589
        %v640 = vmul.f32 %v590, %v590
        %v641 = vmul.f32 %v591, %v591
        %v642 = vmul.f32 %v592, %v592
        %v643 = vmul.f32 %v593, %v593
        %v644 = vmul.f32 %v594, %v594
        %v645 = vmul.f32 %v595, %v595
        %v646 = vmul.f32 %v596, %v596
        %647 = vadd.xlane.f32.xlu0 %v631
        %v648 = vpop.xlane.xlu0 %647
        %649 = vadd.xlane.f32.xlu0 %v632
        %v650 = vpop.xlane.xlu0 %649
        %651 = vadd.xlane.f32.xlu0 %v633
        %v652 = vpop.xlane.xlu0 %651
        %653 = vadd.xlane.f32.xlu0 %v634
        %v654 = vpop.xlane.xlu0 %653
        %655 = vadd.xlane.f32.xlu0 %v635
        %v656 = vpop.xlane.xlu0 %655
        %657 = vadd.xlane.f32.xlu0 %v636
        %v658 = vpop.xlane.xlu0 %657
        %659 = vadd.xlane.f32.xlu0 %v637
        %v660 = vpop.xlane.xlu0 %659
        %661 = vadd.xlane.f32.xlu0 %v638
        %v662 = vpop.xlane.xlu0 %661
        %663 = vadd.xlane.f32.xlu0 %v639
        %v664 = vpop.xlane.xlu0 %663
        %665 = vadd.xlane.f32.xlu0 %v640
        %v666 = vpop.xlane.xlu0 %665
        %667 = vadd.xlane.f32.xlu0 %v641
        %v668 = vpop.xlane.xlu0 %667
        %669 = vadd.xlane.f32.xlu0 %v642
        %v670 = vpop.xlane.xlu0 %669
        %671 = vadd.xlane.f32.xlu0 %v643
        %v672 = vpop.xlane.xlu0 %671
        %673 = vadd.xlane.f32.xlu0 %v644
        %v674 = vpop.xlane.xlu0 %673
        %675 = vadd.xlane.f32.xlu0 %v645
        %v676 = vpop.xlane.xlu0 %675
        %677 = vadd.xlane.f32.xlu0 %v646
        %v678 = vpop.xlane.xlu0 %677
        %v679 = vmul.f32 %v600, 0.0078125
        %v680 = vmul.f32 %v602, 0.0078125
        %v681 = vmul.f32 %v604, 0.0078125
        %v682 = vmul.f32 %v606, 0.0078125
        %v683 = vmul.f32 %v608, 0.0078125
        %v684 = vmul.f32 %v610, 0.0078125
        %v685 = vmul.f32 %v612, 0.0078125
        %v686 = vmul.f32 %v614, 0.0078125
        %v687 = vmul.f32 %v616, 0.0078125
        %v688 = vmul.f32 %v618, 0.0078125
        %v689 = vmul.f32 %v620, 0.0078125
        %v690 = vmul.f32 %v622, 0.0078125
        %v691 = vmul.f32 %v624, 0.0078125
        %v692 = vmul.f32 %v626, 0.0078125
        %v693 = vmul.f32 %v628, 0.0078125
        %v694 = vmul.f32 %v630, 0.0078125
        %v695 = vmul.f32 %v648, 0.0078125
        %v696 = vmul.f32 %v650, 0.0078125
        %v697 = vmul.f32 %v652, 0.0078125
        %v698 = vmul.f32 %v654, 0.0078125
        %v699 = vmul.f32 %v656, 0.0078125
        %v700 = vmul.f32 %v658, 0.0078125
        %v701 = vmul.f32 %v660, 0.0078125
        %v702 = vmul.f32 %v662, 0.0078125
        %v703 = vmul.f32 %v664, 0.0078125
        %v704 = vmul.f32 %v666, 0.0078125
        %v705 = vmul.f32 %v668, 0.0078125
        %v706 = vmul.f32 %v670, 0.0078125
        %v707 = vmul.f32 %v672, 0.0078125
        %v708 = vmul.f32 %v674, 0.0078125
        %v709 = vmul.f32 %v676, 0.0078125
        %v710 = vmul.f32 %v678, 0.0078125
        %v711 = vmul.f32 %v679, %v679
        %v712 = vmul.f32 %v680, %v680
        %v713 = vmul.f32 %v681, %v681
        %v714 = vmul.f32 %v682, %v682
        %v715 = vmul.f32 %v683, %v683
        %v716 = vmul.f32 %v684, %v684
        %v717 = vmul.f32 %v685, %v685
        %v718 = vmul.f32 %v686, %v686
        %v719 = vmul.f32 %v687, %v687
        %v720 = vmul.f32 %v688, %v688
        %v721 = vmul.f32 %v689, %v689
        %v722 = vmul.f32 %v690, %v690
        %v723 = vmul.f32 %v691, %v691
        %v724 = vmul.f32 %v692, %v692
        %v725 = vmul.f32 %v693, %v693
        %v726 = vmul.f32 %v694, %v694
        %v727 = vsub.f32 %v695, %v711
        %v728 = vsub.f32 %v696, %v712
        %v729 = vsub.f32 %v697, %v713
        %v730 = vsub.f32 %v698, %v714
        %v731 = vsub.f32 %v699, %v715
        %v732 = vsub.f32 %v700, %v716
        %v733 = vsub.f32 %v701, %v717
        %v734 = vsub.f32 %v702, %v718
        %v735 = vsub.f32 %v703, %v719
        %v736 = vsub.f32 %v704, %v720
        %v737 = vsub.f32 %v705, %v721
        %v738 = vsub.f32 %v706, %v722
        %v739 = vsub.f32 %v707, %v723
        %v740 = vsub.f32 %v708, %v724
        %v741 = vsub.f32 %v709, %v725
        %v742 = vsub.f32 %v710, %v726
        %v743 = vmax.f32 %v727, 0.0
        %v744 = vmax.f32 %v728, 0.0
        %v745 = vmax.f32 %v729, 0.0
        %v746 = vmax.f32 %v730, 0.0
        %v747 = vmax.f32 %v731, 0.0
        %v748 = vmax.f32 %v732, 0.0
        %v749 = vmax.f32 %v733, 0.0
        %v750 = vmax.f32 %v734, 0.0
        %v751 = vmax.f32 %v735, 0.0
        %v752 = vmax.f32 %v736, 0.0
        %v753 = vmax.f32 %v737, 0.0
        %v754 = vmax.f32 %v738, 0.0
        %v755 = vmax.f32 %v739, 0.0
        %v756 = vmax.f32 %v740, 0.0
        %v757 = vmax.f32 %v741, 0.0
        %v758 = vmax.f32 %v742, 0.0
        %v759 = vsub.f32 %v581, %v679
        %v760 = vsub.f32 %v582, %v680
        %v761 = vsub.f32 %v583, %v681
        %v762 = vsub.f32 %v584, %v682
        %v763 = vsub.f32 %v585, %v683
        %v764 = vsub.f32 %v586, %v684
        %v765 = vsub.f32 %v587, %v685
        %v766 = vsub.f32 %v588, %v686
        %v767 = vsub.f32 %v589, %v687
        %v768 = vsub.f32 %v590, %v688
        %v769 = vsub.f32 %v591, %v689
        %v770 = vsub.f32 %v592, %v690
        %v771 = vsub.f32 %v593, %v691
        %v772 = vsub.f32 %v594, %v692
        %v773 = vsub.f32 %v595, %v693
        %v774 = vsub.f32 %v596, %v694
        %v775 = vadd.f32 %v743, 1e-05
        %v776 = vadd.f32 %v744, 1e-05
        %v777 = vadd.f32 %v745, 1e-05
        %v778 = vadd.f32 %v746, 1e-05
        %v779 = vadd.f32 %v747, 1e-05
        %v780 = vadd.f32 %v748, 1e-05
        %v781 = vadd.f32 %v749, 1e-05
        %v782 = vadd.f32 %v750, 1e-05
        %v783 = vadd.f32 %v751, 1e-05
        %v784 = vadd.f32 %v752, 1e-05
        %v785 = vadd.f32 %v753, 1e-05
        %v786 = vadd.f32 %v754, 1e-05
        %v787 = vadd.f32 %v755, 1e-05
        %v788 = vadd.f32 %v756, 1e-05
        %v789 = vadd.f32 %v757, 1e-05
        %v790 = vadd.f32 %v758, 1e-05
        %v791 = vrsqrt.pop %v775
        %v792 = vrsqrt.pop %v776
        %v793 = vrsqrt.pop %v777
        %v794 = vrsqrt.pop %v778
        %v795 = vrsqrt.pop %v779
        %v796 = vrsqrt.pop %v780
        %v797 = vrsqrt.pop %v781
        %v798 = vrsqrt.pop %v782
        %v799 = vrsqrt.pop %v783
        %v800 = vrsqrt.pop %v784
        %v801 = vrsqrt.pop %v785
        %v802 = vrsqrt.pop %v786
        %v803 = vrsqrt.pop %v787
        %v804 = vrsqrt.pop %v788
        %v805 = vrsqrt.pop %v789
        %v806 = vrsqrt.pop %v790
        %v807 = vmul.f32 %v759, %v791
        %v808 = vmul.f32 %v760, %v792
        %v809 = vmul.f32 %v761, %v793
        %v810 = vmul.f32 %v762, %v794
        %v811 = vmul.f32 %v763, %v795
        %v812 = vmul.f32 %v764, %v796
        %v813 = vmul.f32 %v765, %v797
        %v814 = vmul.f32 %v766, %v798
        %v815 = vmul.f32 %v767, %v799
        %v816 = vmul.f32 %v768, %v800
        %v817 = vmul.f32 %v769, %v801
        %v818 = vmul.f32 %v770, %v802
        %v819 = vmul.f32 %v771, %v803
        %v820 = vmul.f32 %v772, %v804
        %v821 = vmul.f32 %v773, %v805
        %v822 = vmul.f32 %v774, %v806
        %v824 = vlaneseq
        %v825 = vshrl.u32 %v824, 7
        %v826 = vsub.s32 0, %v825
        %v827 = vrot.slane %v597, %v826
        %v829 = vmul.f32 %v807, %v827
        %v830 = vmul.f32 %v808, %v827
        %v831 = vmul.f32 %v809, %v827
        %v832 = vmul.f32 %v810, %v827
        %v833 = vmul.f32 %v811, %v827
        %v834 = vmul.f32 %v812, %v827
        %v835 = vmul.f32 %v813, %v827
        %v836 = vmul.f32 %v814, %v827
        %v837 = vmul.f32 %v815, %v827
        %v838 = vmul.f32 %v816, %v827
        %v839 = vmul.f32 %v817, %v827
        %v840 = vmul.f32 %v818, %v827
        %v841 = vmul.f32 %v819, %v827
        %v842 = vmul.f32 %v820, %v827
        %v843 = vmul.f32 %v821, %v827
        %v844 = vmul.f32 %v822, %v827
        %v846 = vlaneseq
        %v847 = vshrl.u32 %v846, 7
        %v848 = vsub.s32 0, %v847
        %v849 = vrot.slane %v598, %v848
        %v851 = vadd.f32 %v829, %v849
        %v852 = vadd.f32 %v830, %v849
        %v853 = vadd.f32 %v831, %v849
        %v854 = vadd.f32 %v832, %v849
        %v855 = vadd.f32 %v833, %v849
        %v856 = vadd.f32 %v834, %v849
        %v857 = vadd.f32 %v835, %v849
        %v858 = vadd.f32 %v836, %v849
        %v859 = vadd.f32 %v837, %v849
        %v860 = vadd.f32 %v838, %v849
        %v861 = vadd.f32 %v839, %v849
        %v862 = vadd.f32 %v840, %v849
        %v863 = vadd.f32 %v841, %v849
        %v864 = vadd.f32 %v842, %v849
        %v865 = vadd.f32 %v843, %v849
        %v866 = vadd.f32 %v844, %v849
        %v867 = vpack.c.bf16 %v852, %v851
        %v868 = vpack.c.bf16 %v854, %v853
        %v869 = vpack.c.bf16 %v856, %v855
        %v870 = vpack.c.bf16 %v858, %v857
        %v871 = vpack.c.bf16 %v860, %v859
        %v872 = vpack.c.bf16 %v862, %v861
        %v873 = vpack.c.bf16 %v864, %v863
        %v874 = vpack.c.bf16 %v866, %v865
        %v875 = vld [vmem:[%s5] sm:$0xf]
        %v876 = vld [vmem:[%s5 + $0x4] sm:$0xf]
        %v877 = vld [vmem:[%s5 + $0x8] sm:$0xf]
        %v878 = vld [vmem:[%s5 + $0xc] sm:$0xf]
        %v879 = vld [vmem:[%s5 + $0x10] sm:$0xf]
        %v880 = vld [vmem:[%s5 + $0x14] sm:$0xf]
        %v881 = vld [vmem:[%s5 + $0x18] sm:$0xf]
        %v882 = vld [vmem:[%s5 + $0x1c] sm:$0xf]
        %v883 = vld [vmem:[%s5 + $0x20] sm:$0xf]
        %v884 = vld [vmem:[%s5 + $0x24] sm:$0xf]
        %v885 = vld [vmem:[%s5 + $0x28] sm:$0xf]
        %v886 = vld [vmem:[%s5 + $0x2c] sm:$0xf]
        %v887 = vld [vmem:[%s5 + $0x30] sm:$0xf]
        %v888 = vld [vmem:[%s5 + $0x34] sm:$0xf]
        %v889 = vld [vmem:[%s5 + $0x38] sm:$0xf]
        %v890 = vld [vmem:[%s5 + $0x3c] sm:$0xf]
        %v891 = vld [vmem:[%s6] sm:$0x1]
        %v893 = vlaneseq
        %v894 = vshrl.u32 %v893, 7
        %v895 = vsub.s32 0, %v894
        %v896 = vrot.slane %v891, %v895
        %v914 = vunpack.c.l.b16 %v875
        %v915 = vunpack.c.l.b16 %v876
        %v916 = vunpack.c.l.b16 %v877
        %v917 = vunpack.c.l.b16 %v878
        %v918 = vunpack.c.l.b16 %v879
        %v919 = vunpack.c.l.b16 %v880
        %v920 = vunpack.c.l.b16 %v881
        %v921 = vunpack.c.l.b16 %v882
        %v922 = vunpack.c.l.b16 %v883
        %v923 = vunpack.c.l.b16 %v884
        %v924 = vunpack.c.l.b16 %v885
        %v925 = vunpack.c.l.b16 %v886
        %v926 = vunpack.c.l.b16 %v887
        %v927 = vunpack.c.l.b16 %v888
        %v928 = vunpack.c.l.b16 %v889
        %v929 = vunpack.c.l.b16 %v890
        %v930 = vpack.c.b16 %v915, %v914
        %v931 = vpack.c.b16 %v917, %v916
        %v932 = vpack.c.b16 %v919, %v918
        %v933 = vpack.c.b16 %v921, %v920
        %v934 = vpack.c.b16 %v923, %v922
        %v935 = vpack.c.b16 %v925, %v924
        %v936 = vpack.c.b16 %v927, %v926
        %v937 = vpack.c.b16 %v929, %v928
        %946 = vmatprep.subr.bf16.mxu0 0
        %947 = vmatpush1.bf16.msra.mxu0 %v937
        %948 = vmatprep.subr.bf16.mxu0 0
        %949 = vmatpush1.bf16.msra.mxu0 %v936
        %950 = vmatprep.subr.bf16.mxu0 0
        %951 = vmatpush1.bf16.msra.mxu0 %v935
        %952 = vmatprep.subr.bf16.mxu0 0
        %953 = vmatpush1.bf16.msra.mxu0 %v934
        %954 = vmatprep.subr.bf16.mxu0 0
        %955 = vmatpush1.bf16.msra.mxu0 %v933
        %956 = vmatprep.subr.bf16.mxu0 0
        %957 = vmatpush1.bf16.msra.mxu0 %v932
        %958 = vmatprep.subr.bf16.mxu0 0
        %959 = vmatpush1.bf16.msra.mxu0 %v931
        %960 = vmatprep.subr.bf16.mxu0 0
        %961 = vmatpush1.bf16.msra.mxu0 %v930
        %962 = vmatprep.subr.bf16.mxu0 0
        %963 = vmatpush2.bf16.msra.mxu0 0
        %964 = vmatprep.subr.bf16.mxu0 0
        %965 = vmatpush2.bf16.msra.mxu0 0
        %966 = vmatprep.subr.bf16.mxu0 0
        %967 = vmatpush2.bf16.msra.mxu0 0
        %968 = vmatprep.subr.bf16.mxu0 0
        %969 = vmatpush2.bf16.msra.mxu0 0
        %970 = vmatprep.subr.bf16.mxu0 0
        %971 = vmatpush2.bf16.msra.mxu0 0
        %972 = vmatprep.subr.bf16.mxu0 0
        %973 = vmatpush2.bf16.msra.mxu0 0
        %974 = vmatprep.subr.bf16.mxu0 0
        %975 = vmatpush2.bf16.msra.mxu0 0
        %976 = vmatprep.subr.bf16.mxu0 0
        %977 = vmatpush2.bf16.msra.mxu0 0
        %978 = vmatprep.mubr.bf16.mxu0 0
        %979 = vmatmul.mubr.bf16.gmra.mxu0 %v867
        %v980 = vpop.f32.mrf.mxu0
        %v981 = vadd.f32 %v896, %v980
        %v982 = vpop.f32.mrf.mxu0
        %v983 = vpop.f32.mrf.mxu0
        %v984 = vadd.f32 %v896, %v983
        %v985 = vpop.f32.mrf.mxu0
        %986 = vmatprep.mubr.bf16.mxu0 0
        %987 = vmatmul.mubr.bf16.gmra.mxu0 %v868
        %v988 = vpop.f32.mrf.mxu0
        %v989 = vadd.f32 %v896, %v988
        %v990 = vpop.f32.mrf.mxu0
        %v991 = vpop.f32.mrf.mxu0
        %v992 = vadd.f32 %v896, %v991
        %v993 = vpop.f32.mrf.mxu0
        %994 = vmatprep.mubr.bf16.mxu0 0
        %995 = vmatmul.mubr.bf16.gmra.mxu0 %v869
        %v996 = vpop.f32.mrf.mxu0
        %v997 = vadd.f32 %v896, %v996
        %v998 = vpop.f32.mrf.mxu0
        %v999 = vpop.f32.mrf.mxu0
        %v1000 = vadd.f32 %v896, %v999
        %v1001 = vpop.f32.mrf.mxu0
        %1002 = vmatprep.mubr.bf16.mxu0 0
        %1003 = vmatmul.mubr.bf16.gmra.mxu0 %v870
        %v1004 = vpop.f32.mrf.mxu0
        %v1005 = vadd.f32 %v896, %v1004
        %v1006 = vpop.f32.mrf.mxu0
        %v1007 = vpop.f32.mrf.mxu0
        %v1008 = vadd.f32 %v896, %v1007
        %v1009 = vpop.f32.mrf.mxu0
        %1010 = vmatprep.mubr.bf16.mxu0 0
        %1011 = vmatmul.mubr.bf16.gmra.mxu0 %v871
        %v1012 = vpop.f32.mrf.mxu0
        %v1013 = vadd.f32 %v896, %v1012
        %v1014 = vpop.f32.mrf.mxu0
        %v1015 = vpop.f32.mrf.mxu0
        %v1016 = vadd.f32 %v896, %v1015
        %v1017 = vpop.f32.mrf.mxu0
        %1018 = vmatprep.mubr.bf16.mxu0 0
        %1019 = vmatmul.mubr.bf16.gmra.mxu0 %v872
        %v1020 = vpop.f32.mrf.mxu0
        %v1021 = vadd.f32 %v896, %v1020
        %v1022 = vpop.f32.mrf.mxu0
        %v1023 = vpop.f32.mrf.mxu0
        %v1024 = vadd.f32 %v896, %v1023
        %v1025 = vpop.f32.mrf.mxu0
        %1026 = vmatprep.mubr.bf16.mxu0 0
        %1027 = vmatmul.mubr.bf16.gmra.mxu0 %v873
        %v1028 = vpop.f32.mrf.mxu0
        %v1029 = vadd.f32 %v896, %v1028
        %v1030 = vpop.f32.mrf.mxu0
        %v1031 = vpop.f32.mrf.mxu0
        %v1032 = vadd.f32 %v896, %v1031
        %v1033 = vpop.f32.mrf.mxu0
        %1034 = vmatprep.mubr.bf16.mxu0 0
        %1035 = vmatmul.mubr.bf16.gmra.mxu0 %v874
        %v1036 = vpop.f32.mrf.mxu0
        %v1037 = vadd.f32 %v896, %v1036
        %v1038 = vpop.f32.mrf.mxu0
        %v1039 = vpop.f32.mrf.mxu0
        %v1040 = vadd.f32 %v896, %v1039
        %v1041 = vpop.f32.mrf.mxu0
        %1042 = vdwg.mxu0
        %v1043 = vld [vmem:[#allocation2] sm:$0xff]
        %v1044 = vld [vmem:[#allocation2 + $0x8] sm:$0xff]
        %v1045 = vld [vmem:[#allocation2 + $0x10] sm:$0xff]
        %v1046 = vld [vmem:[#allocation2 + $0x18] sm:$0xff]
        %v1047 = vld [vmem:[#allocation2 + $0x20] sm:$0xff]
        %v1048 = vld [vmem:[#allocation2 + $0x28] sm:$0xff]
        %v1049 = vld [vmem:[#allocation2 + $0x30] sm:$0xff]
        %v1050 = vld [vmem:[#allocation2 + $0x38] sm:$0xff]
        %v1051 = vld [vmem:[#allocation2 + $0x40] sm:$0xff]
        %v1052 = vld [vmem:[#allocation2 + $0x48] sm:$0xff]
        %v1053 = vld [vmem:[#allocation2 + $0x50] sm:$0xff]
        %v1054 = vld [vmem:[#allocation2 + $0x58] sm:$0xff]
        %v1055 = vld [vmem:[#allocation2 + $0x60] sm:$0xff]
        %v1056 = vld [vmem:[#allocation2 + $0x68] sm:$0xff]
        %v1057 = vld [vmem:[#allocation2 + $0x70] sm:$0xff]
        %v1058 = vld [vmem:[#allocation2 + $0x78] sm:$0xff]
        %v1059 = vld [vmem:[%s547] sm:$0xf]
        %v1060 = vld [vmem:[%s547 + $0x4] sm:$0xf]
        %v1061 = vld [vmem:[%s547 + $0x8] sm:$0xf]
        %v1062 = vld [vmem:[%s547 + $0xc] sm:$0xf]
        %v1063 = vld [vmem:[%s547 + $0x10] sm:$0xf]
        %v1064 = vld [vmem:[%s547 + $0x14] sm:$0xf]
        %v1065 = vld [vmem:[%s547 + $0x18] sm:$0xf]
        %v1066 = vld [vmem:[%s547 + $0x1c] sm:$0xf]
        %v1067 = vld [vmem:[%s547 + $0x20] sm:$0xf]
        %v1068 = vld [vmem:[%s547 + $0x24] sm:$0xf]
        %v1069 = vld [vmem:[%s547 + $0x28] sm:$0xf]
        %v1070 = vld [vmem:[%s547 + $0x2c] sm:$0xf]
        %v1071 = vld [vmem:[%s547 + $0x30] sm:$0xf]
        %v1072 = vld [vmem:[%s547 + $0x34] sm:$0xf]
        %v1073 = vld [vmem:[%s547 + $0x38] sm:$0xf]
        %v1074 = vld [vmem:[%s547 + $0x3c] sm:$0xf]
        %v1075 = vpack.c.bf16 %v984, %v981
        %v1076 = vpack.c.bf16 %v992, %v989
        %v1077 = vpack.c.bf16 %v1000, %v997
        %v1078 = vpack.c.bf16 %v1008, %v1005
        %v1079 = vpack.c.bf16 %v1016, %v1013
        %v1080 = vpack.c.bf16 %v1024, %v1021
        %v1081 = vpack.c.bf16 %v1032, %v1029
        %v1082 = vpack.c.bf16 %v1040, %v1037
        %v1099 = vunpack.c.l.b16 %v1059
        %v1100 = vunpack.c.l.b16 %v1060
        %v1101 = vunpack.c.l.b16 %v1061
        %v1102 = vunpack.c.l.b16 %v1062
        %v1103 = vunpack.c.l.b16 %v1063
        %v1104 = vunpack.c.l.b16 %v1064
        %v1105 = vunpack.c.l.b16 %v1065
        %v1106 = vunpack.c.l.b16 %v1066
        %v1107 = vunpack.c.l.b16 %v1067
        %v1108 = vunpack.c.l.b16 %v1068
        %v1109 = vunpack.c.l.b16 %v1069
        %v1110 = vunpack.c.l.b16 %v1070
        %v1111 = vunpack.c.l.b16 %v1071
        %v1112 = vunpack.c.l.b16 %v1072
        %v1113 = vunpack.c.l.b16 %v1073
        %v1114 = vunpack.c.l.b16 %v1074
        %v1115 = vpack.c.b16 %v1100, %v1099
        %v1116 = vpack.c.b16 %v1102, %v1101
        %v1117 = vpack.c.b16 %v1104, %v1103
        %v1118 = vpack.c.b16 %v1106, %v1105
        %v1119 = vpack.c.b16 %v1108, %v1107
        %v1120 = vpack.c.b16 %v1110, %v1109
        %v1121 = vpack.c.b16 %v1112, %v1111
        %v1122 = vpack.c.b16 %v1114, %v1113
        %1131 = vmatprep.subr.bf16.mxu0 0
        %1132 = vmatpush1.bf16.msra.mxu0 %v1082
        %1133 = vmatprep.subr.bf16.mxu0 0
        %1134 = vmatpush1.bf16.msra.mxu0 %v1081
        %1135 = vmatprep.subr.bf16.mxu0 0
        %1136 = vmatpush1.bf16.msra.mxu0 %v1080
        %1137 = vmatprep.subr.bf16.mxu0 0
        %1138 = vmatpush1.bf16.msra.mxu0 %v1079
        %1139 = vmatprep.subr.bf16.mxu0 0
        %1140 = vmatpush1.bf16.msra.mxu0 %v1078
        %1141 = vmatprep.subr.bf16.mxu0 0
        %1142 = vmatpush1.bf16.msra.mxu0 %v1077
        %1143 = vmatprep.subr.bf16.mxu0 0
        %1144 = vmatpush1.bf16.msra.mxu0 %v1076
        %1145 = vmatprep.subr.bf16.mxu0 0
        %1146 = vmatpush1.bf16.msra.mxu0 %v1075
        %1147 = vmatprep.subr.bf16.mxu0 0
        %1148 = vmatpush2.bf16.msra.mxu0 0
        %1149 = vmatprep.subr.bf16.mxu0 0
        %1150 = vmatpush2.bf16.msra.mxu0 0
        %1151 = vmatprep.subr.bf16.mxu0 0
        %1152 = vmatpush2.bf16.msra.mxu0 0
        %1153 = vmatprep.subr.bf16.mxu0 0
        %1154 = vmatpush2.bf16.msra.mxu0 0
        %1155 = vmatprep.subr.bf16.mxu0 0
        %1156 = vmatpush2.bf16.msra.mxu0 0
        %1157 = vmatprep.subr.bf16.mxu0 0
        %1158 = vmatpush2.bf16.msra.mxu0 0
        %1159 = vmatprep.subr.bf16.mxu0 0
        %1160 = vmatpush2.bf16.msra.mxu0 0
        %1161 = vmatprep.subr.bf16.mxu0 0
        %1162 = vmatpush2.bf16.msra.mxu0 0
        %1163 = vmatprep.mubr.bf16.mxu0 0
        %1164 = vmatmul.mubr.bf16.gmra.mxu0 %v1115
        %v1165 = vpop.f32.mrf.mxu0
        %v1166 = vadd.f32 0.0, %v1165
        %v1167 = vpop.f32.mrf.mxu0
        %v1168 = vpop.f32.mrf.mxu0
        %v1169 = vadd.f32 0.0, %v1168
        %v1170 = vpop.f32.mrf.mxu0
        %1171 = vmatprep.mubr.bf16.mxu0 0
        %1172 = vmatmul.mubr.bf16.gmra.mxu0 %v1116
        %v1173 = vpop.f32.mrf.mxu0
        %v1174 = vadd.f32 0.0, %v1173
        %v1175 = vpop.f32.mrf.mxu0
        %v1176 = vpop.f32.mrf.mxu0
        %v1177 = vadd.f32 0.0, %v1176
        %v1178 = vpop.f32.mrf.mxu0
        %1179 = vmatprep.mubr.bf16.mxu0 0
        %1180 = vmatmul.mubr.bf16.gmra.mxu0 %v1117
        %v1181 = vpop.f32.mrf.mxu0
        %v1182 = vadd.f32 0.0, %v1181
        %v1183 = vpop.f32.mrf.mxu0
        %v1184 = vpop.f32.mrf.mxu0
        %v1185 = vadd.f32 0.0, %v1184
        %v1186 = vpop.f32.mrf.mxu0
        %1187 = vmatprep.mubr.bf16.mxu0 0
        %1188 = vmatmul.mubr.bf16.gmra.mxu0 %v1118
        %v1189 = vpop.f32.mrf.mxu0
        %v1190 = vadd.f32 0.0, %v1189
        %v1191 = vpop.f32.mrf.mxu0
        %v1192 = vpop.f32.mrf.mxu0
        %v1193 = vadd.f32 0.0, %v1192
        %v1194 = vpop.f32.mrf.mxu0
        %1195 = vmatprep.mubr.bf16.mxu0 0
        %1196 = vmatmul.mubr.bf16.gmra.mxu0 %v1119
        %v1197 = vpop.f32.mrf.mxu0
        %v1198 = vadd.f32 0.0, %v1197
        %v1199 = vpop.f32.mrf.mxu0
        %v1200 = vpop.f32.mrf.mxu0
        %v1201 = vadd.f32 0.0, %v1200
        %v1202 = vpop.f32.mrf.mxu0
        %1203 = vmatprep.mubr.bf16.mxu0 0
        %1204 = vmatmul.mubr.bf16.gmra.mxu0 %v1120
        %v1205 = vpop.f32.mrf.mxu0
        %v1206 = vadd.f32 0.0, %v1205
        %v1207 = vpop.f32.mrf.mxu0
        %v1208 = vpop.f32.mrf.mxu0
        %v1209 = vadd.f32 0.0, %v1208
        %v1210 = vpop.f32.mrf.mxu0
        %1211 = vmatprep.mubr.bf16.mxu0 0
        %1212 = vmatmul.mubr.bf16.gmra.mxu0 %v1121
        %v1213 = vpop.f32.mrf.mxu0
        %v1214 = vadd.f32 0.0, %v1213
        %v1215 = vpop.f32.mrf.mxu0
        %v1216 = vpop.f32.mrf.mxu0
        %v1217 = vadd.f32 0.0, %v1216
        %v1218 = vpop.f32.mrf.mxu0
        %1219 = vmatprep.mubr.bf16.mxu0 0
        %1220 = vmatmul.mubr.bf16.gmra.mxu0 %v1122
        %v1221 = vpop.f32.mrf.mxu0
        %v1222 = vadd.f32 0.0, %v1221
        %v1223 = vpop.f32.mrf.mxu0
        %v1224 = vpop.f32.mrf.mxu0
        %v1225 = vadd.f32 0.0, %v1224
        %v1226 = vpop.f32.mrf.mxu0
        %1227 = vdwg.mxu0
        %v1228 = vadd.f32 %v1043, %v1166
        %v1229 = vadd.f32 %v1044, %v1169
        %v1230 = vadd.f32 %v1045, %v1174
        %v1231 = vadd.f32 %v1046, %v1177
        %v1232 = vadd.f32 %v1047, %v1182
        %v1233 = vadd.f32 %v1048, %v1185
        %v1234 = vadd.f32 %v1049, %v1190
        %v1235 = vadd.f32 %v1050, %v1193
        %v1236 = vadd.f32 %v1051, %v1198
        %v1237 = vadd.f32 %v1052, %v1201
        %v1238 = vadd.f32 %v1053, %v1206
        %v1239 = vadd.f32 %v1054, %v1209
        %v1240 = vadd.f32 %v1055, %v1214
        %v1241 = vadd.f32 %v1056, %v1217
        %v1242 = vadd.f32 %v1057, %v1222
        %v1243 = vadd.f32 %v1058, %v1225
        %1244 = vst [vmem:[#allocation2] sm:$0xff] %v1228
        %1245 = vst [vmem:[#allocation2 + $0x8] sm:$0xff] %v1229
        %1246 = vst [vmem:[#allocation2 + $0x10] sm:$0xff] %v1230
        %1247 = vst [vmem:[#allocation2 + $0x18] sm:$0xff] %v1231
        %1248 = vst [vmem:[#allocation2 + $0x20] sm:$0xff] %v1232
        %1249 = vst [vmem:[#allocation2 + $0x28] sm:$0xff] %v1233
        %1250 = vst [vmem:[#allocation2 + $0x30] sm:$0xff] %v1234
        %1251 = vst [vmem:[#allocation2 + $0x38] sm:$0xff] %v1235
        %1252 = vst [vmem:[#allocation2 + $0x40] sm:$0xff] %v1236
        %1253 = vst [vmem:[#allocation2 + $0x48] sm:$0xff] %v1237
        %1254 = vst [vmem:[#allocation2 + $0x50] sm:$0xff] %v1238
        %1255 = vst [vmem:[#allocation2 + $0x58] sm:$0xff] %v1239
        %1256 = vst [vmem:[#allocation2 + $0x60] sm:$0xff] %v1240
        %1257 = vst [vmem:[#allocation2 + $0x68] sm:$0xff] %v1241
        %1258 = vst [vmem:[#allocation2 + $0x70] sm:$0xff] %v1242
        %1259 = vst [vmem:[#allocation2 + $0x78] sm:$0xff] %v1243
        // Predicated region
        $region77: #{hgcb_forward.3} parent=71 // pred_check
          %p1260 = pneg %p561
        $region78: #{hgcb_forward.3} parent=71 // pred_check_branch
          %1262 = sbr.rel (%p1260) target = $region80
        $region79: #{hgcb_forward.3} parent=71 // pred_region
          %v1263 = vld [vmem:[#allocation2] sm:$0xff]
          %v1264 = vld [vmem:[#allocation2 + $0x8] sm:$0xff]
          %v1265 = vld [vmem:[#allocation2 + $0x10] sm:$0xff]
          %v1266 = vld [vmem:[#allocation2 + $0x18] sm:$0xff]
          %v1267 = vld [vmem:[#allocation2 + $0x20] sm:$0xff]
          %v1268 = vld [vmem:[#allocation2 + $0x28] sm:$0xff]
          %v1269 = vld [vmem:[#allocation2 + $0x30] sm:$0xff]
          %v1270 = vld [vmem:[#allocation2 + $0x38] sm:$0xff]
          %v1271 = vld [vmem:[#allocation2 + $0x40] sm:$0xff]
          %v1272 = vld [vmem:[#allocation2 + $0x48] sm:$0xff]
          %v1273 = vld [vmem:[#allocation2 + $0x50] sm:$0xff]
          %v1274 = vld [vmem:[#allocation2 + $0x58] sm:$0xff]
          %v1275 = vld [vmem:[#allocation2 + $0x60] sm:$0xff]
          %v1276 = vld [vmem:[#allocation2 + $0x68] sm:$0xff]
          %v1277 = vld [vmem:[#allocation2 + $0x70] sm:$0xff]
          %v1278 = vld [vmem:[#allocation2 + $0x78] sm:$0xff]
          %v1279 = vld [vmem:[%s557] sm:$0xff]
          %v1280 = vld [vmem:[%s557 + $0x8] sm:$0xff]
          %v1281 = vld [vmem:[%s557 + $0x10] sm:$0xff]
          %v1282 = vld [vmem:[%s557 + $0x18] sm:$0xff]
          %v1283 = vld [vmem:[%s557 + $0x20] sm:$0xff]
          %v1284 = vld [vmem:[%s557 + $0x28] sm:$0xff]
          %v1285 = vld [vmem:[%s557 + $0x30] sm:$0xff]
          %v1286 = vld [vmem:[%s557 + $0x38] sm:$0xff]
          %v1287 = vld [vmem:[%s557 + $0x40] sm:$0xff]
          %v1288 = vld [vmem:[%s557 + $0x48] sm:$0xff]
          %v1289 = vld [vmem:[%s557 + $0x50] sm:$0xff]
          %v1290 = vld [vmem:[%s557 + $0x58] sm:$0xff]
          %v1291 = vld [vmem:[%s557 + $0x60] sm:$0xff]
          %v1292 = vld [vmem:[%s557 + $0x68] sm:$0xff]
          %v1293 = vld [vmem:[%s557 + $0x70] sm:$0xff]
          %v1294 = vld [vmem:[%s557 + $0x78] sm:$0xff]
          %v1295 = vadd.f32 %v1263, %v1279
          %v1296 = vadd.f32 %v1264, %v1280
          %v1297 = vadd.f32 %v1265, %v1281
          %v1298 = vadd.f32 %v1266, %v1282
          %v1299 = vadd.f32 %v1267, %v1283
          %v1300 = vadd.f32 %v1268, %v1284
          %v1301 = vadd.f32 %v1269, %v1285
          %v1302 = vadd.f32 %v1270, %v1286
          %v1303 = vadd.f32 %v1271, %v1287
          %v1304 = vadd.f32 %v1272, %v1288
          %v1305 = vadd.f32 %v1273, %v1289
          %v1306 = vadd.f32 %v1274, %v1290
          %v1307 = vadd.f32 %v1275, %v1291
          %v1308 = vadd.f32 %v1276, %v1292
          %v1309 = vadd.f32 %v1277, %v1293
          %v1310 = vadd.f32 %v1278, %v1294
          %v1311 = vld [vmem:[%s7] sm:$0x1]
          %v1312 = vld [vmem:[%s8] sm:$0x1]
          %1313 = vadd.xlane.f32.xlu0 %v1295
          %v1314 = vpop.xlane.xlu0 %1313
          %1315 = vadd.xlane.f32.xlu0 %v1296
          %v1316 = vpop.xlane.xlu0 %1315
          %1317 = vadd.xlane.f32.xlu0 %v1297
          %v1318 = vpop.xlane.xlu0 %1317
          %1319 = vadd.xlane.f32.xlu0 %v1298
          %v1320 = vpop.xlane.xlu0 %1319
          %1321 = vadd.xlane.f32.xlu0 %v1299
          %v1322 = vpop.xlane.xlu0 %1321
          %1323 = vadd.xlane.f32.xlu0 %v1300
          %v1324 = vpop.xlane.xlu0 %1323
          %1325 = vadd.xlane.f32.xlu0 %v1301
          %v1326 = vpop.xlane.xlu0 %1325
          %1327 = vadd.xlane.f32.xlu0 %v1302
          %v1328 = vpop.xlane.xlu0 %1327
          %1329 = vadd.xlane.f32.xlu0 %v1303
          %v1330 = vpop.xlane.xlu0 %1329
          %1331 = vadd.xlane.f32.xlu0 %v1304
          %v1332 = vpop.xlane.xlu0 %1331
          %1333 = vadd.xlane.f32.xlu0 %v1305
          %v1334 = vpop.xlane.xlu0 %1333
          %1335 = vadd.xlane.f32.xlu0 %v1306
          %v1336 = vpop.xlane.xlu0 %1335
          %1337 = vadd.xlane.f32.xlu0 %v1307
          %v1338 = vpop.xlane.xlu0 %1337
          %1339 = vadd.xlane.f32.xlu0 %v1308
          %v1340 = vpop.xlane.xlu0 %1339
          %1341 = vadd.xlane.f32.xlu0 %v1309
          %v1342 = vpop.xlane.xlu0 %1341
          %1343 = vadd.xlane.f32.xlu0 %v1310
          %v1344 = vpop.xlane.xlu0 %1343
          %v1345 = vmul.f32 %v1295, %v1295
          %v1346 = vmul.f32 %v1296, %v1296
          %v1347 = vmul.f32 %v1297, %v1297
          %v1348 = vmul.f32 %v1298, %v1298
          %v1349 = vmul.f32 %v1299, %v1299
          %v1350 = vmul.f32 %v1300, %v1300
          %v1351 = vmul.f32 %v1301, %v1301
          %v1352 = vmul.f32 %v1302, %v1302
          %v1353 = vmul.f32 %v1303, %v1303
          %v1354 = vmul.f32 %v1304, %v1304
          %v1355 = vmul.f32 %v1305, %v1305
          %v1356 = vmul.f32 %v1306, %v1306
          %v1357 = vmul.f32 %v1307, %v1307
          %v1358 = vmul.f32 %v1308, %v1308
          %v1359 = vmul.f32 %v1309, %v1309
          %v1360 = vmul.f32 %v1310, %v1310
          %1361 = vadd.xlane.f32.xlu0 %v1345
          %v1362 = vpop.xlane.xlu0 %1361
          %1363 = vadd.xlane.f32.xlu0 %v1346
          %v1364 = vpop.xlane.xlu0 %1363
          %1365 = vadd.xlane.f32.xlu0 %v1347
          %v1366 = vpop.xlane.xlu0 %1365
          %1367 = vadd.xlane.f32.xlu0 %v1348
          %v1368 = vpop.xlane.xlu0 %1367
          %1369 = vadd.xlane.f32.xlu0 %v1349
          %v1370 = vpop.xlane.xlu0 %1369
          %1371 = vadd.xlane.f32.xlu0 %v1350
          %v1372 = vpop.xlane.xlu0 %1371
          %1373 = vadd.xlane.f32.xlu0 %v1351
          %v1374 = vpop.xlane.xlu0 %1373
          %1375 = vadd.xlane.f32.xlu0 %v1352
          %v1376 = vpop.xlane.xlu0 %1375
          %1377 = vadd.xlane.f32.xlu0 %v1353
          %v1378 = vpop.xlane.xlu0 %1377
          %1379 = vadd.xlane.f32.xlu0 %v1354
          %v1380 = vpop.xlane.xlu0 %1379
          %1381 = vadd.xlane.f32.xlu0 %v1355
          %v1382 = vpop.xlane.xlu0 %1381
          %1383 = vadd.xlane.f32.xlu0 %v1356
          %v1384 = vpop.xlane.xlu0 %1383
          %1385 = vadd.xlane.f32.xlu0 %v1357
          %v1386 = vpop.xlane.xlu0 %1385
          %1387 = vadd.xlane.f32.xlu0 %v1358
          %v1388 = vpop.xlane.xlu0 %1387
          %1389 = vadd.xlane.f32.xlu0 %v1359
          %v1390 = vpop.xlane.xlu0 %1389
          %1391 = vadd.xlane.f32.xlu0 %v1360
          %v1392 = vpop.xlane.xlu0 %1391
          %v1393 = vmul.f32 %v1314, 0.0078125
          %v1394 = vmul.f32 %v1316, 0.0078125
          %v1395 = vmul.f32 %v1318, 0.0078125
          %v1396 = vmul.f32 %v1320, 0.0078125
          %v1397 = vmul.f32 %v1322, 0.0078125
          %v1398 = vmul.f32 %v1324, 0.0078125
          %v1399 = vmul.f32 %v1326, 0.0078125
          %v1400 = vmul.f32 %v1328, 0.0078125
          %v1401 = vmul.f32 %v1330, 0.0078125
          %v1402 = vmul.f32 %v1332, 0.0078125
          %v1403 = vmul.f32 %v1334, 0.0078125
          %v1404 = vmul.f32 %v1336, 0.0078125
          %v1405 = vmul.f32 %v1338, 0.0078125
          %v1406 = vmul.f32 %v1340, 0.0078125
          %v1407 = vmul.f32 %v1342, 0.0078125
          %v1408 = vmul.f32 %v1344, 0.0078125
          %v1409 = vmul.f32 %v1362, 0.0078125
          %v1410 = vmul.f32 %v1364, 0.0078125
          %v1411 = vmul.f32 %v1366, 0.0078125
          %v1412 = vmul.f32 %v1368, 0.0078125
          %v1413 = vmul.f32 %v1370, 0.0078125
          %v1414 = vmul.f32 %v1372, 0.0078125
          %v1415 = vmul.f32 %v1374, 0.0078125
          %v1416 = vmul.f32 %v1376, 0.0078125
          %v1417 = vmul.f32 %v1378, 0.0078125
          %v1418 = vmul.f32 %v1380, 0.0078125
          %v1419 = vmul.f32 %v1382, 0.0078125
          %v1420 = vmul.f32 %v1384, 0.0078125
          %v1421 = vmul.f32 %v1386, 0.0078125
          %v1422 = vmul.f32 %v1388, 0.0078125
          %v1423 = vmul.f32 %v1390, 0.0078125
          %v1424 = vmul.f32 %v1392, 0.0078125
          %v1425 = vmul.f32 %v1393, %v1393
          %v1426 = vmul.f32 %v1394, %v1394
          %v1427 = vmul.f32 %v1395, %v1395
          %v1428 = vmul.f32 %v1396, %v1396
          %v1429 = vmul.f32 %v1397, %v1397
          %v1430 = vmul.f32 %v1398, %v1398
          %v1431 = vmul.f32 %v1399, %v1399
          %v1432 = vmul.f32 %v1400, %v1400
          %v1433 = vmul.f32 %v1401, %v1401
          %v1434 = vmul.f32 %v1402, %v1402
          %v1435 = vmul.f32 %v1403, %v1403
          %v1436 = vmul.f32 %v1404, %v1404
          %v1437 = vmul.f32 %v1405, %v1405
          %v1438 = vmul.f32 %v1406, %v1406
          %v1439 = vmul.f32 %v1407, %v1407
          %v1440 = vmul.f32 %v1408, %v1408
          %v1441 = vsub.f32 %v1409, %v1425
          %v1442 = vsub.f32 %v1410, %v1426
          %v1443 = vsub.f32 %v1411, %v1427
          %v1444 = vsub.f32 %v1412, %v1428
          %v1445 = vsub.f32 %v1413, %v1429
          %v1446 = vsub.f32 %v1414, %v1430
          %v1447 = vsub.f32 %v1415, %v1431
          %v1448 = vsub.f32 %v1416, %v1432
          %v1449 = vsub.f32 %v1417, %v1433
          %v1450 = vsub.f32 %v1418, %v1434
          %v1451 = vsub.f32 %v1419, %v1435
          %v1452 = vsub.f32 %v1420, %v1436
          %v1453 = vsub.f32 %v1421, %v1437
          %v1454 = vsub.f32 %v1422, %v1438
          %v1455 = vsub.f32 %v1423, %v1439
          %v1456 = vsub.f32 %v1424, %v1440
          %v1457 = vmax.f32 %v1441, 0.0
          %v1458 = vmax.f32 %v1442, 0.0
          %v1459 = vmax.f32 %v1443, 0.0
          %v1460 = vmax.f32 %v1444, 0.0
          %v1461 = vmax.f32 %v1445, 0.0
          %v1462 = vmax.f32 %v1446, 0.0
          %v1463 = vmax.f32 %v1447, 0.0
          %v1464 = vmax.f32 %v1448, 0.0
          %v1465 = vmax.f32 %v1449, 0.0
          %v1466 = vmax.f32 %v1450, 0.0
          %v1467 = vmax.f32 %v1451, 0.0
          %v1468 = vmax.f32 %v1452, 0.0
          %v1469 = vmax.f32 %v1453, 0.0
          %v1470 = vmax.f32 %v1454, 0.0
          %v1471 = vmax.f32 %v1455, 0.0
          %v1472 = vmax.f32 %v1456, 0.0
          %v1473 = vsub.f32 %v1295, %v1393
          %v1474 = vsub.f32 %v1296, %v1394
          %v1475 = vsub.f32 %v1297, %v1395
          %v1476 = vsub.f32 %v1298, %v1396
          %v1477 = vsub.f32 %v1299, %v1397
          %v1478 = vsub.f32 %v1300, %v1398
          %v1479 = vsub.f32 %v1301, %v1399
          %v1480 = vsub.f32 %v1302, %v1400
          %v1481 = vsub.f32 %v1303, %v1401
          %v1482 = vsub.f32 %v1304, %v1402
          %v1483 = vsub.f32 %v1305, %v1403
          %v1484 = vsub.f32 %v1306, %v1404
          %v1485 = vsub.f32 %v1307, %v1405
          %v1486 = vsub.f32 %v1308, %v1406
          %v1487 = vsub.f32 %v1309, %v1407
          %v1488 = vsub.f32 %v1310, %v1408
          %v1489 = vadd.f32 %v1457, 1e-05
          %v1490 = vadd.f32 %v1458, 1e-05
          %v1491 = vadd.f32 %v1459, 1e-05
          %v1492 = vadd.f32 %v1460, 1e-05
          %v1493 = vadd.f32 %v1461, 1e-05
          %v1494 = vadd.f32 %v1462, 1e-05
          %v1495 = vadd.f32 %v1463, 1e-05
          %v1496 = vadd.f32 %v1464, 1e-05
          %v1497 = vadd.f32 %v1465, 1e-05
          %v1498 = vadd.f32 %v1466, 1e-05
          %v1499 = vadd.f32 %v1467, 1e-05
          %v1500 = vadd.f32 %v1468, 1e-05
          %v1501 = vadd.f32 %v1469, 1e-05
          %v1502 = vadd.f32 %v1470, 1e-05
          %v1503 = vadd.f32 %v1471, 1e-05
          %v1504 = vadd.f32 %v1472, 1e-05
          %v1505 = vrsqrt.pop %v1489
          %v1506 = vrsqrt.pop %v1490
          %v1507 = vrsqrt.pop %v1491
          %v1508 = vrsqrt.pop %v1492
          %v1509 = vrsqrt.pop %v1493
          %v1510 = vrsqrt.pop %v1494
          %v1511 = vrsqrt.pop %v1495
          %v1512 = vrsqrt.pop %v1496
          %v1513 = vrsqrt.pop %v1497
          %v1514 = vrsqrt.pop %v1498
          %v1515 = vrsqrt.pop %v1499
          %v1516 = vrsqrt.pop %v1500
          %v1517 = vrsqrt.pop %v1501
          %v1518 = vrsqrt.pop %v1502
          %v1519 = vrsqrt.pop %v1503
          %v1520 = vrsqrt.pop %v1504
          %v1521 = vmul.f32 %v1473, %v1505
          %v1522 = vmul.f32 %v1474, %v1506
          %v1523 = vmul.f32 %v1475, %v1507
          %v1524 = vmul.f32 %v1476, %v1508
          %v1525 = vmul.f32 %v1477, %v1509
          %v1526 = vmul.f32 %v1478, %v1510
          %v1527 = vmul.f32 %v1479, %v1511
          %v1528 = vmul.f32 %v1480, %v1512
          %v1529 = vmul.f32 %v1481, %v1513
          %v1530 = vmul.f32 %v1482, %v1514
          %v1531 = vmul.f32 %v1483, %v1515
          %v1532 = vmul.f32 %v1484, %v1516
          %v1533 = vmul.f32 %v1485, %v1517
          %v1534 = vmul.f32 %v1486, %v1518
          %v1535 = vmul.f32 %v1487, %v1519
          %v1536 = vmul.f32 %v1488, %v1520
          %v1538 = vlaneseq
          %v1539 = vshrl.u32 %v1538, 7
          %v1540 = vsub.s32 0, %v1539
          %v1541 = vrot.slane %v1311, %v1540
          %v1543 = vmul.f32 %v1521, %v1541
          %v1544 = vmul.f32 %v1522, %v1541
          %v1545 = vmul.f32 %v1523, %v1541
          %v1546 = vmul.f32 %v1524, %v1541
          %v1547 = vmul.f32 %v1525, %v1541
          %v1548 = vmul.f32 %v1526, %v1541
          %v1549 = vmul.f32 %v1527, %v1541
          %v1550 = vmul.f32 %v1528, %v1541
          %v1551 = vmul.f32 %v1529, %v1541
          %v1552 = vmul.f32 %v1530, %v1541
          %v1553 = vmul.f32 %v1531, %v1541
          %v1554 = vmul.f32 %v1532, %v1541
          %v1555 = vmul.f32 %v1533, %v1541
          %v1556 = vmul.f32 %v1534, %v1541
          %v1557 = vmul.f32 %v1535, %v1541
          %v1558 = vmul.f32 %v1536, %v1541
          %v1560 = vlaneseq
          %v1561 = vshrl.u32 %v1560, 7
          %v1562 = vsub.s32 0, %v1561
          %v1563 = vrot.slane %v1312, %v1562
          %v1565 = vadd.f32 %v1543, %v1563
          %v1566 = vadd.f32 %v1544, %v1563
          %v1567 = vadd.f32 %v1545, %v1563
          %v1568 = vadd.f32 %v1546, %v1563
          %v1569 = vadd.f32 %v1547, %v1563
          %v1570 = vadd.f32 %v1548, %v1563
          %v1571 = vadd.f32 %v1549, %v1563
          %v1572 = vadd.f32 %v1550, %v1563
          %v1573 = vadd.f32 %v1551, %v1563
          %v1574 = vadd.f32 %v1552, %v1563
          %v1575 = vadd.f32 %v1553, %v1563
          %v1576 = vadd.f32 %v1554, %v1563
          %v1577 = vadd.f32 %v1555, %v1563
          %v1578 = vadd.f32 %v1556, %v1563
          %v1579 = vadd.f32 %v1557, %v1563
          %v1580 = vadd.f32 %v1558, %v1563
          %v1581 = vpack.c.bf16 %v1566, %v1565
          %v1582 = vpack.c.bf16 %v1568, %v1567
          %v1583 = vpack.c.bf16 %v1570, %v1569
          %v1584 = vpack.c.bf16 %v1572, %v1571
          %v1585 = vpack.c.bf16 %v1574, %v1573
          %v1586 = vpack.c.bf16 %v1576, %v1575
          %v1587 = vpack.c.bf16 %v1578, %v1577
          %v1588 = vpack.c.bf16 %v1580, %v1579
          %v1589 = vld [vmem:[%s9] sm:$0xf]
          %v1590 = vld [vmem:[%s9 + $0x4] sm:$0xf]
          %v1591 = vld [vmem:[%s9 + $0x8] sm:$0xf]
          %v1592 = vld [vmem:[%s9 + $0xc] sm:$0xf]
          %v1593 = vld [vmem:[%s9 + $0x10] sm:$0xf]
          %v1594 = vld [vmem:[%s9 + $0x14] sm:$0xf]
          %v1595 = vld [vmem:[%s9 + $0x18] sm:$0xf]
          %v1596 = vld [vmem:[%s9 + $0x1c] sm:$0xf]
          %v1597 = vld [vmem:[%s9 + $0x20] sm:$0xf]
          %v1598 = vld [vmem:[%s9 + $0x24] sm:$0xf]
          %v1599 = vld [vmem:[%s9 + $0x28] sm:$0xf]
          %v1600 = vld [vmem:[%s9 + $0x2c] sm:$0xf]
          %v1601 = vld [vmem:[%s9 + $0x30] sm:$0xf]
          %v1602 = vld [vmem:[%s9 + $0x34] sm:$0xf]
          %v1603 = vld [vmem:[%s9 + $0x38] sm:$0xf]
          %v1604 = vld [vmem:[%s9 + $0x3c] sm:$0xf]
          %v1605 = vld [vmem:[%s10] sm:$0x1]
          %v1607 = vlaneseq
          %v1608 = vshrl.u32 %v1607, 7
          %v1609 = vsub.s32 0, %v1608
          %v1610 = vrot.slane %v1605, %v1609
          %v1628 = vunpack.c.l.b16 %v1589
          %v1629 = vunpack.c.l.b16 %v1590
          %v1630 = vunpack.c.l.b16 %v1591
          %v1631 = vunpack.c.l.b16 %v1592
          %v1632 = vunpack.c.l.b16 %v1593
          %v1633 = vunpack.c.l.b16 %v1594
          %v1634 = vunpack.c.l.b16 %v1595
          %v1635 = vunpack.c.l.b16 %v1596
          %v1636 = vunpack.c.l.b16 %v1597
          %v1637 = vunpack.c.l.b16 %v1598
          %v1638 = vunpack.c.l.b16 %v1599
          %v1639 = vunpack.c.l.b16 %v1600
          %v1640 = vunpack.c.l.b16 %v1601
          %v1641 = vunpack.c.l.b16 %v1602
          %v1642 = vunpack.c.l.b16 %v1603
          %v1643 = vunpack.c.l.b16 %v1604
          %v1644 = vpack.c.b16 %v1629, %v1628
          %v1645 = vpack.c.b16 %v1631, %v1630
          %v1646 = vpack.c.b16 %v1633, %v1632
          %v1647 = vpack.c.b16 %v1635, %v1634
          %v1648 = vpack.c.b16 %v1637, %v1636
          %v1649 = vpack.c.b16 %v1639, %v1638
          %v1650 = vpack.c.b16 %v1641, %v1640
          %v1651 = vpack.c.b16 %v1643, %v1642
          %1660 = vmatprep.subr.bf16.mxu0 0
          %1661 = vmatpush1.bf16.msra.mxu0 %v1651
          %1662 = vmatprep.subr.bf16.mxu0 0
          %1663 = vmatpush1.bf16.msra.mxu0 %v1650
          %1664 = vmatprep.subr.bf16.mxu0 0
          %1665 = vmatpush1.bf16.msra.mxu0 %v1649
          %1666 = vmatprep.subr.bf16.mxu0 0
          %1667 = vmatpush1.bf16.msra.mxu0 %v1648
          %1668 = vmatprep.subr.bf16.mxu0 0
          %1669 = vmatpush1.bf16.msra.mxu0 %v1647
          %1670 = vmatprep.subr.bf16.mxu0 0
          %1671 = vmatpush1.bf16.msra.mxu0 %v1646
          %1672 = vmatprep.subr.bf16.mxu0 0
          %1673 = vmatpush1.bf16.msra.mxu0 %v1645
          %1674 = vmatprep.subr.bf16.mxu0 0
          %1675 = vmatpush1.bf16.msra.mxu0 %v1644
          %1676 = vmatprep.subr.bf16.mxu0 0
          %1677 = vmatpush2.bf16.msra.mxu0 0
          %1678 = vmatprep.subr.bf16.mxu0 0
          %1679 = vmatpush2.bf16.msra.mxu0 0
          %1680 = vmatprep.subr.bf16.mxu0 0
          %1681 = vmatpush2.bf16.msra.mxu0 0
          %1682 = vmatprep.subr.bf16.mxu0 0
          %1683 = vmatpush2.bf16.msra.mxu0 0
          %1684 = vmatprep.subr.bf16.mxu0 0
          %1685 = vmatpush2.bf16.msra.mxu0 0
          %1686 = vmatprep.subr.bf16.mxu0 0
          %1687 = vmatpush2.bf16.msra.mxu0 0
          %1688 = vmatprep.subr.bf16.mxu0 0
          %1689 = vmatpush2.bf16.msra.mxu0 0
          %1690 = vmatprep.subr.bf16.mxu0 0
          %1691 = vmatpush2.bf16.msra.mxu0 0
          %1692 = vmatprep.mubr.bf16.mxu0 0
          %1693 = vmatmul.mubr.bf16.gmra.mxu0 %v1581
          %v1694 = vpop.f32.mrf.mxu0
          %v1695 = vadd.f32 %v1610, %v1694
          %v1696 = vpop.f32.mrf.mxu0
          %v1697 = vpop.f32.mrf.mxu0
          %v1698 = vadd.f32 %v1610, %v1697
          %v1699 = vpop.f32.mrf.mxu0
          %1700 = vmatprep.mubr.bf16.mxu0 0
          %1701 = vmatmul.mubr.bf16.gmra.mxu0 %v1582
          %v1702 = vpop.f32.mrf.mxu0
          %v1703 = vadd.f32 %v1610, %v1702
          %v1704 = vpop.f32.mrf.mxu0
          %v1705 = vpop.f32.mrf.mxu0
          %v1706 = vadd.f32 %v1610, %v1705
          %v1707 = vpop.f32.mrf.mxu0
          %1708 = vmatprep.mubr.bf16.mxu0 0
          %1709 = vmatmul.mubr.bf16.gmra.mxu0 %v1583
          %v1710 = vpop.f32.mrf.mxu0
          %v1711 = vadd.f32 %v1610, %v1710
          %v1712 = vpop.f32.mrf.mxu0
          %v1713 = vpop.f32.mrf.mxu0
          %v1714 = vadd.f32 %v1610, %v1713
          %v1715 = vpop.f32.mrf.mxu0
          %1716 = vmatprep.mubr.bf16.mxu0 0
          %1717 = vmatmul.mubr.bf16.gmra.mxu0 %v1584
          %v1718 = vpop.f32.mrf.mxu0
          %v1719 = vadd.f32 %v1610, %v1718
          %v1720 = vpop.f32.mrf.mxu0
          %v1721 = vpop.f32.mrf.mxu0
          %v1722 = vadd.f32 %v1610, %v1721
          %v1723 = vpop.f32.mrf.mxu0
          %1724 = vmatprep.mubr.bf16.mxu0 0
          %1725 = vmatmul.mubr.bf16.gmra.mxu0 %v1585
          %v1726 = vpop.f32.mrf.mxu0
          %v1727 = vadd.f32 %v1610, %v1726
          %v1728 = vpop.f32.mrf.mxu0
          %v1729 = vpop.f32.mrf.mxu0
          %v1730 = vadd.f32 %v1610, %v1729
          %v1731 = vpop.f32.mrf.mxu0
          %1732 = vmatprep.mubr.bf16.mxu0 0
          %1733 = vmatmul.mubr.bf16.gmra.mxu0 %v1586
          %v1734 = vpop.f32.mrf.mxu0
          %v1735 = vadd.f32 %v1610, %v1734
          %v1736 = vpop.f32.mrf.mxu0
          %v1737 = vpop.f32.mrf.mxu0
          %v1738 = vadd.f32 %v1610, %v1737
          %v1739 = vpop.f32.mrf.mxu0
          %1740 = vmatprep.mubr.bf16.mxu0 0
          %1741 = vmatmul.mubr.bf16.gmra.mxu0 %v1587
          %v1742 = vpop.f32.mrf.mxu0
          %v1743 = vadd.f32 %v1610, %v1742
          %v1744 = vpop.f32.mrf.mxu0
          %v1745 = vpop.f32.mrf.mxu0
          %v1746 = vadd.f32 %v1610, %v1745
          %v1747 = vpop.f32.mrf.mxu0
          %1748 = vmatprep.mubr.bf16.mxu0 0
          %1749 = vmatmul.mubr.bf16.gmra.mxu0 %v1588
          %v1750 = vpop.f32.mrf.mxu0
          %v1751 = vadd.f32 %v1610, %v1750
          %v1752 = vpop.f32.mrf.mxu0
          %v1753 = vpop.f32.mrf.mxu0
          %v1754 = vadd.f32 %v1610, %v1753
          %v1755 = vpop.f32.mrf.mxu0
          %1756 = vdwg.mxu0
          %v1757 = vmax.f32 %v1695, 0.0
          %v1758 = vmax.f32 %v1698, 0.0
          %v1759 = vmax.f32 %v1703, 0.0
          %v1760 = vmax.f32 %v1706, 0.0
          %v1761 = vmax.f32 %v1711, 0.0
          %v1762 = vmax.f32 %v1714, 0.0
          %v1763 = vmax.f32 %v1719, 0.0
          %v1764 = vmax.f32 %v1722, 0.0
          %v1765 = vmax.f32 %v1727, 0.0
          %v1766 = vmax.f32 %v1730, 0.0
          %v1767 = vmax.f32 %v1735, 0.0
          %v1768 = vmax.f32 %v1738, 0.0
          %v1769 = vmax.f32 %v1743, 0.0
          %v1770 = vmax.f32 %v1746, 0.0
          %v1771 = vmax.f32 %v1751, 0.0
          %v1772 = vmax.f32 %v1754, 0.0
          %v1773 = vpack.c.bf16 %v1758, %v1757
          %v1774 = vpack.c.bf16 %v1760, %v1759
          %v1775 = vpack.c.bf16 %v1762, %v1761
          %v1776 = vpack.c.bf16 %v1764, %v1763
          %v1777 = vpack.c.bf16 %v1766, %v1765
          %v1778 = vpack.c.bf16 %v1768, %v1767
          %v1779 = vpack.c.bf16 %v1770, %v1769
          %v1780 = vpack.c.bf16 %v1772, %v1771
          %v1781 = vld [vmem:[%s11] sm:$0xf]
          %v1782 = vld [vmem:[%s11 + $0x4] sm:$0xf]
          %v1783 = vld [vmem:[%s11 + $0x8] sm:$0xf]
          %v1784 = vld [vmem:[%s11 + $0xc] sm:$0xf]
          %v1785 = vld [vmem:[%s11 + $0x10] sm:$0xf]
          %v1786 = vld [vmem:[%s11 + $0x14] sm:$0xf]
          %v1787 = vld [vmem:[%s11 + $0x18] sm:$0xf]
          %v1788 = vld [vmem:[%s11 + $0x1c] sm:$0xf]
          %v1789 = vld [vmem:[%s11 + $0x20] sm:$0xf]
          %v1790 = vld [vmem:[%s11 + $0x24] sm:$0xf]
          %v1791 = vld [vmem:[%s11 + $0x28] sm:$0xf]
          %v1792 = vld [vmem:[%s11 + $0x2c] sm:$0xf]
          %v1793 = vld [vmem:[%s11 + $0x30] sm:$0xf]
          %v1794 = vld [vmem:[%s11 + $0x34] sm:$0xf]
          %v1795 = vld [vmem:[%s11 + $0x38] sm:$0xf]
          %v1796 = vld [vmem:[%s11 + $0x3c] sm:$0xf]
          %v1797 = vld [vmem:[%s12] sm:$0x1]
          %v1799 = vlaneseq
          %v1800 = vshrl.u32 %v1799, 7
          %v1801 = vsub.s32 0, %v1800
          %v1802 = vrot.slane %v1797, %v1801
          %v1820 = vunpack.c.l.b16 %v1781
          %v1821 = vunpack.c.l.b16 %v1782
          %v1822 = vunpack.c.l.b16 %v1783
          %v1823 = vunpack.c.l.b16 %v1784
          %v1824 = vunpack.c.l.b16 %v1785
          %v1825 = vunpack.c.l.b16 %v1786
          %v1826 = vunpack.c.l.b16 %v1787
          %v1827 = vunpack.c.l.b16 %v1788
          %v1828 = vunpack.c.l.b16 %v1789
          %v1829 = vunpack.c.l.b16 %v1790
          %v1830 = vunpack.c.l.b16 %v1791
          %v1831 = vunpack.c.l.b16 %v1792
          %v1832 = vunpack.c.l.b16 %v1793
          %v1833 = vunpack.c.l.b16 %v1794
          %v1834 = vunpack.c.l.b16 %v1795
          %v1835 = vunpack.c.l.b16 %v1796
          %v1836 = vpack.c.b16 %v1821, %v1820
          %v1837 = vpack.c.b16 %v1823, %v1822
          %v1838 = vpack.c.b16 %v1825, %v1824
          %v1839 = vpack.c.b16 %v1827, %v1826
          %v1840 = vpack.c.b16 %v1829, %v1828
          %v1841 = vpack.c.b16 %v1831, %v1830
          %v1842 = vpack.c.b16 %v1833, %v1832
          %v1843 = vpack.c.b16 %v1835, %v1834
          %1852 = vmatprep.subr.bf16.mxu0 0
          %1853 = vmatpush1.bf16.msra.mxu0 %v1843
          %1854 = vmatprep.subr.bf16.mxu0 0
          %1855 = vmatpush1.bf16.msra.mxu0 %v1842
          %1856 = vmatprep.subr.bf16.mxu0 0
          %1857 = vmatpush1.bf16.msra.mxu0 %v1841
          %1858 = vmatprep.subr.bf16.mxu0 0
          %1859 = vmatpush1.bf16.msra.mxu0 %v1840
          %1860 = vmatprep.subr.bf16.mxu0 0
          %1861 = vmatpush1.bf16.msra.mxu0 %v1839
          %1862 = vmatprep.subr.bf16.mxu0 0
          %1863 = vmatpush1.bf16.msra.mxu0 %v1838
          %1864 = vmatprep.subr.bf16.mxu0 0
          %1865 = vmatpush1.bf16.msra.mxu0 %v1837
          %1866 = vmatprep.subr.bf16.mxu0 0
          %1867 = vmatpush1.bf16.msra.mxu0 %v1836
          %1868 = vmatprep.subr.bf16.mxu0 0
          %1869 = vmatpush2.bf16.msra.mxu0 0
          %1870 = vmatprep.subr.bf16.mxu0 0
          %1871 = vmatpush2.bf16.msra.mxu0 0
          %1872 = vmatprep.subr.bf16.mxu0 0
          %1873 = vmatpush2.bf16.msra.mxu0 0
          %1874 = vmatprep.subr.bf16.mxu0 0
          %1875 = vmatpush2.bf16.msra.mxu0 0
          %1876 = vmatprep.subr.bf16.mxu0 0
          %1877 = vmatpush2.bf16.msra.mxu0 0
          %1878 = vmatprep.subr.bf16.mxu0 0
          %1879 = vmatpush2.bf16.msra.mxu0 0
          %1880 = vmatprep.subr.bf16.mxu0 0
          %1881 = vmatpush2.bf16.msra.mxu0 0
          %1882 = vmatprep.subr.bf16.mxu0 0
          %1883 = vmatpush2.bf16.msra.mxu0 0
          %1884 = vmatprep.mubr.bf16.mxu0 0
          %1885 = vmatmul.mubr.bf16.gmra.mxu0 %v1773
          %v1886 = vpop.f32.mrf.mxu0
          %v1887 = vadd.f32 %v1802, %v1886
          %v1888 = vpop.f32.mrf.mxu0
          %v1889 = vpop.f32.mrf.mxu0
          %v1890 = vadd.f32 %v1802, %v1889
          %v1891 = vpop.f32.mrf.mxu0
          %1892 = vmatprep.mubr.bf16.mxu0 0
          %1893 = vmatmul.mubr.bf16.gmra.mxu0 %v1774
          %v1894 = vpop.f32.mrf.mxu0
          %v1895 = vadd.f32 %v1802, %v1894
          %v1896 = vpop.f32.mrf.mxu0
          %v1897 = vpop.f32.mrf.mxu0
          %v1898 = vadd.f32 %v1802, %v1897
          %v1899 = vpop.f32.mrf.mxu0
          %1900 = vmatprep.mubr.bf16.mxu0 0
          %1901 = vmatmul.mubr.bf16.gmra.mxu0 %v1775
          %v1902 = vpop.f32.mrf.mxu0
          %v1903 = vadd.f32 %v1802, %v1902
          %v1904 = vpop.f32.mrf.mxu0
          %v1905 = vpop.f32.mrf.mxu0
          %v1906 = vadd.f32 %v1802, %v1905
          %v1907 = vpop.f32.mrf.mxu0
          %1908 = vmatprep.mubr.bf16.mxu0 0
          %1909 = vmatmul.mubr.bf16.gmra.mxu0 %v1776
          %v1910 = vpop.f32.mrf.mxu0
          %v1911 = vadd.f32 %v1802, %v1910
          %v1912 = vpop.f32.mrf.mxu0
          %v1913 = vpop.f32.mrf.mxu0
          %v1914 = vadd.f32 %v1802, %v1913
          %v1915 = vpop.f32.mrf.mxu0
          %1916 = vmatprep.mubr.bf16.mxu0 0
          %1917 = vmatmul.mubr.bf16.gmra.mxu0 %v1777
          %v1918 = vpop.f32.mrf.mxu0
          %v1919 = vadd.f32 %v1802, %v1918
          %v1920 = vpop.f32.mrf.mxu0
          %v1921 = vpop.f32.mrf.mxu0
          %v1922 = vadd.f32 %v1802, %v1921
          %v1923 = vpop.f32.mrf.mxu0
          %1924 = vmatprep.mubr.bf16.mxu0 0
          %1925 = vmatmul.mubr.bf16.gmra.mxu0 %v1778
          %v1926 = vpop.f32.mrf.mxu0
          %v1927 = vadd.f32 %v1802, %v1926
          %v1928 = vpop.f32.mrf.mxu0
          %v1929 = vpop.f32.mrf.mxu0
          %v1930 = vadd.f32 %v1802, %v1929
          %v1931 = vpop.f32.mrf.mxu0
          %1932 = vmatprep.mubr.bf16.mxu0 0
          %1933 = vmatmul.mubr.bf16.gmra.mxu0 %v1779
          %v1934 = vpop.f32.mrf.mxu0
          %v1935 = vadd.f32 %v1802, %v1934
          %v1936 = vpop.f32.mrf.mxu0
          %v1937 = vpop.f32.mrf.mxu0
          %v1938 = vadd.f32 %v1802, %v1937
          %v1939 = vpop.f32.mrf.mxu0
          %1940 = vmatprep.mubr.bf16.mxu0 0
          %1941 = vmatmul.mubr.bf16.gmra.mxu0 %v1780
          %v1942 = vpop.f32.mrf.mxu0
          %v1943 = vadd.f32 %v1802, %v1942
          %v1944 = vpop.f32.mrf.mxu0
          %v1945 = vpop.f32.mrf.mxu0
          %v1946 = vadd.f32 %v1802, %v1945
          %v1947 = vpop.f32.mrf.mxu0
          %1948 = vdwg.mxu0
          %v1949 = vadd.f32 %v1887, %v1295
          %v1950 = vadd.f32 %v1890, %v1296
          %v1951 = vadd.f32 %v1895, %v1297
          %v1952 = vadd.f32 %v1898, %v1298
          %v1953 = vadd.f32 %v1903, %v1299
          %v1954 = vadd.f32 %v1906, %v1300
          %v1955 = vadd.f32 %v1911, %v1301
          %v1956 = vadd.f32 %v1914, %v1302
          %v1957 = vadd.f32 %v1919, %v1303
          %v1958 = vadd.f32 %v1922, %v1304
          %v1959 = vadd.f32 %v1927, %v1305
          %v1960 = vadd.f32 %v1930, %v1306
          %v1961 = vadd.f32 %v1935, %v1307
          %v1962 = vadd.f32 %v1938, %v1308
          %v1963 = vadd.f32 %v1943, %v1309
          %v1964 = vadd.f32 %v1946, %v1310
          %1965 = vst [vmem:[%s525] sm:$0xff] %v1949
          %1966 = vst [vmem:[%s525 + $0x8] sm:$0xff] %v1950
          %1967 = vst [vmem:[%s525 + $0x10] sm:$0xff] %v1951
          %1968 = vst [vmem:[%s525 + $0x18] sm:$0xff] %v1952
          %1969 = vst [vmem:[%s525 + $0x20] sm:$0xff] %v1953
          %1970 = vst [vmem:[%s525 + $0x28] sm:$0xff] %v1954
          %1971 = vst [vmem:[%s525 + $0x30] sm:$0xff] %v1955
          %1972 = vst [vmem:[%s525 + $0x38] sm:$0xff] %v1956
          %1973 = vst [vmem:[%s525 + $0x40] sm:$0xff] %v1957
          %1974 = vst [vmem:[%s525 + $0x48] sm:$0xff] %v1958
          %1975 = vst [vmem:[%s525 + $0x50] sm:$0xff] %v1959
          %1976 = vst [vmem:[%s525 + $0x58] sm:$0xff] %v1960
          %1977 = vst [vmem:[%s525 + $0x60] sm:$0xff] %v1961
          %1978 = vst [vmem:[%s525 + $0x68] sm:$0xff] %v1962
          %1979 = vst [vmem:[%s525 + $0x70] sm:$0xff] %v1963
          %1980 = vst [vmem:[%s525 + $0x78] sm:$0xff] %v1964
        $region80: #{hgcb_forward.3} parent=71 // pred_fallthru
          _
        %s1981 = sand.u32 %s352, 1
        %s1982 = scalar_lea.sflag [#allocation4], %s1981
        %s1983 = sand.u32 %s352, 1
        %s1984 = smul.addr %s1983, 128
        %s1985 = scalar_lea.vmem [#allocation3], %s1984
        // Predicated region
        $region81: #{hgcb_forward.3} parent=71 // pred_check
          %p1986 = pneg %p362
        $region82: #{hgcb_forward.3} parent=71 // pred_check_branch
          %1988 = sbr.rel (%p1986) target = $region84
        $region83: #{hgcb_forward.3} parent=71 // pred_region
          %s1989 = smul.u32 16, %s33
          %s1991 = ssub.s32 2048, 2048
          %1992 = vsyncadd %s1982, %s1991
          %s1993 = smul.addr %s32, 16
          %s1994 = sadd.s32 %s1989, %s1993
          %s1995 = smul.addr %s1994, 128
          %s1996 = scalar_lea.hbm %s13, %s1995
          %s1997 = sshll.u32 %s1985, 4
          %s1998 = int_to_ptr.vmem [resolvable:$true] %s1997
          %2003 = dma.vmem_to_hbm [thread:$0]  %s1998, 2048, %s1996, %s1982, 128, 128, 8
        $region84: #{hgcb_forward.3} parent=71 // pred_fallthru
          _
      $region72: #{hgcb_forward.3} parent=5 // pred_fallthru
        _
      %p2004 = scmp.le.s32.totalorder 2, %s22
      // Predicated region
      $region85: #{hgcb_forward.3} parent=5 // pred_check
        %p2005 = pneg %p2004
      $region86: #{hgcb_forward.3} parent=5 // pred_check_branch
        %2007 = sbr.rel (%p2005) target = $region88
      $region87: #{hgcb_forward.3} parent=5 // pred_region
        %s2008 = ssub.s32 %s22, 2
        // Predicated region
        $region89: #{hgcb_forward.3} parent=87 // pred_check
          %p2009 = pneg %p368
        $region90: #{hgcb_forward.3} parent=87 // pred_check_branch
          %2011 = sbr.rel (%p2009) target = $region92
        $region91: #{hgcb_forward.3} parent=87 // pred_region
          %s2012 = sand.u32 %s353, 1
          %s2013 = scalar_lea.sflag [#allocation4], %s2012
          %s2014 = sand.u32 %s353, 1
          %s2015 = smul.addr %s2014, 128
          %s2016 = scalar_lea.vmem [#allocation3], %s2015
          %2017 = dma.done %s2013, 2048
        $region92: #{hgcb_forward.3} parent=87 // pred_fallthru
          _
      $region88: #{hgcb_forward.3} parent=5 // pred_fallthru
        _
    $region6: #{hgcb_forward.3} parent=1 // loop_footer
      %s26 = sadd.s32 1, %s22
    $region7: #{hgcb_forward.3} parent=1 // loop_footer_branch
      %21 = sbr.rel target = $region3
    $region8: #{hgcb_forward.3} parent=1 // loop_exit
      _
    %2018 = vsyncpa [#allocation4], 1
    %s2019 = scalar_lea.sflag [#allocation4], 1
    %2020 = vsyncpa %s2019, 1

</llo_original>
